<compile_context>
chip_gen: v7x
topology: tpu7x:2x2x1
jax: 0.10.0
libtpu: 0.0.40
codegen_flags: <defaults>
</compile_context>

<pallas_src>
import jax
import jax.numpy as jnp
from jax import lax
from jax.experimental import pallas as pl
from jax.experimental.pallas import tpu as pltpu

MID_DIM = 512
IN_DIM = 18
N_ACT = 4
N_HIDDEN = 5
HEAD_PAD = 128          # pad both branch heads to one lane-dense 128-wide output
NEG_SLOPE = 0.01        # PyTorch nn.LeakyReLU() default negative_slope


def _lrelu(x):
    return jnp.where(x > 0, x, NEG_SLOPE * x)


def _bf16(x):
    return x.astype(jnp.bfloat16)


# --------------------------------------------------------------------------- #
# Kernel: one grid step = one full branch (value or advantage) of the network. #
# --------------------------------------------------------------------------- #
def dueling_branch_kernel(
    x_ref,                 # [B, 18]                 f32
    fcw_ref, fcb_ref,      # [18, mid] bf16, [1, mid] f32      (shared trunk)
    wq_ref,                # [5, mid, mid]           int8      (this branch)
    sc_ref,                # [5, 1, mid]             f32       per-col scales
    bb_ref,                # [5, 1, mid]             f32       biases
    hw_ref, hb_ref,        # [mid, 128] bf16, [1, 128] f32     (padded head)
    out_ref,               # [B, 128]                f32
):
    # Shared trunk fc -> LeakyReLU.  Recomputed per branch; an 18x512 matmul is
    # negligible next to the 1.3 MB per-branch weight stream.
    h = jnp.dot(_bf16(x_ref[...]), fcw_ref[...],
                preferred_element_type=jnp.float32) + fcb_ref[...]
    h = _bf16(_lrelu(h))                                        # [B, mid] bf16

    # Five hidden layers of this branch.  Whole int8 stack is already resident
    # in VMEM; static unroll keeps everything visible to the scheduler.
    for i in range(N_HIDDEN):
        # int8 -> bf16 is exact (|q| <= 127); routed via f32 for a
        # guaranteed-supported convert path.  Per-output-column scale is
        # applied to the tiny [B, mid] matmul result instead of the weights.
        w = _bf16(wq_ref[i].astype(jnp.float32))                # [mid, mid] bf16
        z = jnp.dot(h, w, preferred_element_type=jnp.float32)   # f32 accum
        z = z * sc_ref[i] + bb_ref[i]
        h = _bf16(_lrelu(z))
    # TODO(synk): nn.Dropout(0.2) (after value_fc3 and again on the scalar
    # value) is identity in eval mode; training-mode dropout is not reproduced.

    # Branch head, padded to 128 lanes (col 0 = value for branch 0,
    # cols 0..n_act-1 = advantage for branch 1).  Lane-dense store.
    out_ref[...] = jnp.dot(h, hw_ref[...],
                           preferred_element_type=jnp.float32) + hb_ref[...]


# --------------------------------------------------------------------------- #
# Parameter packing: int8 hidden weights + per-column scales, padded heads.    #
# --------------------------------------------------------------------------- #
def _quantize_per_col(w):
    """Symmetric int8 quantization with one scale per output column."""
    amax = jnp.max(jnp.abs(w), axis=-2, keepdims=True)
    scale = jnp.maximum(amax, 1e-30) / 127.0
    q = jnp.clip(jnp.round(w / scale), -127.0, 127.0).astype(jnp.int8)
    return q, scale


def pack_params(p):
    """Convert f32 reference params to the kernel layout."""
    mid = p["fc_w"].shape[1]
    n_act = p["adv_out_w"].shape[1]

    vq, vs = _quantize_per_col(p["val_w"])      # [5,mid,mid] int8, [5,1,mid] f32
    aq, as_ = _quantize_per_col(p["adv_w"])

    hid_wq = jnp.stack([vq, aq])                # [2,5,mid,mid] int8
    hid_scale = jnp.stack([vs, as_])            # [2,5,1,mid]   f32
    hid_b = jnp.stack([p["val_b"], p["adv_b"]])  # [2,5,1,mid]  f32

    head_w = jnp.zeros((2, mid, HEAD_PAD), jnp.float32)
    head_w = head_w.at[0, :, 0:1].set(p["val_out_w"])
    head_w = head_w.at[1, :, 0:n_act].set(p["adv_out_w"])
    head_b = jnp.zeros((2, 1, HEAD_PAD), jnp.float32)
    head_b = head_b.at[0, :, 0:1].set(p["val_out_b"])
    head_b = head_b.at[1, :, 0:n_act].set(p["adv_out_b"])

    return {
        "fc_w": _bf16(p["fc_w"]), "fc_b": p["fc_b"],
        "hid_wq": hid_wq, "hid_scale": hid_scale, "hid_b": hid_b,
        "head_w": _bf16(head_w), "head_b": head_b,
    }


# --------------------------------------------------------------------------- #
# pallas_call wrapper + dueling combine.                                       #
# --------------------------------------------------------------------------- #
def dueling_branches_pallas(x, kp):
    B, in_dim = x.shape
    n_layers, mid = kp["hid_wq"].shape[1], kp["hid_wq"].shape[2]

    const2 = lambda b: (0, 0)
    branch3 = lambda b: (b, 0, 0)
    branch4 = lambda b: (b, 0, 0, 0)

    in_specs = [
        pl.BlockSpec((B, in_dim), const2),                       # x (resident)
        pl.BlockSpec(kp["fc_w"].shape, const2),                  # fc_w
        pl.BlockSpec(kp["fc_b"].shape, const2),                  # fc_b
        pl.BlockSpec((None, n_layers, mid, mid), branch4),       # hid_wq[b]
        pl.BlockSpec((None, n_layers, 1, mid), branch4),         # hid_scale[b]
        pl.BlockSpec((None, n_layers, 1, mid), branch4),         # hid_b[b]
        pl.BlockSpec((None, mid, HEAD_PAD), branch3),            # head_w[b]
        pl.BlockSpec((None, 1, HEAD_PAD), branch3),              # head_b[b]
    ]
    out_spec = pl.BlockSpec((None, B, HEAD_PAD), branch3)

    return pl.pallas_call(
        dueling_branch_kernel,
        out_shape=jax.ShapeDtypeStruct((2, B, HEAD_PAD), jnp.float32),
        grid=(2,),
        in_specs=in_specs,
        out_specs=out_spec,
        compiler_params=pltpu.CompilerParams(
            # Branch axis is independent (no carried scratch) -> "parallel":
            # sequential no-op on v5e/v6e, 2-way TC split on v7x megacore.
            dimension_semantics=("parallel",),
            vmem_limit_bytes=32 << 20,   # residency ~4-6 MiB; v7x-safe (<=64 MiB)
        ),
    )(x, kp["fc_w"], kp["fc_b"], kp["hid_wq"], kp["hid_scale"], kp["hid_b"],
      kp["head_w"], kp["head_b"])


@jax.jit
def dueling_dqn_forward(x, kp):
    heads = dueling_branches_pallas(x, kp)          # [2, B, 128]
    # Tiny dueling combine in the wrapper (as suggested by the perf review).
    value = heads[0, :, 0:1]                        # [B, 1]
    adv = heads[1, :, 0:N_ACT]                      # [B, n_act]
    return value + (adv - jnp.mean(adv, axis=1, keepdims=True))


# --------------------------------------------------------------------------- #
# References.                                                                  #
# --------------------------------------------------------------------------- #
def dueling_dqn_reference_quant(x, kp):
    """Pure-JAX reference that mirrors the kernel's exact quantized math."""
    h = jnp.dot(_bf16(x), kp["fc_w"],
                preferred_element_type=jnp.float32) + kp["fc_b"]
    h = _bf16(_lrelu(h))
    outs = []
    for br in range(2):
        hb = h
        for i in range(N_HIDDEN):
            w = _bf16(kp["hid_wq"][br, i].astype(jnp.float32))
            z = jnp.dot(hb, w, preferred_element_type=jnp.float32)
            z = z * kp["hid_scale"][br, i] + kp["hid_b"][br, i]
            hb = _bf16(_lrelu(z))
        outs.append(jnp.dot(hb, kp["head_w"][br],
                            preferred_element_type=jnp.float32) + kp["head_b"][br])
    value = outs[0][:, 0:1]
    adv = outs[1][:, 0:N_ACT]
    return value + (adv - jnp.mean(adv, axis=1, keepdims=True))


def dueling_dqn_reference_f32(x, p):
    """Full-precision f32 reference (loose semantic check)."""
    mm = lambda a, w: jnp.dot(a, w, precision=lax.Precision.HIGHEST)
    h = _lrelu(mm(x, p["fc_w"]) + p["fc_b"])
    v = h
    a = h
    for i in range(N_HIDDEN):
        v = _lrelu(mm(v, p["val_w"][i]) + p["val_b"][i])
        a = _lrelu(mm(a, p["adv_w"][i]) + p["adv_b"][i])
    value = mm(v, p["val_out_w"]) + p["val_out_b"]
    adv = mm(a, p["adv_out_w"]) + p["adv_out_b"]
    return value + (adv - jnp.mean(adv, axis=1, keepdims=True))


def make_params(key, n_act=N_ACT, mid_dim=MID_DIM, in_dim=IN_DIM):
    ks = jax.random.split(key, 10)
    scale = 0.05
    return {
        "fc_w": scale * jax.random.normal(ks[0], (in_dim, mid_dim), jnp.float32),
        "fc_b": scale * jax.random.normal(ks[1], (1, mid_dim), jnp.float32),
        "val_w": scale * jax.random.normal(ks[2], (N_HIDDEN, mid_dim, mid_dim), jnp.float32),
        "val_b": scale * jax.random.normal(ks[3], (N_HIDDEN, 1, mid_dim), jnp.float32),
        "val_out_w": scale * jax.random.normal(ks[4], (mid_dim, 1), jnp.float32),
        "val_out_b": scale * jax.random.normal(ks[5], (1, 1), jnp.float32),
        "adv_w": scale * jax.random.normal(ks[6], (N_HIDDEN, mid_dim, mid_dim), jnp.float32),
        "adv_b": scale * jax.random.normal(ks[7], (N_HIDDEN, 1, mid_dim), jnp.float32),
        "adv_out_w": scale * jax.random.normal(ks[8], (mid_dim, n_act), jnp.float32),
        "adv_out_b": scale * jax.random.normal(ks[9], (1, n_act), jnp.float32),
    }


if __name__ == "__main__":
    key = jax.random.PRNGKey(0)
    kx, kparam = jax.random.split(key)

    # Small, sublane-aligned demo batch.  Wall-clock is flat in B (weight DMA
    # dominates), so production callers should batch many env states per call.
    B = 8
    x = jax.random.normal(kx, (B, IN_DIM), jnp.float32)
    params = make_params(kparam)
    kernel_params = pack_params(params)

    q = dueling_dqn_forward(x, kernel_params)
    q = jax.block_until_ready(q)

    # Tight check vs a reference doing the identical int8/bf16 math, plus a
    # loose semantic check vs the pure-f32 network.
    q_ref_quant = dueling_dqn_reference_quant(x, kernel_params)
    q_ref_f32 = dueling_dqn_reference_f32(x, params)

    assert q.shape == (B, N_ACT), q.shape
    assert jnp.allclose(q, q_ref_quant, atol=2e-3, rtol=2e-3), (q, q_ref_quant)
    assert jnp.allclose(q, q_ref_f32, atol=5e-2, rtol=5e-2), (q, q_ref_f32)

    print("KERNEL_OK")
</pallas_src>

<mosaic_0001>
module attributes {stable_mosaic.version = 11 : i64} {
  func.func @dueling_branch_kernel(%arg0: i32, %arg1: memref<8x18xf32, #tpu.memory_space<vmem>>, %arg2: memref<18x512xbf16, #tpu.memory_space<vmem>>, %arg3: memref<1x512xf32, #tpu.memory_space<vmem>>, %arg4: memref<1x5x512x512xi8, #tpu.memory_space<vmem>>, %arg5: memref<1x5x1x512xf32, #tpu.memory_space<vmem>>, %arg6: memref<1x5x1x512xf32, #tpu.memory_space<vmem>>, %arg7: memref<1x512x128xbf16, #tpu.memory_space<vmem>>, %arg8: memref<1x1x128xf32, #tpu.memory_space<vmem>>, %arg9: memref<1x8x128xf32, #tpu.memory_space<vmem>>) attributes {dimension_semantics = [#tpu.dimension_semantics<parallel>], iteration_bounds = array<i64: 2>, scalar_prefetch = 0 : i64, scratch_operands = 0 : i64, tpu.core_type = #tpu.core_type<tc>, window_params = [{pipeline_mode = #tpu.pipeline_mode<synchronous>, transform_indices = @transform_0, window_bounds = array<i64: 8, 18>}, {pipeline_mode = #tpu.pipeline_mode<synchronous>, transform_indices = @transform_1, window_bounds = array<i64: 18, 512>}, {pipeline_mode = #tpu.pipeline_mode<synchronous>, transform_indices = @transform_2, window_bounds = array<i64: 1, 512>}, {transform_indices = @transform_3, window_bounds = array<i64: 1, 5, 512, 512>}, {transform_indices = @transform_4, window_bounds = array<i64: 1, 5, 1, 512>}, {transform_indices = @transform_5, window_bounds = array<i64: 1, 5, 1, 512>}, {transform_indices = @transform_6, window_bounds = array<i64: 1, 512, 128>}, {transform_indices = @transform_7, window_bounds = array<i64: 1, 1, 128>}, {transform_indices = @transform_8, window_bounds = array<i64: 1, 8, 128>}]} {
    %c0 = arith.constant 0 : index
    %c0_0 = arith.constant 0 : index
    %0 = vector.load %arg1[%c0, %c0_0] : memref<8x18xf32, #tpu.memory_space<vmem>>, vector<8x18xf32>
    %1 = arith.truncf %0 : vector<8x18xf32> to vector<8x18xbf16>
    %c0_1 = arith.constant 0 : index
    %c0_2 = arith.constant 0 : index
    %2 = vector.load %arg2[%c0_1, %c0_2] : memref<18x512xbf16, #tpu.memory_space<vmem>>, vector<18x512xbf16>
    %cst = arith.constant dense<0.000000e+00> : vector<8x512xf32>
    %3 = tpu.matmul %1, %2, %cst {dimension_numbers = #tpu.dot_dimension_numbers<[1], [0], [0], [1], [0, 0, 1, 1], [], []>} : vector<8x18xbf16>, vector<18x512xbf16>, vector<8x512xf32> -> vector<8x512xf32>
    %c0_3 = arith.constant 0 : index
    %c0_4 = arith.constant 0 : index
    %4 = vector.load %arg3[%c0_3, %c0_4] : memref<1x512xf32, #tpu.memory_space<vmem>>, vector<1x512xf32>
    %5 = vector.broadcast %4 : vector<1x512xf32> to vector<8x512xf32>
    %6 = arith.addf %3, %5 : vector<8x512xf32>
    %cst_5 = arith.constant 0.000000e+00 : f32
    %7 = vector.broadcast %cst_5 : f32 to vector<8x512xf32>
    %8 = arith.cmpf ogt, %6, %7 : vector<8x512xf32>
    %cst_6 = arith.constant 0.00999999977 : f32
    %9 = vector.broadcast %cst_6 : f32 to vector<8x512xf32>
    %10 = arith.mulf %9, %6 : vector<8x512xf32>
    %11 = arith.select %8, %6, %10 : vector<8x512xi1>, vector<8x512xf32>
    %12 = arith.truncf %11 : vector<8x512xf32> to vector<8x512xbf16>
    %c0_7 = arith.constant 0 : index
    %c0_8 = arith.constant 0 : index
    %c0_9 = arith.constant 0 : index
    %c0_10 = arith.constant 0 : index
    %13 = vector.load %arg4[%c0_7, %c0_8, %c0_9, %c0_10] : memref<1x5x512x512xi8, #tpu.memory_space<vmem>>, vector<1x1x512x512xi8>
    %14 = vector.shape_cast %13 : vector<1x1x512x512xi8> to vector<512x512xi8>
    %15 = arith.sitofp %14 : vector<512x512xi8> to vector<512x512xf32>
    %16 = arith.truncf %15 : vector<512x512xf32> to vector<512x512xbf16>
    %cst_11 = arith.constant dense<0.000000e+00> : vector<8x512xf32>
    %17 = tpu.matmul %12, %16, %cst_11 {dimension_numbers = #tpu.dot_dimension_numbers<[1], [0], [0], [1], [0, 0, 1, 1], [], []>} : vector<8x512xbf16>, vector<512x512xbf16>, vector<8x512xf32> -> vector<8x512xf32>
    %c0_12 = arith.constant 0 : index
    %c0_13 = arith.constant 0 : index
    %c0_14 = arith.constant 0 : index
    %c0_15 = arith.constant 0 : index
    %18 = vector.load %arg5[%c0_12, %c0_13, %c0_14, %c0_15] : memref<1x5x1x512xf32, #tpu.memory_space<vmem>>, vector<1x1x1x512xf32>
    %19 = vector.shape_cast %18 : vector<1x1x1x512xf32> to vector<1x512xf32>
    %20 = vector.broadcast %19 : vector<1x512xf32> to vector<8x512xf32>
    %21 = arith.mulf %17, %20 : vector<8x512xf32>
    %c0_16 = arith.constant 0 : index
    %c0_17 = arith.constant 0 : index
    %c0_18 = arith.constant 0 : index
    %c0_19 = arith.constant 0 : index
    %22 = vector.load %arg6[%c0_16, %c0_17, %c0_18, %c0_19] : memref<1x5x1x512xf32, #tpu.memory_space<vmem>>, vector<1x1x1x512xf32>
    %23 = vector.shape_cast %22 : vector<1x1x1x512xf32> to vector<1x512xf32>
    %24 = vector.broadcast %23 : vector<1x512xf32> to vector<8x512xf32>
    %25 = arith.addf %21, %24 : vector<8x512xf32>
    %cst_20 = arith.constant 0.000000e+00 : f32
    %26 = vector.broadcast %cst_20 : f32 to vector<8x512xf32>
    %27 = arith.cmpf ogt, %25, %26 : vector<8x512xf32>
    %cst_21 = arith.constant 0.00999999977 : f32
    %28 = vector.broadcast %cst_21 : f32 to vector<8x512xf32>
    %29 = arith.mulf %28, %25 : vector<8x512xf32>
    %30 = arith.select %27, %25, %29 : vector<8x512xi1>, vector<8x512xf32>
    %31 = arith.truncf %30 : vector<8x512xf32> to vector<8x512xbf16>
    %c0_22 = arith.constant 0 : index
    %c1 = arith.constant 1 : index
    %c0_23 = arith.constant 0 : index
    %c0_24 = arith.constant 0 : index
    %32 = vector.load %arg4[%c0_22, %c1, %c0_23, %c0_24] : memref<1x5x512x512xi8, #tpu.memory_space<vmem>>, vector<1x1x512x512xi8>
    %33 = vector.shape_cast %32 : vector<1x1x512x512xi8> to vector<512x512xi8>
    %34 = arith.sitofp %33 : vector<512x512xi8> to vector<512x512xf32>
    %35 = arith.truncf %34 : vector<512x512xf32> to vector<512x512xbf16>
    %cst_25 = arith.constant dense<0.000000e+00> : vector<8x512xf32>
    %36 = tpu.matmul %31, %35, %cst_25 {dimension_numbers = #tpu.dot_dimension_numbers<[1], [0], [0], [1], [0, 0, 1, 1], [], []>} : vector<8x512xbf16>, vector<512x512xbf16>, vector<8x512xf32> -> vector<8x512xf32>
    %c0_26 = arith.constant 0 : index
    %c1_27 = arith.constant 1 : index
    %c0_28 = arith.constant 0 : index
    %c0_29 = arith.constant 0 : index
    %37 = vector.load %arg5[%c0_26, %c1_27, %c0_28, %c0_29] : memref<1x5x1x512xf32, #tpu.memory_space<vmem>>, vector<1x1x1x512xf32>
    %38 = vector.shape_cast %37 : vector<1x1x1x512xf32> to vector<1x512xf32>
    %39 = vector.broadcast %38 : vector<1x512xf32> to vector<8x512xf32>
    %40 = arith.mulf %36, %39 : vector<8x512xf32>
    %c0_30 = arith.constant 0 : index
    %c1_31 = arith.constant 1 : index
    %c0_32 = arith.constant 0 : index
    %c0_33 = arith.constant 0 : index
    %41 = vector.load %arg6[%c0_30, %c1_31, %c0_32, %c0_33] : memref<1x5x1x512xf32, #tpu.memory_space<vmem>>, vector<1x1x1x512xf32>
    %42 = vector.shape_cast %41 : vector<1x1x1x512xf32> to vector<1x512xf32>
    %43 = vector.broadcast %42 : vector<1x512xf32> to vector<8x512xf32>
    %44 = arith.addf %40, %43 : vector<8x512xf32>
    %cst_34 = arith.constant 0.000000e+00 : f32
    %45 = vector.broadcast %cst_34 : f32 to vector<8x512xf32>
    %46 = arith.cmpf ogt, %44, %45 : vector<8x512xf32>
    %cst_35 = arith.constant 0.00999999977 : f32
    %47 = vector.broadcast %cst_35 : f32 to vector<8x512xf32>
    %48 = arith.mulf %47, %44 : vector<8x512xf32>
    %49 = arith.select %46, %44, %48 : vector<8x512xi1>, vector<8x512xf32>
    %50 = arith.truncf %49 : vector<8x512xf32> to vector<8x512xbf16>
    %c0_36 = arith.constant 0 : index
    %c2 = arith.constant 2 : index
    %c0_37 = arith.constant 0 : index
    %c0_38 = arith.constant 0 : index
    %51 = vector.load %arg4[%c0_36, %c2, %c0_37, %c0_38] : memref<1x5x512x512xi8, #tpu.memory_space<vmem>>, vector<1x1x512x512xi8>
    %52 = vector.shape_cast %51 : vector<1x1x512x512xi8> to vector<512x512xi8>
    %53 = arith.sitofp %52 : vector<512x512xi8> to vector<512x512xf32>
    %54 = arith.truncf %53 : vector<512x512xf32> to vector<512x512xbf16>
    %cst_39 = arith.constant dense<0.000000e+00> : vector<8x512xf32>
    %55 = tpu.matmul %50, %54, %cst_39 {dimension_numbers = #tpu.dot_dimension_numbers<[1], [0], [0], [1], [0, 0, 1, 1], [], []>} : vector<8x512xbf16>, vector<512x512xbf16>, vector<8x512xf32> -> vector<8x512xf32>
    %c0_40 = arith.constant 0 : index
    %c2_41 = arith.constant 2 : index
    %c0_42 = arith.constant 0 : index
    %c0_43 = arith.constant 0 : index
    %56 = vector.load %arg5[%c0_40, %c2_41, %c0_42, %c0_43] : memref<1x5x1x512xf32, #tpu.memory_space<vmem>>, vector<1x1x1x512xf32>
    %57 = vector.shape_cast %56 : vector<1x1x1x512xf32> to vector<1x512xf32>
    %58 = vector.broadcast %57 : vector<1x512xf32> to vector<8x512xf32>
    %59 = arith.mulf %55, %58 : vector<8x512xf32>
    %c0_44 = arith.constant 0 : index
    %c2_45 = arith.constant 2 : index
    %c0_46 = arith.constant 0 : index
    %c0_47 = arith.constant 0 : index
    %60 = vector.load %arg6[%c0_44, %c2_45, %c0_46, %c0_47] : memref<1x5x1x512xf32, #tpu.memory_space<vmem>>, vector<1x1x1x512xf32>
    %61 = vector.shape_cast %60 : vector<1x1x1x512xf32> to vector<1x512xf32>
    %62 = vector.broadcast %61 : vector<1x512xf32> to vector<8x512xf32>
    %63 = arith.addf %59, %62 : vector<8x512xf32>
    %cst_48 = arith.constant 0.000000e+00 : f32
    %64 = vector.broadcast %cst_48 : f32 to vector<8x512xf32>
    %65 = arith.cmpf ogt, %63, %64 : vector<8x512xf32>
    %cst_49 = arith.constant 0.00999999977 : f32
    %66 = vector.broadcast %cst_49 : f32 to vector<8x512xf32>
    %67 = arith.mulf %66, %63 : vector<8x512xf32>
    %68 = arith.select %65, %63, %67 : vector<8x512xi1>, vector<8x512xf32>
    %69 = arith.truncf %68 : vector<8x512xf32> to vector<8x512xbf16>
    %c0_50 = arith.constant 0 : index
    %c3 = arith.constant 3 : index
    %c0_51 = arith.constant 0 : index
    %c0_52 = arith.constant 0 : index
    %70 = vector.load %arg4[%c0_50, %c3, %c0_51, %c0_52] : memref<1x5x512x512xi8, #tpu.memory_space<vmem>>, vector<1x1x512x512xi8>
    %71 = vector.shape_cast %70 : vector<1x1x512x512xi8> to vector<512x512xi8>
    %72 = arith.sitofp %71 : vector<512x512xi8> to vector<512x512xf32>
    %73 = arith.truncf %72 : vector<512x512xf32> to vector<512x512xbf16>
    %cst_53 = arith.constant dense<0.000000e+00> : vector<8x512xf32>
    %74 = tpu.matmul %69, %73, %cst_53 {dimension_numbers = #tpu.dot_dimension_numbers<[1], [0], [0], [1], [0, 0, 1, 1], [], []>} : vector<8x512xbf16>, vector<512x512xbf16>, vector<8x512xf32> -> vector<8x512xf32>
    %c0_54 = arith.constant 0 : index
    %c3_55 = arith.constant 3 : index
    %c0_56 = arith.constant 0 : index
    %c0_57 = arith.constant 0 : index
    %75 = vector.load %arg5[%c0_54, %c3_55, %c0_56, %c0_57] : memref<1x5x1x512xf32, #tpu.memory_space<vmem>>, vector<1x1x1x512xf32>
    %76 = vector.shape_cast %75 : vector<1x1x1x512xf32> to vector<1x512xf32>
    %77 = vector.broadcast %76 : vector<1x512xf32> to vector<8x512xf32>
    %78 = arith.mulf %74, %77 : vector<8x512xf32>
    %c0_58 = arith.constant 0 : index
    %c3_59 = arith.constant 3 : index
    %c0_60 = arith.constant 0 : index
    %c0_61 = arith.constant 0 : index
    %79 = vector.load %arg6[%c0_58, %c3_59, %c0_60, %c0_61] : memref<1x5x1x512xf32, #tpu.memory_space<vmem>>, vector<1x1x1x512xf32>
    %80 = vector.shape_cast %79 : vector<1x1x1x512xf32> to vector<1x512xf32>
    %81 = vector.broadcast %80 : vector<1x512xf32> to vector<8x512xf32>
    %82 = arith.addf %78, %81 : vector<8x512xf32>
    %cst_62 = arith.constant 0.000000e+00 : f32
    %83 = vector.broadcast %cst_62 : f32 to vector<8x512xf32>
    %84 = arith.cmpf ogt, %82, %83 : vector<8x512xf32>
    %cst_63 = arith.constant 0.00999999977 : f32
    %85 = vector.broadcast %cst_63 : f32 to vector<8x512xf32>
    %86 = arith.mulf %85, %82 : vector<8x512xf32>
    %87 = arith.select %84, %82, %86 : vector<8x512xi1>, vector<8x512xf32>
    %88 = arith.truncf %87 : vector<8x512xf32> to vector<8x512xbf16>
    %c0_64 = arith.constant 0 : index
    %c4 = arith.constant 4 : index
    %c0_65 = arith.constant 0 : index
    %c0_66 = arith.constant 0 : index
    %89 = vector.load %arg4[%c0_64, %c4, %c0_65, %c0_66] : memref<1x5x512x512xi8, #tpu.memory_space<vmem>>, vector<1x1x512x512xi8>
    %90 = vector.shape_cast %89 : vector<1x1x512x512xi8> to vector<512x512xi8>
    %91 = arith.sitofp %90 : vector<512x512xi8> to vector<512x512xf32>
    %92 = arith.truncf %91 : vector<512x512xf32> to vector<512x512xbf16>
    %cst_67 = arith.constant dense<0.000000e+00> : vector<8x512xf32>
    %93 = tpu.matmul %88, %92, %cst_67 {dimension_numbers = #tpu.dot_dimension_numbers<[1], [0], [0], [1], [0, 0, 1, 1], [], []>} : vector<8x512xbf16>, vector<512x512xbf16>, vector<8x512xf32> -> vector<8x512xf32>
    %c0_68 = arith.constant 0 : index
    %c4_69 = arith.constant 4 : index
    %c0_70 = arith.constant 0 : index
    %c0_71 = arith.constant 0 : index
    %94 = vector.load %arg5[%c0_68, %c4_69, %c0_70, %c0_71] : memref<1x5x1x512xf32, #tpu.memory_space<vmem>>, vector<1x1x1x512xf32>
    %95 = vector.shape_cast %94 : vector<1x1x1x512xf32> to vector<1x512xf32>
    %96 = vector.broadcast %95 : vector<1x512xf32> to vector<8x512xf32>
    %97 = arith.mulf %93, %96 : vector<8x512xf32>
    %c0_72 = arith.constant 0 : index
    %c4_73 = arith.constant 4 : index
    %c0_74 = arith.constant 0 : index
    %c0_75 = arith.constant 0 : index
    %98 = vector.load %arg6[%c0_72, %c4_73, %c0_74, %c0_75] : memref<1x5x1x512xf32, #tpu.memory_space<vmem>>, vector<1x1x1x512xf32>
    %99 = vector.shape_cast %98 : vector<1x1x1x512xf32> to vector<1x512xf32>
    %100 = vector.broadcast %99 : vector<1x512xf32> to vector<8x512xf32>
    %101 = arith.addf %97, %100 : vector<8x512xf32>
    %cst_76 = arith.constant 0.000000e+00 : f32
    %102 = vector.broadcast %cst_76 : f32 to vector<8x512xf32>
    %103 = arith.cmpf ogt, %101, %102 : vector<8x512xf32>
    %cst_77 = arith.constant 0.00999999977 : f32
    %104 = vector.broadcast %cst_77 : f32 to vector<8x512xf32>
    %105 = arith.mulf %104, %101 : vector<8x512xf32>
    %106 = arith.select %103, %101, %105 : vector<8x512xi1>, vector<8x512xf32>
    %107 = arith.truncf %106 : vector<8x512xf32> to vector<8x512xbf16>
    %c0_78 = arith.constant 0 : index
    %c0_79 = arith.constant 0 : index
    %c0_80 = arith.constant 0 : index
    %108 = vector.load %arg7[%c0_78, %c0_79, %c0_80] : memref<1x512x128xbf16, #tpu.memory_space<vmem>>, vector<1x512x128xbf16>
    %109 = vector.shape_cast %108 : vector<1x512x128xbf16> to vector<512x128xbf16>
    %cst_81 = arith.constant dense<0.000000e+00> : vector<8x128xf32>
    %110 = tpu.matmul %107, %109, %cst_81 {dimension_numbers = #tpu.dot_dimension_numbers<[1], [0], [0], [1], [0, 0, 1, 1], [], []>} : vector<8x512xbf16>, vector<512x128xbf16>, vector<8x128xf32> -> vector<8x128xf32>
    %c0_82 = arith.constant 0 : index
    %c0_83 = arith.constant 0 : index
    %c0_84 = arith.constant 0 : index
    %111 = vector.load %arg8[%c0_82, %c0_83, %c0_84] : memref<1x1x128xf32, #tpu.memory_space<vmem>>, vector<1x1x128xf32>
    %112 = vector.shape_cast %111 : vector<1x1x128xf32> to vector<1x128xf32>
    %113 = vector.broadcast %112 : vector<1x128xf32> to vector<8x128xf32>
    %114 = arith.addf %110, %113 : vector<8x128xf32>
    %c0_85 = arith.constant 0 : index
    %c0_86 = arith.constant 0 : index
    %c0_87 = arith.constant 0 : index
    %115 = vector.load %arg9[%c0_85, %c0_86, %c0_87] : memref<1x8x128xf32, #tpu.memory_space<vmem>>, vector<1x8x128xf32>
    %116 = vector.shape_cast %115 : vector<1x8x128xf32> to vector<8x128xf32>
    %117 = vector.shape_cast %114 : vector<8x128xf32> to vector<1x8x128xf32>
    tpu.vector_store %arg9[%c0_85, %c0_86, %c0_87], %117 {strides = array<i32>} : memref<1x8x128xf32, #tpu.memory_space<vmem>>, vector<1x8x128xf32>,
    return
  }
  func.func @transform_0(%arg0: i32) -> (i32, i32) {
    %c0_i32 = arith.constant 0 : i32
    %c0_i32_0 = arith.constant 0 : i32
    %c0_i32_1 = arith.constant 0 : i32
    return %c0_i32, %c0_i32_0 : i32, i32
  }
  func.func @transform_1(%arg0: i32) -> (i32, i32) {
    %c0_i32 = arith.constant 0 : i32
    %c0_i32_0 = arith.constant 0 : i32
    %c0_i32_1 = arith.constant 0 : i32
    return %c0_i32, %c0_i32_0 : i32, i32
  }
  func.func @transform_2(%arg0: i32) -> (i32, i32) {
    %c0_i32 = arith.constant 0 : i32
    %c0_i32_0 = arith.constant 0 : i32
    %c0_i32_1 = arith.constant 0 : i32
    return %c0_i32, %c0_i32_0 : i32, i32
  }
  func.func @transform_3(%arg0: i32) -> (i32, i32, i32, i32) {
    %c0_i32 = arith.constant 0 : i32
    %c0_i32_0 = arith.constant 0 : i32
    %c0_i32_1 = arith.constant 0 : i32
    %c0_i32_2 = arith.constant 0 : i32
    return %arg0, %c0_i32, %c0_i32_0, %c0_i32_1 : i32, i32, i32, i32
  }
  func.func @transform_4(%arg0: i32) -> (i32, i32, i32, i32) {
    %c0_i32 = arith.constant 0 : i32
    %c0_i32_0 = arith.constant 0 : i32
    %c0_i32_1 = arith.constant 0 : i32
    %c0_i32_2 = arith.constant 0 : i32
    return %arg0, %c0_i32, %c0_i32_0, %c0_i32_1 : i32, i32, i32, i32
  }
  func.func @transform_5(%arg0: i32) -> (i32, i32, i32, i32) {
    %c0_i32 = arith.constant 0 : i32
    %c0_i32_0 = arith.constant 0 : i32
    %c0_i32_1 = arith.constant 0 : i32
    %c0_i32_2 = arith.constant 0 : i32
    return %arg0, %c0_i32, %c0_i32_0, %c0_i32_1 : i32, i32, i32, i32
  }
  func.func @transform_6(%arg0: i32) -> (i32, i32, i32) {
    %c0_i32 = arith.constant 0 : i32
    %c0_i32_0 = arith.constant 0 : i32
    %c0_i32_1 = arith.constant 0 : i32
    return %arg0, %c0_i32, %c0_i32_0 : i32, i32, i32
  }
  func.func @transform_7(%arg0: i32) -> (i32, i32, i32) {
    %c0_i32 = arith.constant 0 : i32
    %c0_i32_0 = arith.constant 0 : i32
    %c0_i32_1 = arith.constant 0 : i32
    return %arg0, %c0_i32, %c0_i32_0 : i32, i32, i32
  }
  func.func @transform_8(%arg0: i32) -> (i32, i32, i32) {
    %c0_i32 = arith.constant 0 : i32
    %c0_i32_0 = arith.constant 0 : i32
    %c0_i32_1 = arith.constant 0 : i32
    return %arg0, %c0_i32, %c0_i32_0 : i32, i32, i32
  }
}

</mosaic_0001>

<llo_original>
// kernel: dueling_dqn_forward.1
$region0: #{dueling_dqn_forward.1}
  #allocation0 [shape = 'u32[]', space=smem, size = 0x4, offset = 0x4, fixed_abs, tag = 'smem constant byte address 0x4 - core index']
  #allocation1 [shape = 'u32[144,128]{1,0:T(1,128)}', space=vmem, size = 0x12000, scoped, tag = 'internal scratch']
  %s0 = inlined_call_operand.hbm [shape: f32[8,18], index: 0, kind: input, shape index: {}]
  %s1 = inlined_call_operand.hbm [shape: bf16[18,512], index: 1, kind: input, shape index: {}]
  %s2 = inlined_call_operand.hbm [shape: f32[1,512], index: 2, kind: input, shape index: {}]
  %s3 = inlined_call_operand.hbm [shape: s8[2,5,512,512], index: 3, kind: input, shape index: {}]
  %s4 = inlined_call_operand.hbm [shape: f32[2,5,1,512], index: 4, kind: input, shape index: {}]
  %s5 = inlined_call_operand.hbm [shape: f32[2,5,1,512], index: 5, kind: input, shape index: {}]
  %s6 = inlined_call_operand.hbm [shape: bf16[2,512,128], index: 6, kind: input, shape index: {}]
  %s7 = inlined_call_operand.hbm [shape: f32[2,1,128], index: 7, kind: input, shape index: {}]
  %s8 = inlined_call_operand.vmem [shape: f32[2,8,128], index: 8, kind: output, shape index: {}]
  %s9 = sld [smem:[#allocation0]]
  $region97: #{dueling_dqn_forward.1} parent=0
    _
  %s11 = ssub.s32 1, %s9
  %s12 = scalar_select 0, %s11, %s9
  $region1: #{dueling_dqn_forward.1} parent=0
    #allocation2 [shape = 'u8[4096]{0}', space=vmem, size = 0x1000, scoped, tag = 'input window, operand 0, single buffered']
    #allocation3 [shape = 's32[2]{0}', space=sflag, size = 0x8, scoped, tag = 'scoped memory for dueling_dqn_forward.1']
    #allocation4 [shape = 'u8[24576]{0}', space=vmem, size = 0x6000, scoped, tag = 'input window, operand 1, single buffered']
    #allocation5 [shape = 's32[1]{0}', space=sflag, size = 0x4, scoped, tag = 'scoped memory for dueling_dqn_forward.1']
    #allocation6 [shape = 'u8[2048]{0}', space=vmem, size = 0x800, scoped, tag = 'input window, operand 2, single buffered']
    #allocation7 [shape = 'u8[2621440]{0}', space=vmem, size = 0x280000, scoped, tag = 'input window, operand 3']
    #allocation8 [shape = 's32[2]{0}', space=sflag, size = 0x8, scoped, tag = 'scoped memory for dueling_dqn_forward.1']
    #allocation9 [shape = 'u8[20480]{0}', space=vmem, size = 0x5000, scoped, tag = 'input window, operand 4']
    #allocation10 [shape = 'u8[20480]{0}', space=vmem, size = 0x5000, scoped, tag = 'input window, operand 5']
    #allocation11 [shape = 's32[2]{0}', space=sflag, size = 0x8, scoped, tag = 'scoped memory for dueling_dqn_forward.1']
    #allocation12 [shape = 'u8[262144]{0}', space=vmem, size = 0x40000, scoped, tag = 'input window, operand 6']
    #allocation13 [shape = 'u8[1024]{0}', space=vmem, size = 0x400, scoped, tag = 'input window, operand 7']
    #allocation14 [shape = 's32[2]{0}', space=sflag, size = 0x8, scoped, tag = 'scoped memory for dueling_dqn_forward.1']
    %13 = vsyncpa [#allocation3], 0
    %14 = vsyncpa [#allocation5], 0
    %15 = vsyncpa [#allocation8], 0
    %s16 = scalar_lea.sflag [#allocation8], 1
    %17 = vsyncpa %s16, 0
    %18 = vsyncpa [#allocation11], 0
    %s19 = scalar_lea.sflag [#allocation11], 1
    %20 = vsyncpa %s19, 0
    %21 = vsyncpa [#allocation14], 0
    %s22 = scalar_lea.sflag [#allocation14], 1
    %23 = vsyncpa %s22, 0
    loop: start=0, step=1, limit=4
    $region2: #{dueling_dqn_forward.1} parent=1 // loop_pre_header
      _
    $region3: #{dueling_dqn_forward.1} parent=1 // loop_header
      %s25 = sphi 0, %s29
      %p26 = scmp.ge.s32.totalorder %s25, 4
      %s33 = sphi 0, %s33
      %s35 = sphi 0, %s33
      %s36 = sphi 0, %s35
      %s50 = sphi 0, %s36
      %s54 = sphi 0, %s54
      %s56 = sphi 0, %s54
      %s57 = sphi 0, %s56
      %s71 = sphi 0, %s57
      %s75 = sphi 0, %s75
      %s77 = sphi 0, %s75
      %s78 = sphi 0, %s77
      %s92 = sphi 0, %s78
      %s98 = sphi 0, %s100
      %s101 = sphi 0, %s98
      %s102 = sphi 0, %s101
      %s118 = sphi 0, %s102
      %s124 = sphi 0, %s126
      %s127 = sphi 0, %s124
      %s128 = sphi 0, %s127
      %s144 = sphi 0, %s128
      %s150 = sphi 0, %s152
      %s153 = sphi 0, %s150
      %s154 = sphi 0, %s153
      %s170 = sphi 0, %s154
      %s176 = sphi 0, %s178
      %s179 = sphi 0, %s176
      %s180 = sphi 0, %s179
      %s196 = sphi 0, %s180
      %s202 = sphi 0, %s204
      %s205 = sphi 0, %s202
      %s206 = sphi 0, %s205
      %s222 = sphi 0, %s206
      %s228 = sphi 0, %s230
      %s231 = sphi 0, %s228
      %s232 = sphi 0, %s231
      %s248 = sphi 0, %s232
    $region4: #{dueling_dqn_forward.1} parent=1 // loop_header_branch
      %28 = sbr.rel (%p26) target = $region8
    $region5: #{dueling_dqn_forward.1} parent=1 // loop_body
      %s30 = ssub.s32 %s25, 1
      %s31 = ssub.s32 %s25, 2
      %s32 = sadd.s32 %s25, 1
      %s34 = sadd.s32 %s33, 1
      %p37 = scmp.eq.s32.totalorder %s25, 1
      %p38 = scmp.ne.s32.totalorder %s33, %s35
      %p39 = scmp.eq.s32.totalorder %s25, 0
      %p40 = por %p38, %p39
      %p41 = scmp.ne.s32.totalorder %s33, %s35
      %p42 = scmp.eq.s32.totalorder %s30, 1
      %p43 = por %p41, %p42
      %p44 = scmp.ne.s32.totalorder %s35, %s36
      %p45 = scmp.eq.s32.totalorder %s30, 0
      %p46 = por %p44, %p45
      %p47 = scmp.ne.s32.totalorder %s35, %s36
      %p48 = scmp.eq.s32.totalorder %s31, 1
      %p49 = por %p47, %p48
      %p51 = scmp.ne.s32.totalorder %s36, %s50
      %p52 = scmp.eq.s32.totalorder %s31, 0
      %p53 = por %p51, %p52
      %s55 = sadd.s32 %s54, 1
      %p58 = scmp.eq.s32.totalorder %s25, 1
      %p59 = scmp.ne.s32.totalorder %s54, %s56
      %p60 = scmp.eq.s32.totalorder %s25, 0
      %p61 = por %p59, %p60
      %p62 = scmp.ne.s32.totalorder %s54, %s56
      %p63 = scmp.eq.s32.totalorder %s30, 1
      %p64 = por %p62, %p63
      %p65 = scmp.ne.s32.totalorder %s56, %s57
      %p66 = scmp.eq.s32.totalorder %s30, 0
      %p67 = por %p65, %p66
      %p68 = scmp.ne.s32.totalorder %s56, %s57
      %p69 = scmp.eq.s32.totalorder %s31, 1
      %p70 = por %p68, %p69
      %p72 = scmp.ne.s32.totalorder %s57, %s71
      %p73 = scmp.eq.s32.totalorder %s31, 0
      %p74 = por %p72, %p73
      %s76 = sadd.s32 %s75, 1
      %p79 = scmp.eq.s32.totalorder %s25, 1
      %p80 = scmp.ne.s32.totalorder %s75, %s77
      %p81 = scmp.eq.s32.totalorder %s25, 0
      %p82 = por %p80, %p81
      %p83 = scmp.ne.s32.totalorder %s75, %s77
      %p84 = scmp.eq.s32.totalorder %s30, 1
      %p85 = por %p83, %p84
      %p86 = scmp.ne.s32.totalorder %s77, %s78
      %p87 = scmp.eq.s32.totalorder %s30, 0
      %p88 = por %p86, %p87
      %p89 = scmp.ne.s32.totalorder %s77, %s78
      %p90 = scmp.eq.s32.totalorder %s31, 1
      %p91 = por %p89, %p90
      %p93 = scmp.ne.s32.totalorder %s78, %s92
      %p94 = scmp.eq.s32.totalorder %s31, 0
      %p95 = por %p93, %p94
      %s96 = ssub.s32 %s25, %s32
      %p97 = scmp.eq.s32.totalorder %s96, 0
      %s99 = sadd.s32 %s98, 1
      %s100 = scalar_select %p97, %s98, %s99
      %p103 = pneg %p97
      %p104 = scmp.eq.s32.totalorder %s25, 1
      %p105 = por %p103, %p104
      %p106 = scmp.ne.s32.totalorder %s98, %s101
      %p107 = scmp.eq.s32.totalorder %s25, 0
      %p108 = por %p106, %p107
      %p109 = scmp.ne.s32.totalorder %s98, %s101
      %p110 = scmp.eq.s32.totalorder %s30, 1
      %p111 = por %p109, %p110
      %p112 = scmp.ne.s32.totalorder %s101, %s102
      %p113 = scmp.eq.s32.totalorder %s30, 0
      %p114 = por %p112, %p113
      %p115 = scmp.ne.s32.totalorder %s101, %s102
      %p116 = scmp.eq.s32.totalorder %s31, 1
      %p117 = por %p115, %p116
      %p119 = scmp.ne.s32.totalorder %s102, %s118
      %p120 = scmp.eq.s32.totalorder %s31, 0
      %p121 = por %p119, %p120
      %s122 = ssub.s32 %s25, %s32
      %p123 = scmp.eq.s32.totalorder %s122, 0
      %s125 = sadd.s32 %s124, 1
      %s126 = scalar_select %p123, %s124, %s125
      %p129 = pneg %p123
      %p130 = scmp.eq.s32.totalorder %s25, 1
      %p131 = por %p129, %p130
      %p132 = scmp.ne.s32.totalorder %s124, %s127
      %p133 = scmp.eq.s32.totalorder %s25, 0
      %p134 = por %p132, %p133
      %p135 = scmp.ne.s32.totalorder %s124, %s127
      %p136 = scmp.eq.s32.totalorder %s30, 1
      %p137 = por %p135, %p136
      %p138 = scmp.ne.s32.totalorder %s127, %s128
      %p139 = scmp.eq.s32.totalorder %s30, 0
      %p140 = por %p138, %p139
      %p141 = scmp.ne.s32.totalorder %s127, %s128
      %p142 = scmp.eq.s32.totalorder %s31, 1
      %p143 = por %p141, %p142
      %p145 = scmp.ne.s32.totalorder %s128, %s144
      %p146 = scmp.eq.s32.totalorder %s31, 0
      %p147 = por %p145, %p146
      %s148 = ssub.s32 %s25, %s32
      %p149 = scmp.eq.s32.totalorder %s148, 0
      %s151 = sadd.s32 %s150, 1
      %s152 = scalar_select %p149, %s150, %s151
      %p155 = pneg %p149
      %p156 = scmp.eq.s32.totalorder %s25, 1
      %p157 = por %p155, %p156
      %p158 = scmp.ne.s32.totalorder %s150, %s153
      %p159 = scmp.eq.s32.totalorder %s25, 0
      %p160 = por %p158, %p159
      %p161 = scmp.ne.s32.totalorder %s150, %s153
      %p162 = scmp.eq.s32.totalorder %s30, 1
      %p163 = por %p161, %p162
      %p164 = scmp.ne.s32.totalorder %s153, %s154
      %p165 = scmp.eq.s32.totalorder %s30, 0
      %p166 = por %p164, %p165
      %p167 = scmp.ne.s32.totalorder %s153, %s154
      %p168 = scmp.eq.s32.totalorder %s31, 1
      %p169 = por %p167, %p168
      %p171 = scmp.ne.s32.totalorder %s154, %s170
      %p172 = scmp.eq.s32.totalorder %s31, 0
      %p173 = por %p171, %p172
      %s174 = ssub.s32 %s25, %s32
      %p175 = scmp.eq.s32.totalorder %s174, 0
      %s177 = sadd.s32 %s176, 1
      %s178 = scalar_select %p175, %s176, %s177
      %p181 = pneg %p175
      %p182 = scmp.eq.s32.totalorder %s25, 1
      %p183 = por %p181, %p182
      %p184 = scmp.ne.s32.totalorder %s176, %s179
      %p185 = scmp.eq.s32.totalorder %s25, 0
      %p186 = por %p184, %p185
      %p187 = scmp.ne.s32.totalorder %s176, %s179
      %p188 = scmp.eq.s32.totalorder %s30, 1
      %p189 = por %p187, %p188
      %p190 = scmp.ne.s32.totalorder %s179, %s180
      %p191 = scmp.eq.s32.totalorder %s30, 0
      %p192 = por %p190, %p191
      %p193 = scmp.ne.s32.totalorder %s179, %s180
      %p194 = scmp.eq.s32.totalorder %s31, 1
      %p195 = por %p193, %p194
      %p197 = scmp.ne.s32.totalorder %s180, %s196
      %p198 = scmp.eq.s32.totalorder %s31, 0
      %p199 = por %p197, %p198
      %s200 = ssub.s32 %s25, %s32
      %p201 = scmp.eq.s32.totalorder %s200, 0
      %s203 = sadd.s32 %s202, 1
      %s204 = scalar_select %p201, %s202, %s203
      %p207 = pneg %p201
      %p208 = scmp.eq.s32.totalorder %s25, 1
      %p209 = por %p207, %p208
      %p210 = scmp.ne.s32.totalorder %s202, %s205
      %p211 = scmp.eq.s32.totalorder %s25, 0
      %p212 = por %p210, %p211
      %p213 = scmp.ne.s32.totalorder %s202, %s205
      %p214 = scmp.eq.s32.totalorder %s30, 1
      %p215 = por %p213, %p214
      %p216 = scmp.ne.s32.totalorder %s205, %s206
      %p217 = scmp.eq.s32.totalorder %s30, 0
      %p218 = por %p216, %p217
      %p219 = scmp.ne.s32.totalorder %s205, %s206
      %p220 = scmp.eq.s32.totalorder %s31, 1
      %p221 = por %p219, %p220
      %p223 = scmp.ne.s32.totalorder %s206, %s222
      %p224 = scmp.eq.s32.totalorder %s31, 0
      %p225 = por %p223, %p224
      %s226 = ssub.s32 %s25, %s32
      %p227 = scmp.eq.s32.totalorder %s226, 0
      %s229 = sadd.s32 %s228, 1
      %s230 = scalar_select %p227, %s228, %s229
      %p233 = pneg %p227
      %p234 = scmp.eq.s32.totalorder %s25, 1
      %p235 = por %p233, %p234
      %p236 = scmp.ne.s32.totalorder %s228, %s231
      %p237 = scmp.eq.s32.totalorder %s25, 0
      %p238 = por %p236, %p237
      %p239 = scmp.ne.s32.totalorder %s228, %s231
      %p240 = scmp.eq.s32.totalorder %s30, 1
      %p241 = por %p239, %p240
      %p242 = scmp.ne.s32.totalorder %s231, %s232
      %p243 = scmp.eq.s32.totalorder %s30, 0
      %p244 = por %p242, %p243
      %p245 = scmp.ne.s32.totalorder %s231, %s232
      %p246 = scmp.eq.s32.totalorder %s31, 1
      %p247 = por %p245, %p246
      %p249 = scmp.ne.s32.totalorder %s232, %s248
      %p250 = scmp.eq.s32.totalorder %s31, 0
      %p251 = por %p249, %p250
      %p252 = scmp.le.s32.totalorder 1, %s25
      %p253 = scmp.lt.s32.totalorder %s25, 3
      %p254 = pnand %p252, %p253
      %p255 = pneg %p254
      // Predicated region
      $region9: #{dueling_dqn_forward.1} parent=5 // pred_check
        _
      $region10: #{dueling_dqn_forward.1} parent=5 // pred_check_branch
        %257 = sbr.rel (%p254) target = $region12
      $region11: #{dueling_dqn_forward.1} parent=5 // pred_region
        %s258 = ssub.s32 %s25, 1
        // Predicated region
        $region13: #{dueling_dqn_forward.1} parent=11 // pred_check
          %p259 = pneg %p46
        $region14: #{dueling_dqn_forward.1} parent=11 // pred_check_branch
          %261 = sbr.rel (%p259) target = $region16
        $region15: #{dueling_dqn_forward.1} parent=11 // pred_region
          %s263 = ssub.s32 128, 128
          %264 = vsyncadd [#allocation3], %s263
          %s266 = sshll.u32 [#allocation2], 4
          %s267 = int_to_ptr.vmem [resolvable:$true] %s266
          %269 = dma.hbm_to_vmem [thread:$0]  %s0, 128, %s267, [#allocation3]
        $region16: #{dueling_dqn_forward.1} parent=11 // pred_fallthru
          _
        // Predicated region
        $region17: #{dueling_dqn_forward.1} parent=11 // pred_check
          %p270 = pneg %p67
        $region18: #{dueling_dqn_forward.1} parent=11 // pred_check_branch
          %272 = sbr.rel (%p270) target = $region20
        $region19: #{dueling_dqn_forward.1} parent=11 // pred_region
          %s274 = ssub.s32 768, 768
          %275 = vsyncadd [#allocation5], %s274
          %s276 = sshll.u32 [#allocation4], 4
          %s277 = int_to_ptr.vmem [resolvable:$true] %s276
          %282 = dma.hbm_to_vmem [thread:$0]  %s1, 768, %s277, [#allocation5], 256, 256, 16
        $region20: #{dueling_dqn_forward.1} parent=11 // pred_fallthru
          _
        // Predicated region
        $region21: #{dueling_dqn_forward.1} parent=11 // pred_check
          %p283 = pneg %p88
        $region22: #{dueling_dqn_forward.1} parent=11 // pred_check_branch
          %285 = sbr.rel (%p283) target = $region24
        $region23: #{dueling_dqn_forward.1} parent=11 // pred_region
          %s287 = ssub.s32 64, 64
          %288 = vsyncadd [#allocation5], %s287
          %s290 = sshll.u32 [#allocation6], 4
          %s291 = int_to_ptr.vmem [resolvable:$true] %s290
          %293 = dma.hbm_to_vmem [thread:$0]  %s2, 64, %s291, [#allocation5]
        $region24: #{dueling_dqn_forward.1} parent=11 // pred_fallthru
          _
      $region12: #{dueling_dqn_forward.1} parent=5 // pred_fallthru
        _
      %p294 = scmp.lt.s32.totalorder %s25, 2
      // Predicated region
      $region25: #{dueling_dqn_forward.1} parent=5 // pred_check
        %p295 = pneg %p294
      $region26: #{dueling_dqn_forward.1} parent=5 // pred_check_branch
        %297 = sbr.rel (%p295) target = $region28
      $region27: #{dueling_dqn_forward.1} parent=5 // pred_region
        // Predicated region
        $region29: #{dueling_dqn_forward.1} parent=27 // pred_check
          %p298 = pneg %p108
        $region30: #{dueling_dqn_forward.1} parent=27 // pred_check_branch
          %300 = sbr.rel (%p298) target = $region32
        $region31: #{dueling_dqn_forward.1} parent=27 // pred_region
          %s301 = sand.u32 %s25, 1
          %s302 = scalar_lea.sflag [#allocation8], %s301
          %s303 = sand.u32 %s98, 1
          %s304 = smul.addr %s303, 2560
          %s305 = scalar_lea.vmem [#allocation7], %s304
          %s307 = ssub.s32 40960, 40960
          %308 = vsyncadd %s302, %s307
          %s309 = smul.addr %s25, 320
          %s310 = smul.addr %s309, 128
          %s311 = scalar_lea.hbm %s3, %s310
          %s312 = sshll.u32 %s305, 4
          %s313 = int_to_ptr.vmem [resolvable:$true] %s312
          %318 = dma.hbm_to_vmem [thread:$0]  %s311, 40960, %s313, %s302, 512, 512, 32
        $region32: #{dueling_dqn_forward.1} parent=27 // pred_fallthru
          _
        // Predicated region
        $region33: #{dueling_dqn_forward.1} parent=27 // pred_check
          %p319 = pneg %p134
        $region34: #{dueling_dqn_forward.1} parent=27 // pred_check_branch
          %321 = sbr.rel (%p319) target = $region36
        $region35: #{dueling_dqn_forward.1} parent=27 // pred_region
          %s322 = sand.u32 %s25, 1
          %s323 = scalar_lea.sflag [#allocation8], %s322
          %s324 = sand.u32 %s124, 1
          %s325 = smul.addr %s324, 20
          %s326 = scalar_lea.vmem [#allocation9], %s325
          %s328 = ssub.s32 320, 320
          %329 = vsyncadd %s323, %s328
          %s330 = smul.addr %s25, 20
          %s331 = smul.addr %s330, 16
          %s332 = scalar_lea.hbm %s4, %s331
          %s333 = sshll.u32 %s326, 4
          %s334 = int_to_ptr.vmem [resolvable:$true] %s333
          %339 = dma.hbm_to_vmem [thread:$0]  %s332, 320, %s334, %s323, 64, 64, 4
        $region36: #{dueling_dqn_forward.1} parent=27 // pred_fallthru
          _
        // Predicated region
        $region37: #{dueling_dqn_forward.1} parent=27 // pred_check
          %p340 = pneg %p160
        $region38: #{dueling_dqn_forward.1} parent=27 // pred_check_branch
          %342 = sbr.rel (%p340) target = $region40
        $region39: #{dueling_dqn_forward.1} parent=27 // pred_region
          %s343 = sand.u32 %s25, 1
          %s344 = scalar_lea.sflag [#allocation11], %s343
          %s345 = sand.u32 %s150, 1
          %s346 = smul.addr %s345, 20
          %s347 = scalar_lea.vmem [#allocation10], %s346
          %s349 = ssub.s32 320, 320
          %350 = vsyncadd %s344, %s349
          %s351 = smul.addr %s25, 20
          %s352 = smul.addr %s351, 16
          %s353 = scalar_lea.hbm %s5, %s352
          %s354 = sshll.u32 %s347, 4
          %s355 = int_to_ptr.vmem [resolvable:$true] %s354
          %360 = dma.hbm_to_vmem [thread:$0]  %s353, 320, %s355, %s344, 64, 64, 4
        $region40: #{dueling_dqn_forward.1} parent=27 // pred_fallthru
          _
        // Predicated region
        $region41: #{dueling_dqn_forward.1} parent=27 // pred_check
          %p361 = pneg %p186
        $region42: #{dueling_dqn_forward.1} parent=27 // pred_check_branch
          %363 = sbr.rel (%p361) target = $region44
        $region43: #{dueling_dqn_forward.1} parent=27 // pred_region
          %s364 = sand.u32 %s25, 1
          %s365 = scalar_lea.sflag [#allocation11], %s364
          %s366 = sand.u32 %s176, 1
          %s367 = smul.addr %s366, 256
          %s368 = scalar_lea.vmem [#allocation12], %s367
          %s370 = ssub.s32 4096, 4096
          %371 = vsyncadd %s365, %s370
          %s372 = smul.addr %s25, 64
          %s373 = smul.addr %s372, 64
          %s374 = scalar_lea.hbm %s6, %s373
          %s375 = sshll.u32 %s368, 4
          %s376 = int_to_ptr.vmem [resolvable:$true] %s375
          %381 = dma.hbm_to_vmem [thread:$0]  %s374, 4096, %s376, %s365, 64, 64, 4
        $region44: #{dueling_dqn_forward.1} parent=27 // pred_fallthru
          _
        // Predicated region
        $region45: #{dueling_dqn_forward.1} parent=27 // pred_check
          %p382 = pneg %p212
        $region46: #{dueling_dqn_forward.1} parent=27 // pred_check_branch
          %384 = sbr.rel (%p382) target = $region48
        $region47: #{dueling_dqn_forward.1} parent=27 // pred_region
          %s385 = sand.u32 %s202, 1
          %s386 = scalar_lea.sflag [#allocation14], %s385
          %s387 = sand.u32 %s202, 1
          %s388 = scalar_lea.vmem [#allocation13], %s387
          %s390 = ssub.s32 16, 16
          %391 = vsyncadd %s386, %s390
          %s392 = smul.addr %s25, 16
          %s393 = scalar_lea.hbm %s7, %s392
          %s395 = sshll.u32 %s388, 4
          %s396 = int_to_ptr.vmem [resolvable:$true] %s395
          %398 = dma.hbm_to_vmem [thread:$0]  %s393, 16, %s396, %s386
        $region48: #{dueling_dqn_forward.1} parent=27 // pred_fallthru
          _
      $region28: #{dueling_dqn_forward.1} parent=5 // pred_fallthru
        _
      %p399 = scmp.le.s32.totalorder 1, %s25
      %p400 = scmp.lt.s32.totalorder %s25, 3
      %p401 = pnand %p399, %p400
      %p402 = pneg %p401
      // Predicated region
      $region49: #{dueling_dqn_forward.1} parent=5 // pred_check
        _
      $region50: #{dueling_dqn_forward.1} parent=5 // pred_check_branch
        %404 = sbr.rel (%p401) target = $region52
      $region51: #{dueling_dqn_forward.1} parent=5 // pred_region
        %s405 = ssub.s32 %s25, 1
        // Predicated region
        $region53: #{dueling_dqn_forward.1} parent=51 // pred_check
          %p406 = pneg %p46
        $region54: #{dueling_dqn_forward.1} parent=51 // pred_check_branch
          %408 = sbr.rel (%p406) target = $region56
        $region55: #{dueling_dqn_forward.1} parent=51 // pred_region
          %409 = dma.done [#allocation3], 128
        $region56: #{dueling_dqn_forward.1} parent=51 // pred_fallthru
          _
        // Predicated region
        $region57: #{dueling_dqn_forward.1} parent=51 // pred_check
          %p410 = pneg %p67
        $region58: #{dueling_dqn_forward.1} parent=51 // pred_check_branch
          %412 = sbr.rel (%p410) target = $region60
        $region59: #{dueling_dqn_forward.1} parent=51 // pred_region
          %413 = dma.done [#allocation5], 768
        $region60: #{dueling_dqn_forward.1} parent=51 // pred_fallthru
          _
        // Predicated region
        $region61: #{dueling_dqn_forward.1} parent=51 // pred_check
          %p414 = pneg %p88
        $region62: #{dueling_dqn_forward.1} parent=51 // pred_check_branch
          %416 = sbr.rel (%p414) target = $region64
        $region63: #{dueling_dqn_forward.1} parent=51 // pred_region
          %417 = dma.done [#allocation5], 64
        $region64: #{dueling_dqn_forward.1} parent=51 // pred_fallthru
          _
        %s418 = sand.u32 %s30, 1
        %s419 = scalar_lea.sflag [#allocation8], %s418
        %s420 = sand.u32 %s101, 1
        %s421 = smul.addr %s420, 2560
        %s422 = scalar_lea.vmem [#allocation7], %s421
        // Predicated region
        $region65: #{dueling_dqn_forward.1} parent=51 // pred_check
          %p423 = pneg %p114
        $region66: #{dueling_dqn_forward.1} parent=51 // pred_check_branch
          %425 = sbr.rel (%p423) target = $region68
        $region67: #{dueling_dqn_forward.1} parent=51 // pred_region
          %426 = dma.done %s419, 40960
        $region68: #{dueling_dqn_forward.1} parent=51 // pred_fallthru
          _
        %s427 = sand.u32 %s30, 1
        %s428 = scalar_lea.sflag [#allocation8], %s427
        %s429 = sand.u32 %s127, 1
        %s430 = smul.addr %s429, 20
        %s431 = scalar_lea.vmem [#allocation9], %s430
        // Predicated region
        $region69: #{dueling_dqn_forward.1} parent=51 // pred_check
          %p432 = pneg %p140
        $region70: #{dueling_dqn_forward.1} parent=51 // pred_check_branch
          %434 = sbr.rel (%p432) target = $region72
        $region71: #{dueling_dqn_forward.1} parent=51 // pred_region
          %435 = dma.done %s428, 320
        $region72: #{dueling_dqn_forward.1} parent=51 // pred_fallthru
          _
        %s436 = sand.u32 %s30, 1
        %s437 = scalar_lea.sflag [#allocation11], %s436
        %s438 = sand.u32 %s153, 1
        %s439 = smul.addr %s438, 20
        %s440 = scalar_lea.vmem [#allocation10], %s439
        // Predicated region
        $region73: #{dueling_dqn_forward.1} parent=51 // pred_check
          %p441 = pneg %p166
        $region74: #{dueling_dqn_forward.1} parent=51 // pred_check_branch
          %443 = sbr.rel (%p441) target = $region76
        $region75: #{dueling_dqn_forward.1} parent=51 // pred_region
          %444 = dma.done %s437, 320
        $region76: #{dueling_dqn_forward.1} parent=51 // pred_fallthru
          _
        %s445 = sand.u32 %s30, 1
        %s446 = scalar_lea.sflag [#allocation11], %s445
        %s447 = sand.u32 %s179, 1
        %s448 = smul.addr %s447, 256
        %s449 = scalar_lea.vmem [#allocation12], %s448
        // Predicated region
        $region77: #{dueling_dqn_forward.1} parent=51 // pred_check
          %p450 = pneg %p192
        $region78: #{dueling_dqn_forward.1} parent=51 // pred_check_branch
          %452 = sbr.rel (%p450) target = $region80
        $region79: #{dueling_dqn_forward.1} parent=51 // pred_region
          %453 = dma.done %s446, 4096
        $region80: #{dueling_dqn_forward.1} parent=51 // pred_fallthru
          _
        %s454 = sand.u32 %s205, 1
        %s455 = scalar_lea.sflag [#allocation14], %s454
        %s456 = sand.u32 %s205, 1
        %s457 = scalar_lea.vmem [#allocation13], %s456
        // Predicated region
        $region81: #{dueling_dqn_forward.1} parent=51 // pred_check
          %p458 = pneg %p218
        $region82: #{dueling_dqn_forward.1} parent=51 // pred_check_branch
          %460 = sbr.rel (%p458) target = $region84
        $region83: #{dueling_dqn_forward.1} parent=51 // pred_region
          %461 = dma.done %s455, 16
        $region84: #{dueling_dqn_forward.1} parent=51 // pred_fallthru
          _
        %p462 = pneg %p46
        %p463 = pneg %p43
        %p464 = pneg %p67
        %p465 = pneg %p64
        %p466 = pneg %p88
        %p467 = pneg %p85
        %s468 = sand.u32 %s30, 1
        %s469 = scalar_lea.sflag [#allocation8], %s468
        %s470 = sand.u32 %s101, 1
        %s471 = smul.addr %s470, 2560
        %s472 = scalar_lea.vmem [#allocation7], %s471
        %p473 = pneg %p114
        %p474 = pneg %p111
        %s475 = sand.u32 %s30, 1
        %s476 = scalar_lea.sflag [#allocation8], %s475
        %s477 = sand.u32 %s127, 1
        %s478 = smul.addr %s477, 20
        %s479 = scalar_lea.vmem [#allocation9], %s478
        %p480 = pneg %p140
        %p481 = pneg %p137
        %s482 = sand.u32 %s30, 1
        %s483 = scalar_lea.sflag [#allocation11], %s482
        %s484 = sand.u32 %s153, 1
        %s485 = smul.addr %s484, 20
        %s486 = scalar_lea.vmem [#allocation10], %s485
        %p487 = pneg %p166
        %p488 = pneg %p163
        %s489 = sand.u32 %s30, 1
        %s490 = scalar_lea.sflag [#allocation11], %s489
        %s491 = sand.u32 %s179, 1
        %s492 = smul.addr %s491, 256
        %s493 = scalar_lea.vmem [#allocation12], %s492
        %p494 = pneg %p192
        %p495 = pneg %p189
        %s496 = sand.u32 %s205, 1
        %s497 = scalar_lea.sflag [#allocation14], %s496
        %s498 = sand.u32 %s205, 1
        %s499 = scalar_lea.vmem [#allocation13], %s498
        %p500 = pneg %p218
        %p501 = pneg %p215
        %p502 = pneg %p244
        %p503 = pneg %p241
        %p504 = scmp.lt.s32.totalorder %s30, 1
        %s505 = scalar_select %p504, %s30, 1
        %s506 = smul.addr %s505, 8
        %s507 = scalar_lea.vmem %s8, %s506
        %p508 = scmp.lt.s32.totalorder %s30, 1
        %s509 = scalar_select %p508, %s30, 1
        %s510 = smul.addr %s509, 8
        %s511 = scalar_lea.vmem %s8, %s510
        %v513 = vld [vmem:[#allocation2] sm:$0xff]
        %v514 = vpack.c.bf16 %v513, %v513
        %v515 = vld [vmem:[#allocation4] sm:$0xff]
        %v516 = vld [vmem:[#allocation4 + $0x8] sm:$0xff]
        %v517 = vld [vmem:[#allocation4 + $0x10] sm:$0xff]
        %v518 = vld [vmem:[#allocation4 + $0x18] sm:$0xff]
        %v519 = vld [vmem:[#allocation4 + $0x20] sm:$0x11]
        %v520 = vld [vmem:[#allocation4 + $0x28] sm:$0x11]
        %v521 = vld [vmem:[#allocation6] sm:$0xf]
        %v523 = vlaneseq
        %v524 = vshrl.u32 %v523, 7
        %v525 = vsub.s32 0, %v524
        %v526 = vrot.slane %v521, %v525
        %v527 = vlaneseq
        %v528 = vshrl.u32 %v527, 7
        %v529 = vsub.s32 1, %v528
        %v530 = vrot.slane %v521, %v529
        %v531 = vlaneseq
        %v532 = vshrl.u32 %v531, 7
        %v533 = vsub.s32 2, %v532
        %v534 = vrot.slane %v521, %v533
        %v535 = vlaneseq
        %v536 = vshrl.u32 %v535, 7
        %v537 = vsub.s32 3, %v536
        %v538 = vrot.slane %v521, %v537
        %v549 = vunpack.c.l.b16 %v515
        %v550 = vunpack.c.h.b16 %v515
        %v551 = vunpack.c.l.b16 %v516
        %v552 = vunpack.c.h.b16 %v516
        %v553 = vunpack.c.l.b16 %v517
        %v554 = vunpack.c.h.b16 %v517
        %v555 = vunpack.c.l.b16 %v518
        %v556 = vunpack.c.h.b16 %v518
        %v557 = vunpack.c.l.b16 %v519
        %v558 = vunpack.c.h.b16 %v519
        %v559 = vunpack.c.l.b16 %v520
        %v560 = vunpack.c.h.b16 %v520
        %v561 = vpack.c.b16 %v553, %v549
        %v562 = vpack.c.b16 %v554, %v550
        %v563 = vpack.c.b16 %v555, %v551
        %v564 = vpack.c.b16 %v556, %v552
        %v565 = vpack.c.b16 %v557, %v557
        %v566 = vpack.c.b16 %v558, %v558
        %v567 = vpack.c.b16 %v559, %v559
        %v568 = vpack.c.b16 %v560, %v560
        %vm573 = vcmask 146432
        %v575 = vsel %vm573, %v514, 0
        %vm577 = vcmask 1040384
        %v579 = vsel %vm577, %v565, 0
        %v582 = vsel %vm577, %v566, 0
        %v585 = vsel %vm577, %v567, 0
        %v588 = vsel %vm577, %v568, 0
        %590 = vmatprep.subr.bf16.mxu0 %v562
        %591 = vmatpush1.bf16.msra.mxu0 %v561
        %592 = vmatprep.subr.bf16.mxu0 %v582
        %593 = vmatpush1.bf16.msra.mxu0 %v579
        %594 = vmatprep.subr.bf16.mxu0 0
        %595 = vmatpush1.bf16.msra.mxu0 0
        %596 = vmatprep.subr.bf16.mxu0 0
        %597 = vmatpush1.bf16.msra.mxu0 0
        %598 = vmatprep.subr.bf16.mxu0 0
        %599 = vmatpush1.bf16.msra.mxu0 0
        %600 = vmatprep.subr.bf16.mxu0 0
        %601 = vmatpush1.bf16.msra.mxu0 0
        %602 = vmatprep.subr.bf16.mxu0 0
        %603 = vmatpush1.bf16.msra.mxu0 0
        %604 = vmatprep.subr.bf16.mxu0 0
        %605 = vmatpush1.bf16.msra.mxu0 0
        %606 = vmatprep.subr.bf16.mxu0 0
        %607 = vmatpush1.bf16.msra.mxu0 0
        %608 = vmatprep.subr.bf16.mxu0 0
        %609 = vmatpush1.bf16.msra.mxu0 0
        %610 = vmatprep.subr.bf16.mxu0 0
        %611 = vmatpush1.bf16.msra.mxu0 0
        %612 = vmatprep.subr.bf16.mxu0 0
        %613 = vmatpush1.bf16.msra.mxu0 0
        %614 = vmatprep.subr.bf16.mxu0 0
        %615 = vmatpush1.bf16.msra.mxu0 0
        %616 = vmatprep.subr.bf16.mxu0 0
        %617 = vmatpush1.bf16.msra.mxu0 0
        %618 = vmatprep.subr.bf16.mxu0 0
        %619 = vmatpush1.bf16.msra.mxu0 0
        %620 = vmatprep.subr.bf16.mxu0 0
        %621 = vmatpush1.bf16.msra.mxu0 0
        %622 = vmatprep.mubr.bf16.mxu0 0
        %623 = vmatmul.mubr.bf16.gmra.mrb[0].mxu0 %v575
        %v624 = vpop.f32.mrb[0].mxu0
        %v625 = vadd.f32 %v526, %v624
        %v626 = vpop.f32.mrb[0].mxu0
        %v627 = vadd.f32 %v530, %v626
        %v628 = vpop.f32.mrb[0].mxu0
        %v629 = vpop.f32.mrb[0].mxu0
        %630 = vdwg.mxu0
        %631 = vmatprep.subr.bf16.mxu0 %v564
        %632 = vmatpush1.bf16.msra.mxu0 %v563
        %633 = vmatprep.subr.bf16.mxu0 %v588
        %634 = vmatpush1.bf16.msra.mxu0 %v585
        %635 = vmatprep.subr.bf16.mxu0 0
        %636 = vmatpush1.bf16.msra.mxu0 0
        %637 = vmatprep.subr.bf16.mxu0 0
        %638 = vmatpush1.bf16.msra.mxu0 0
        %639 = vmatprep.subr.bf16.mxu0 0
        %640 = vmatpush1.bf16.msra.mxu0 0
        %641 = vmatprep.subr.bf16.mxu0 0
        %642 = vmatpush1.bf16.msra.mxu0 0
        %643 = vmatprep.subr.bf16.mxu0 0
        %644 = vmatpush1.bf16.msra.mxu0 0
        %645 = vmatprep.subr.bf16.mxu0 0
        %646 = vmatpush1.bf16.msra.mxu0 0
        %647 = vmatprep.subr.bf16.mxu0 0
        %648 = vmatpush1.bf16.msra.mxu0 0
        %649 = vmatprep.subr.bf16.mxu0 0
        %650 = vmatpush1.bf16.msra.mxu0 0
        %651 = vmatprep.subr.bf16.mxu0 0
        %652 = vmatpush1.bf16.msra.mxu0 0
        %653 = vmatprep.subr.bf16.mxu0 0
        %654 = vmatpush1.bf16.msra.mxu0 0
        %655 = vmatprep.subr.bf16.mxu0 0
        %656 = vmatpush1.bf16.msra.mxu0 0
        %657 = vmatprep.subr.bf16.mxu0 0
        %658 = vmatpush1.bf16.msra.mxu0 0
        %659 = vmatprep.subr.bf16.mxu0 0
        %660 = vmatpush1.bf16.msra.mxu0 0
        %661 = vmatprep.subr.bf16.mxu0 0
        %662 = vmatpush1.bf16.msra.mxu0 0
        %663 = vmatprep.mubr.bf16.mxu0 0
        %664 = vmatmul.mubr.bf16.gmra.mrb[0].mxu0 %v575
        %v665 = vpop.f32.mrb[0].mxu0
        %v666 = vadd.f32 %v534, %v665
        %v667 = vpop.f32.mrb[0].mxu0
        %v668 = vadd.f32 %v538, %v667
        %v669 = vpop.f32.mrb[0].mxu0
        %v670 = vpop.f32.mrb[0].mxu0
        %671 = vdwg.mxu0
        %vm672 = vcmp.gt.f32.partialorder %v625, 0.0
        %vm673 = vcmp.gt.f32.partialorder %v627, 0.0
        %vm674 = vcmp.gt.f32.partialorder %v666, 0.0
        %vm675 = vcmp.gt.f32.partialorder %v668, 0.0
        %v676 = vmul.f32 %v625, 0.01
        %v677 = vmul.f32 %v627, 0.01
        %v678 = vmul.f32 %v666, 0.01
        %v679 = vmul.f32 %v668, 0.01
        %v680 = vsel %vm672, %v625, %v676
        %v681 = vsel %vm673, %v627, %v677
        %v682 = vsel %vm674, %v666, %v678
        %v683 = vsel %vm675, %v668, %v679
        %v684 = vpack.c.bf16 %v680, %v680
        %v685 = vpack.c.bf16 %v681, %v681
        %v686 = vpack.c.bf16 %v682, %v682
        %v687 = vpack.c.bf16 %v683, %v683
        %v688 = vld [vmem:[%s422] sm:$0xff]
        %v689 = vld [vmem:[%s422 + $0x8] sm:$0xff]
        %v690 = vld [vmem:[%s422 + $0x10] sm:$0xff]
        %v691 = vld [vmem:[%s422 + $0x18] sm:$0xff]
        %v692 = vld [vmem:[%s422 + $0x20] sm:$0xff]
        %v693 = vld [vmem:[%s422 + $0x28] sm:$0xff]
        %v694 = vld [vmem:[%s422 + $0x30] sm:$0xff]
        %v695 = vld [vmem:[%s422 + $0x38] sm:$0xff]
        %v696 = vld [vmem:[%s422 + $0x40] sm:$0xff]
        %v697 = vld [vmem:[%s422 + $0x48] sm:$0xff]
        %v698 = vld [vmem:[%s422 + $0x50] sm:$0xff]
        %v699 = vld [vmem:[%s422 + $0x58] sm:$0xff]
        %v700 = vld [vmem:[%s422 + $0x60] sm:$0xff]
        %v701 = vld [vmem:[%s422 + $0x68] sm:$0xff]
        %v702 = vld [vmem:[%s422 + $0x70] sm:$0xff]
        %v703 = vld [vmem:[%s422 + $0x78] sm:$0xff]
        %v704 = vld [vmem:[%s422 + $0x80] sm:$0xff]
        %v705 = vld [vmem:[%s422 + $0x88] sm:$0xff]
        %v706 = vld [vmem:[%s422 + $0x90] sm:$0xff]
        %v707 = vld [vmem:[%s422 + $0x98] sm:$0xff]
        %v708 = vld [vmem:[%s422 + $0xa0] sm:$0xff]
        %v709 = vld [vmem:[%s422 + $0xa8] sm:$0xff]
        %v710 = vld [vmem:[%s422 + $0xb0] sm:$0xff]
        %v711 = vld [vmem:[%s422 + $0xb8] sm:$0xff]
        %v712 = vld [vmem:[%s422 + $0xc0] sm:$0xff]
        %v713 = vld [vmem:[%s422 + $0xc8] sm:$0xff]
        %v714 = vld [vmem:[%s422 + $0xd0] sm:$0xff]
        %v715 = vld [vmem:[%s422 + $0xd8] sm:$0xff]
        %v716 = vld [vmem:[%s422 + $0xe0] sm:$0xff]
        %v717 = vld [vmem:[%s422 + $0xe8] sm:$0xff]
        %v718 = vld [vmem:[%s422 + $0xf0] sm:$0xff]
        %v719 = vld [vmem:[%s422 + $0xf8] sm:$0xff]
        %v720 = vld [vmem:[%s422 + $0x100] sm:$0xff]
        %v721 = vld [vmem:[%s422 + $0x108] sm:$0xff]
        %v722 = vld [vmem:[%s422 + $0x110] sm:$0xff]
        %v723 = vld [vmem:[%s422 + $0x118] sm:$0xff]
        %v724 = vld [vmem:[%s422 + $0x120] sm:$0xff]
        %v725 = vld [vmem:[%s422 + $0x128] sm:$0xff]
        %v726 = vld [vmem:[%s422 + $0x130] sm:$0xff]
        %v727 = vld [vmem:[%s422 + $0x138] sm:$0xff]
        %v728 = vld [vmem:[%s422 + $0x140] sm:$0xff]
        %v729 = vld [vmem:[%s422 + $0x148] sm:$0xff]
        %v730 = vld [vmem:[%s422 + $0x150] sm:$0xff]
        %v731 = vld [vmem:[%s422 + $0x158] sm:$0xff]
        %v732 = vld [vmem:[%s422 + $0x160] sm:$0xff]
        %v733 = vld [vmem:[%s422 + $0x168] sm:$0xff]
        %v734 = vld [vmem:[%s422 + $0x170] sm:$0xff]
        %v735 = vld [vmem:[%s422 + $0x178] sm:$0xff]
        %v736 = vld [vmem:[%s422 + $0x180] sm:$0xff]
        %v737 = vld [vmem:[%s422 + $0x188] sm:$0xff]
        %v738 = vld [vmem:[%s422 + $0x190] sm:$0xff]
        %v739 = vld [vmem:[%s422 + $0x198] sm:$0xff]
        %v740 = vld [vmem:[%s422 + $0x1a0] sm:$0xff]
        %v741 = vld [vmem:[%s422 + $0x1a8] sm:$0xff]
        %v742 = vld [vmem:[%s422 + $0x1b0] sm:$0xff]
        %v743 = vld [vmem:[%s422 + $0x1b8] sm:$0xff]
        %v744 = vld [vmem:[%s422 + $0x1c0] sm:$0xff]
        %v745 = vld [vmem:[%s422 + $0x1c8] sm:$0xff]
        %v746 = vld [vmem:[%s422 + $0x1d0] sm:$0xff]
        %v747 = vld [vmem:[%s422 + $0x1d8] sm:$0xff]
        %v748 = vld [vmem:[%s422 + $0x1e0] sm:$0xff]
        %v749 = vld [vmem:[%s422 + $0x1e8] sm:$0xff]
        %v750 = vld [vmem:[%s422 + $0x1f0] sm:$0xff]
        %v751 = vld [vmem:[%s422 + $0x1f8] sm:$0xff]
        %v752 = vunpack.c.l.s8.bf16 %v688
        %v753 = vunpack.c.l.s8.bf16 %v689
        %v754 = vunpack.c.l.s8.bf16 %v690
        %v755 = vunpack.c.l.s8.bf16 %v691
        %v756 = vunpack.c.h.s8.bf16 %v688
        %v757 = vunpack.c.h.s8.bf16 %v689
        %v758 = vunpack.c.h.s8.bf16 %v690
        %v759 = vunpack.c.h.s8.bf16 %v691
        %v760 = vunpack.c.l.s8.bf16 %v692
        %v761 = vunpack.c.l.s8.bf16 %v693
        %v762 = vunpack.c.l.s8.bf16 %v694
        %v763 = vunpack.c.l.s8.bf16 %v695
        %v764 = vunpack.c.h.s8.bf16 %v692
        %v765 = vunpack.c.h.s8.bf16 %v693
        %v766 = vunpack.c.h.s8.bf16 %v694
        %v767 = vunpack.c.h.s8.bf16 %v695
        %v768 = vunpack.c.l.s8.bf16 %v696
        %v769 = vunpack.c.l.s8.bf16 %v697
        %v770 = vunpack.c.l.s8.bf16 %v698
        %v771 = vunpack.c.l.s8.bf16 %v699
        %v772 = vunpack.c.h.s8.bf16 %v696
        %v773 = vunpack.c.h.s8.bf16 %v697
        %v774 = vunpack.c.h.s8.bf16 %v698
        %v775 = vunpack.c.h.s8.bf16 %v699
        %v776 = vunpack.c.l.s8.bf16 %v700
        %v777 = vunpack.c.l.s8.bf16 %v701
        %v778 = vunpack.c.l.s8.bf16 %v702
        %v779 = vunpack.c.l.s8.bf16 %v703
        %v780 = vunpack.c.h.s8.bf16 %v700
        %v781 = vunpack.c.h.s8.bf16 %v701
        %v782 = vunpack.c.h.s8.bf16 %v702
        %v783 = vunpack.c.h.s8.bf16 %v703
        %v784 = vunpack.c.l.s8.bf16 %v704
        %v785 = vunpack.c.l.s8.bf16 %v705
        %v786 = vunpack.c.l.s8.bf16 %v706
        %v787 = vunpack.c.l.s8.bf16 %v707
        %v788 = vunpack.c.h.s8.bf16 %v704
        %v789 = vunpack.c.h.s8.bf16 %v705
        %v790 = vunpack.c.h.s8.bf16 %v706
        %v791 = vunpack.c.h.s8.bf16 %v707
        %v792 = vunpack.c.l.s8.bf16 %v708
        %v793 = vunpack.c.l.s8.bf16 %v709
        %v794 = vunpack.c.l.s8.bf16 %v710
        %v795 = vunpack.c.l.s8.bf16 %v711
        %v796 = vunpack.c.h.s8.bf16 %v708
        %v797 = vunpack.c.h.s8.bf16 %v709
        %v798 = vunpack.c.h.s8.bf16 %v710
        %v799 = vunpack.c.h.s8.bf16 %v711
        %v800 = vunpack.c.l.s8.bf16 %v712
        %v801 = vunpack.c.l.s8.bf16 %v713
        %v802 = vunpack.c.l.s8.bf16 %v714
        %v803 = vunpack.c.l.s8.bf16 %v715
        %v804 = vunpack.c.h.s8.bf16 %v712
        %v805 = vunpack.c.h.s8.bf16 %v713
        %v806 = vunpack.c.h.s8.bf16 %v714
        %v807 = vunpack.c.h.s8.bf16 %v715
        %v808 = vunpack.c.l.s8.bf16 %v716
        %v809 = vunpack.c.l.s8.bf16 %v717
        %v810 = vunpack.c.l.s8.bf16 %v718
        %v811 = vunpack.c.l.s8.bf16 %v719
        %v812 = vunpack.c.h.s8.bf16 %v716
        %v813 = vunpack.c.h.s8.bf16 %v717
        %v814 = vunpack.c.h.s8.bf16 %v718
        %v815 = vunpack.c.h.s8.bf16 %v719
        %v816 = vunpack.c.l.s8.bf16 %v720
        %v817 = vunpack.c.l.s8.bf16 %v721
        %v818 = vunpack.c.l.s8.bf16 %v722
        %v819 = vunpack.c.l.s8.bf16 %v723
        %v820 = vunpack.c.h.s8.bf16 %v720
        %v821 = vunpack.c.h.s8.bf16 %v721
        %v822 = vunpack.c.h.s8.bf16 %v722
        %v823 = vunpack.c.h.s8.bf16 %v723
        %v824 = vunpack.c.l.s8.bf16 %v724
        %v825 = vunpack.c.l.s8.bf16 %v725
        %v826 = vunpack.c.l.s8.bf16 %v726
        %v827 = vunpack.c.l.s8.bf16 %v727
        %v828 = vunpack.c.h.s8.bf16 %v724
        %v829 = vunpack.c.h.s8.bf16 %v725
        %v830 = vunpack.c.h.s8.bf16 %v726
        %v831 = vunpack.c.h.s8.bf16 %v727
        %v832 = vunpack.c.l.s8.bf16 %v728
        %v833 = vunpack.c.l.s8.bf16 %v729
        %v834 = vunpack.c.l.s8.bf16 %v730
        %v835 = vunpack.c.l.s8.bf16 %v731
        %v836 = vunpack.c.h.s8.bf16 %v728
        %v837 = vunpack.c.h.s8.bf16 %v729
        %v838 = vunpack.c.h.s8.bf16 %v730
        %v839 = vunpack.c.h.s8.bf16 %v731
        %v840 = vunpack.c.l.s8.bf16 %v732
        %v841 = vunpack.c.l.s8.bf16 %v733
        %v842 = vunpack.c.l.s8.bf16 %v734
        %v843 = vunpack.c.l.s8.bf16 %v735
        %v844 = vunpack.c.h.s8.bf16 %v732
        %v845 = vunpack.c.h.s8.bf16 %v733
        %v846 = vunpack.c.h.s8.bf16 %v734
        %v847 = vunpack.c.h.s8.bf16 %v735
        %v848 = vunpack.c.l.s8.bf16 %v736
        %v849 = vunpack.c.l.s8.bf16 %v737
        %v850 = vunpack.c.l.s8.bf16 %v738
        %v851 = vunpack.c.l.s8.bf16 %v739
        %v852 = vunpack.c.h.s8.bf16 %v736
        %v853 = vunpack.c.h.s8.bf16 %v737
        %v854 = vunpack.c.h.s8.bf16 %v738
        %v855 = vunpack.c.h.s8.bf16 %v739
        %v856 = vunpack.c.l.s8.bf16 %v740
        %v857 = vunpack.c.l.s8.bf16 %v741
        %v858 = vunpack.c.l.s8.bf16 %v742
        %v859 = vunpack.c.l.s8.bf16 %v743
        %v860 = vunpack.c.h.s8.bf16 %v740
        %v861 = vunpack.c.h.s8.bf16 %v741
        %v862 = vunpack.c.h.s8.bf16 %v742
        %v863 = vunpack.c.h.s8.bf16 %v743
        %v864 = vunpack.c.l.s8.bf16 %v744
        %v865 = vunpack.c.l.s8.bf16 %v745
        %v866 = vunpack.c.l.s8.bf16 %v746
        %v867 = vunpack.c.l.s8.bf16 %v747
        %v868 = vunpack.c.h.s8.bf16 %v744
        %v869 = vunpack.c.h.s8.bf16 %v745
        %v870 = vunpack.c.h.s8.bf16 %v746
        %v871 = vunpack.c.h.s8.bf16 %v747
        %v872 = vunpack.c.l.s8.bf16 %v748
        %v873 = vunpack.c.l.s8.bf16 %v749
        %v874 = vunpack.c.l.s8.bf16 %v750
        %v875 = vunpack.c.l.s8.bf16 %v751
        %v876 = vunpack.c.h.s8.bf16 %v748
        %v877 = vunpack.c.h.s8.bf16 %v749
        %v878 = vunpack.c.h.s8.bf16 %v750
        %v879 = vunpack.c.h.s8.bf16 %v751
        %880 = vmatprep.subr.bf16.mxu0 %v753
        %881 = vmatpush1.bf16.msra.mxu0 %v752
        %882 = vmatprep.subr.bf16.mxu0 %v757
        %883 = vmatpush1.bf16.msra.mxu0 %v756
        %884 = vmatprep.subr.bf16.mxu0 %v761
        %885 = vmatpush1.bf16.msra.mxu0 %v760
        %886 = vmatprep.subr.bf16.mxu0 %v765
        %887 = vmatpush1.bf16.msra.mxu0 %v764
        %888 = vmatprep.subr.bf16.mxu0 %v769
        %889 = vmatpush1.bf16.msra.mxu0 %v768
        %890 = vmatprep.subr.bf16.mxu0 %v773
        %891 = vmatpush1.bf16.msra.mxu0 %v772
        %892 = vmatprep.subr.bf16.mxu0 %v777
        %893 = vmatpush1.bf16.msra.mxu0 %v776
        %894 = vmatprep.subr.bf16.mxu0 %v781
        %895 = vmatpush1.bf16.msra.mxu0 %v780
        %896 = vmatprep.subr.bf16.mxu0 %v785
        %897 = vmatpush1.bf16.msra.mxu0 %v784
        %898 = vmatprep.subr.bf16.mxu0 %v789
        %899 = vmatpush1.bf16.msra.mxu0 %v788
        %900 = vmatprep.subr.bf16.mxu0 %v793
        %901 = vmatpush1.bf16.msra.mxu0 %v792
        %902 = vmatprep.subr.bf16.mxu0 %v797
        %903 = vmatpush1.bf16.msra.mxu0 %v796
        %904 = vmatprep.subr.bf16.mxu0 %v801
        %905 = vmatpush1.bf16.msra.mxu0 %v800
        %906 = vmatprep.subr.bf16.mxu0 %v805
        %907 = vmatpush1.bf16.msra.mxu0 %v804
        %908 = vmatprep.subr.bf16.mxu0 %v809
        %909 = vmatpush1.bf16.msra.mxu0 %v808
        %910 = vmatprep.subr.bf16.mxu0 %v813
        %911 = vmatpush1.bf16.msra.mxu0 %v812
        %912 = vmatprep.mubr.bf16.mxu0 %v685
        %913 = vmatmul.mubr.bf16.gmra.mrb[0].mxu0 %v684
        %v914 = vpop.f32.mrb[0].mxu0
        %v915 = vadd.f32 0.0, %v914
        %v916 = vpop.f32.mrb[0].mxu0
        %v917 = vadd.f32 0.0, %v916
        %v918 = vpop.f32.mrb[0].mxu0
        %v919 = vpop.f32.mrb[0].mxu0
        %920 = vdwg.mxu0
        %921 = vmatprep.subr.bf16.mxu0 %v817
        %922 = vmatpush1.bf16.msra.mxu0 %v816
        %923 = vmatprep.subr.bf16.mxu0 %v821
        %924 = vmatpush1.bf16.msra.mxu0 %v820
        %925 = vmatprep.subr.bf16.mxu0 %v825
        %926 = vmatpush1.bf16.msra.mxu0 %v824
        %927 = vmatprep.subr.bf16.mxu0 %v829
        %928 = vmatpush1.bf16.msra.mxu0 %v828
        %929 = vmatprep.subr.bf16.mxu0 %v833
        %930 = vmatpush1.bf16.msra.mxu0 %v832
        %931 = vmatprep.subr.bf16.mxu0 %v837
        %932 = vmatpush1.bf16.msra.mxu0 %v836
        %933 = vmatprep.subr.bf16.mxu0 %v841
        %934 = vmatpush1.bf16.msra.mxu0 %v840
        %935 = vmatprep.subr.bf16.mxu0 %v845
        %936 = vmatpush1.bf16.msra.mxu0 %v844
        %937 = vmatprep.subr.bf16.mxu0 %v849
        %938 = vmatpush1.bf16.msra.mxu0 %v848
        %939 = vmatprep.subr.bf16.mxu0 %v853
        %940 = vmatpush1.bf16.msra.mxu0 %v852
        %941 = vmatprep.subr.bf16.mxu0 %v857
        %942 = vmatpush1.bf16.msra.mxu0 %v856
        %943 = vmatprep.subr.bf16.mxu0 %v861
        %944 = vmatpush1.bf16.msra.mxu0 %v860
        %945 = vmatprep.subr.bf16.mxu0 %v865
        %946 = vmatpush1.bf16.msra.mxu0 %v864
        %947 = vmatprep.subr.bf16.mxu0 %v869
        %948 = vmatpush1.bf16.msra.mxu0 %v868
        %949 = vmatprep.subr.bf16.mxu0 %v873
        %950 = vmatpush1.bf16.msra.mxu0 %v872
        %951 = vmatprep.subr.bf16.mxu0 %v877
        %952 = vmatpush1.bf16.msra.mxu0 %v876
        %953 = vmatprep.mubr.bf16.mxu0 %v687
        %954 = vmatmul.mubr.bf16.gmra.mrb[0].mxu0 %v686
        %v955 = vpop.f32.mrb[0].mxu0
        %v956 = vadd.f32 %v915, %v955
        %v957 = vpop.f32.mrb[0].mxu0
        %v958 = vadd.f32 %v917, %v957
        %v959 = vpop.f32.mrb[0].mxu0
        %v960 = vpop.f32.mrb[0].mxu0
        %961 = vdwg.mxu0
        %962 = vmatprep.subr.bf16.mxu0 %v755
        %963 = vmatpush1.bf16.msra.mxu0 %v754
        %964 = vmatprep.subr.bf16.mxu0 %v759
        %965 = vmatpush1.bf16.msra.mxu0 %v758
        %966 = vmatprep.subr.bf16.mxu0 %v763
        %967 = vmatpush1.bf16.msra.mxu0 %v762
        %968 = vmatprep.subr.bf16.mxu0 %v767
        %969 = vmatpush1.bf16.msra.mxu0 %v766
        %970 = vmatprep.subr.bf16.mxu0 %v771
        %971 = vmatpush1.bf16.msra.mxu0 %v770
        %972 = vmatprep.subr.bf16.mxu0 %v775
        %973 = vmatpush1.bf16.msra.mxu0 %v774
        %974 = vmatprep.subr.bf16.mxu0 %v779
        %975 = vmatpush1.bf16.msra.mxu0 %v778
        %976 = vmatprep.subr.bf16.mxu0 %v783
        %977 = vmatpush1.bf16.msra.mxu0 %v782
        %978 = vmatprep.subr.bf16.mxu0 %v787
        %979 = vmatpush1.bf16.msra.mxu0 %v786
        %980 = vmatprep.subr.bf16.mxu0 %v791
        %981 = vmatpush1.bf16.msra.mxu0 %v790
        %982 = vmatprep.subr.bf16.mxu0 %v795
        %983 = vmatpush1.bf16.msra.mxu0 %v794
        %984 = vmatprep.subr.bf16.mxu0 %v799
        %985 = vmatpush1.bf16.msra.mxu0 %v798
        %986 = vmatprep.subr.bf16.mxu0 %v803
        %987 = vmatpush1.bf16.msra.mxu0 %v802
        %988 = vmatprep.subr.bf16.mxu0 %v807
        %989 = vmatpush1.bf16.msra.mxu0 %v806
        %990 = vmatprep.subr.bf16.mxu0 %v811
        %991 = vmatpush1.bf16.msra.mxu0 %v810
        %992 = vmatprep.subr.bf16.mxu0 %v815
        %993 = vmatpush1.bf16.msra.mxu0 %v814
        %994 = vmatprep.mubr.bf16.mxu0 %v685
        %995 = vmatmul.mubr.bf16.gmra.mrb[0].mxu0 %v684
        %v996 = vpop.f32.mrb[0].mxu0
        %v997 = vadd.f32 0.0, %v996
        %v998 = vpop.f32.mrb[0].mxu0
        %v999 = vadd.f32 0.0, %v998
        %v1000 = vpop.f32.mrb[0].mxu0
        %v1001 = vpop.f32.mrb[0].mxu0
        %1002 = vdwg.mxu0
        %1003 = vmatprep.subr.bf16.mxu0 %v819
        %1004 = vmatpush1.bf16.msra.mxu0 %v818
        %1005 = vmatprep.subr.bf16.mxu0 %v823
        %1006 = vmatpush1.bf16.msra.mxu0 %v822
        %1007 = vmatprep.subr.bf16.mxu0 %v827
        %1008 = vmatpush1.bf16.msra.mxu0 %v826
        %1009 = vmatprep.subr.bf16.mxu0 %v831
        %1010 = vmatpush1.bf16.msra.mxu0 %v830
        %1011 = vmatprep.subr.bf16.mxu0 %v835
        %1012 = vmatpush1.bf16.msra.mxu0 %v834
        %1013 = vmatprep.subr.bf16.mxu0 %v839
        %1014 = vmatpush1.bf16.msra.mxu0 %v838
        %1015 = vmatprep.subr.bf16.mxu0 %v843
        %1016 = vmatpush1.bf16.msra.mxu0 %v842
        %1017 = vmatprep.subr.bf16.mxu0 %v847
        %1018 = vmatpush1.bf16.msra.mxu0 %v846
        %1019 = vmatprep.subr.bf16.mxu0 %v851
        %1020 = vmatpush1.bf16.msra.mxu0 %v850
        %1021 = vmatprep.subr.bf16.mxu0 %v855
        %1022 = vmatpush1.bf16.msra.mxu0 %v854
        %1023 = vmatprep.subr.bf16.mxu0 %v859
        %1024 = vmatpush1.bf16.msra.mxu0 %v858
        %1025 = vmatprep.subr.bf16.mxu0 %v863
        %1026 = vmatpush1.bf16.msra.mxu0 %v862
        %1027 = vmatprep.subr.bf16.mxu0 %v867
        %1028 = vmatpush1.bf16.msra.mxu0 %v866
        %1029 = vmatprep.subr.bf16.mxu0 %v871
        %1030 = vmatpush1.bf16.msra.mxu0 %v870
        %1031 = vmatprep.subr.bf16.mxu0 %v875
        %1032 = vmatpush1.bf16.msra.mxu0 %v874
        %1033 = vmatprep.subr.bf16.mxu0 %v879
        %1034 = vmatpush1.bf16.msra.mxu0 %v878
        %1035 = vmatprep.mubr.bf16.mxu0 %v687
        %1036 = vmatmul.mubr.bf16.gmra.mrb[0].mxu0 %v686
        %v1037 = vpop.f32.mrb[0].mxu0
        %v1038 = vadd.f32 %v997, %v1037
        %v1039 = vpop.f32.mrb[0].mxu0
        %v1040 = vadd.f32 %v999, %v1039
        %v1041 = vpop.f32.mrb[0].mxu0
        %v1042 = vpop.f32.mrb[0].mxu0
        %1043 = vdwg.mxu0
        %v1044 = vld [vmem:[%s431] sm:$0xf]
        %v1046 = vlaneseq
        %v1047 = vshrl.u32 %v1046, 7
        %v1048 = vsub.s32 0, %v1047
        %v1049 = vrot.slane %v1044, %v1048
        %v1050 = vlaneseq
        %v1051 = vshrl.u32 %v1050, 7
        %v1052 = vsub.s32 1, %v1051
        %v1053 = vrot.slane %v1044, %v1052
        %v1054 = vlaneseq
        %v1055 = vshrl.u32 %v1054, 7
        %v1056 = vsub.s32 2, %v1055
        %v1057 = vrot.slane %v1044, %v1056
        %v1058 = vlaneseq
        %v1059 = vshrl.u32 %v1058, 7
        %v1060 = vsub.s32 3, %v1059
        %v1061 = vrot.slane %v1044, %v1060
        %v1066 = vmul.f32 %v956, %v1049
        %v1067 = vmul.f32 %v958, %v1053
        %v1068 = vmul.f32 %v1038, %v1057
        %v1069 = vmul.f32 %v1040, %v1061
        %v1070 = vld [vmem:[%s440] sm:$0xf]
        %v1072 = vlaneseq
        %v1073 = vshrl.u32 %v1072, 7
        %v1074 = vsub.s32 0, %v1073
        %v1075 = vrot.slane %v1070, %v1074
        %v1076 = vlaneseq
        %v1077 = vshrl.u32 %v1076, 7
        %v1078 = vsub.s32 1, %v1077
        %v1079 = vrot.slane %v1070, %v1078
        %v1080 = vlaneseq
        %v1081 = vshrl.u32 %v1080, 7
        %v1082 = vsub.s32 2, %v1081
        %v1083 = vrot.slane %v1070, %v1082
        %v1084 = vlaneseq
        %v1085 = vshrl.u32 %v1084, 7
        %v1086 = vsub.s32 3, %v1085
        %v1087 = vrot.slane %v1070, %v1086
        %v1092 = vadd.f32 %v1066, %v1075
        %v1093 = vadd.f32 %v1067, %v1079
        %v1094 = vadd.f32 %v1068, %v1083
        %v1095 = vadd.f32 %v1069, %v1087
        %vm1096 = vcmp.gt.f32.partialorder %v1092, 0.0
        %vm1097 = vcmp.gt.f32.partialorder %v1093, 0.0
        %vm1098 = vcmp.gt.f32.partialorder %v1094, 0.0
        %vm1099 = vcmp.gt.f32.partialorder %v1095, 0.0
        %v1100 = vmul.f32 %v1092, 0.01
        %v1101 = vmul.f32 %v1093, 0.01
        %v1102 = vmul.f32 %v1094, 0.01
        %v1103 = vmul.f32 %v1095, 0.01
        %v1104 = vsel %vm1096, %v1092, %v1100
        %v1105 = vsel %vm1097, %v1093, %v1101
        %v1106 = vsel %vm1098, %v1094, %v1102
        %v1107 = vsel %vm1099, %v1095, %v1103
        %v1108 = vpack.c.bf16 %v1104, %v1104
        %v1109 = vpack.c.bf16 %v1105, %v1105
        %v1110 = vpack.c.bf16 %v1106, %v1106
        %v1111 = vpack.c.bf16 %v1107, %v1107
        %s1112 = scalar_lea.vmem %s422, 512 [#allocation7]
        %v1113 = vld [vmem:[%s1112] sm:$0xff]
        %v1114 = vld [vmem:[%s1112 + $0x8] sm:$0xff]
        %v1115 = vld [vmem:[%s1112 + $0x10] sm:$0xff]
        %v1116 = vld [vmem:[%s1112 + $0x18] sm:$0xff]
        %v1117 = vld [vmem:[%s1112 + $0x20] sm:$0xff]
        %v1118 = vld [vmem:[%s1112 + $0x28] sm:$0xff]
        %v1119 = vld [vmem:[%s1112 + $0x30] sm:$0xff]
        %v1120 = vld [vmem:[%s1112 + $0x38] sm:$0xff]
        %v1121 = vld [vmem:[%s1112 + $0x40] sm:$0xff]
        %v1122 = vld [vmem:[%s1112 + $0x48] sm:$0xff]
        %v1123 = vld [vmem:[%s1112 + $0x50] sm:$0xff]
        %v1124 = vld [vmem:[%s1112 + $0x58] sm:$0xff]
        %v1125 = vld [vmem:[%s1112 + $0x60] sm:$0xff]
        %v1126 = vld [vmem:[%s1112 + $0x68] sm:$0xff]
        %v1127 = vld [vmem:[%s1112 + $0x70] sm:$0xff]
        %v1128 = vld [vmem:[%s1112 + $0x78] sm:$0xff]
        %v1129 = vld [vmem:[%s1112 + $0x80] sm:$0xff]
        %v1130 = vld [vmem:[%s1112 + $0x88] sm:$0xff]
        %v1131 = vld [vmem:[%s1112 + $0x90] sm:$0xff]
        %v1132 = vld [vmem:[%s1112 + $0x98] sm:$0xff]
        %v1133 = vld [vmem:[%s1112 + $0xa0] sm:$0xff]
        %v1134 = vld [vmem:[%s1112 + $0xa8] sm:$0xff]
        %v1135 = vld [vmem:[%s1112 + $0xb0] sm:$0xff]
        %v1136 = vld [vmem:[%s1112 + $0xb8] sm:$0xff]
        %v1137 = vld [vmem:[%s1112 + $0xc0] sm:$0xff]
        %v1138 = vld [vmem:[%s1112 + $0xc8] sm:$0xff]
        %v1139 = vld [vmem:[%s1112 + $0xd0] sm:$0xff]
        %v1140 = vld [vmem:[%s1112 + $0xd8] sm:$0xff]
        %v1141 = vld [vmem:[%s1112 + $0xe0] sm:$0xff]
        %v1142 = vld [vmem:[%s1112 + $0xe8] sm:$0xff]
        %v1143 = vld [vmem:[%s1112 + $0xf0] sm:$0xff]
        %v1144 = vld [vmem:[%s1112 + $0xf8] sm:$0xff]
        %v1145 = vld [vmem:[%s1112 + $0x100] sm:$0xff]
        %v1146 = vld [vmem:[%s1112 + $0x108] sm:$0xff]
        %v1147 = vld [vmem:[%s1112 + $0x110] sm:$0xff]
        %v1148 = vld [vmem:[%s1112 + $0x118] sm:$0xff]
        %v1149 = vld [vmem:[%s1112 + $0x120] sm:$0xff]
        %v1150 = vld [vmem:[%s1112 + $0x128] sm:$0xff]
        %v1151 = vld [vmem:[%s1112 + $0x130] sm:$0xff]
        %v1152 = vld [vmem:[%s1112 + $0x138] sm:$0xff]
        %v1153 = vld [vmem:[%s1112 + $0x140] sm:$0xff]
        %v1154 = vld [vmem:[%s1112 + $0x148] sm:$0xff]
        %v1155 = vld [vmem:[%s1112 + $0x150] sm:$0xff]
        %v1156 = vld [vmem:[%s1112 + $0x158] sm:$0xff]
        %v1157 = vld [vmem:[%s1112 + $0x160] sm:$0xff]
        %v1158 = vld [vmem:[%s1112 + $0x168] sm:$0xff]
        %v1159 = vld [vmem:[%s1112 + $0x170] sm:$0xff]
        %v1160 = vld [vmem:[%s1112 + $0x178] sm:$0xff]
        %v1161 = vld [vmem:[%s1112 + $0x180] sm:$0xff]
        %v1162 = vld [vmem:[%s1112 + $0x188] sm:$0xff]
        %v1163 = vld [vmem:[%s1112 + $0x190] sm:$0xff]
        %v1164 = vld [vmem:[%s1112 + $0x198] sm:$0xff]
        %v1165 = vld [vmem:[%s1112 + $0x1a0] sm:$0xff]
        %v1166 = vld [vmem:[%s1112 + $0x1a8] sm:$0xff]
        %v1167 = vld [vmem:[%s1112 + $0x1b0] sm:$0xff]
        %v1168 = vld [vmem:[%s1112 + $0x1b8] sm:$0xff]
        %v1169 = vld [vmem:[%s1112 + $0x1c0] sm:$0xff]
        %v1170 = vld [vmem:[%s1112 + $0x1c8] sm:$0xff]
        %v1171 = vld [vmem:[%s1112 + $0x1d0] sm:$0xff]
        %v1172 = vld [vmem:[%s1112 + $0x1d8] sm:$0xff]
        %v1173 = vld [vmem:[%s1112 + $0x1e0] sm:$0xff]
        %v1174 = vld [vmem:[%s1112 + $0x1e8] sm:$0xff]
        %v1175 = vld [vmem:[%s1112 + $0x1f0] sm:$0xff]
        %v1176 = vld [vmem:[%s1112 + $0x1f8] sm:$0xff]
        %v1177 = vunpack.c.l.s8.bf16 %v1113
        %v1178 = vunpack.c.l.s8.bf16 %v1114
        %v1179 = vunpack.c.l.s8.bf16 %v1115
        %v1180 = vunpack.c.l.s8.bf16 %v1116
        %v1181 = vunpack.c.h.s8.bf16 %v1113
        %v1182 = vunpack.c.h.s8.bf16 %v1114
        %v1183 = vunpack.c.h.s8.bf16 %v1115
        %v1184 = vunpack.c.h.s8.bf16 %v1116
        %v1185 = vunpack.c.l.s8.bf16 %v1117
        %v1186 = vunpack.c.l.s8.bf16 %v1118
        %v1187 = vunpack.c.l.s8.bf16 %v1119
        %v1188 = vunpack.c.l.s8.bf16 %v1120
        %v1189 = vunpack.c.h.s8.bf16 %v1117
        %v1190 = vunpack.c.h.s8.bf16 %v1118
        %v1191 = vunpack.c.h.s8.bf16 %v1119
        %v1192 = vunpack.c.h.s8.bf16 %v1120
        %v1193 = vunpack.c.l.s8.bf16 %v1121
        %v1194 = vunpack.c.l.s8.bf16 %v1122
        %v1195 = vunpack.c.l.s8.bf16 %v1123
        %v1196 = vunpack.c.l.s8.bf16 %v1124
        %v1197 = vunpack.c.h.s8.bf16 %v1121
        %v1198 = vunpack.c.h.s8.bf16 %v1122
        %v1199 = vunpack.c.h.s8.bf16 %v1123
        %v1200 = vunpack.c.h.s8.bf16 %v1124
        %v1201 = vunpack.c.l.s8.bf16 %v1125
        %v1202 = vunpack.c.l.s8.bf16 %v1126
        %v1203 = vunpack.c.l.s8.bf16 %v1127
        %v1204 = vunpack.c.l.s8.bf16 %v1128
        %v1205 = vunpack.c.h.s8.bf16 %v1125
        %v1206 = vunpack.c.h.s8.bf16 %v1126
        %v1207 = vunpack.c.h.s8.bf16 %v1127
        %v1208 = vunpack.c.h.s8.bf16 %v1128
        %v1209 = vunpack.c.l.s8.bf16 %v1129
        %v1210 = vunpack.c.l.s8.bf16 %v1130
        %v1211 = vunpack.c.l.s8.bf16 %v1131
        %v1212 = vunpack.c.l.s8.bf16 %v1132
        %v1213 = vunpack.c.h.s8.bf16 %v1129
        %v1214 = vunpack.c.h.s8.bf16 %v1130
        %v1215 = vunpack.c.h.s8.bf16 %v1131
        %v1216 = vunpack.c.h.s8.bf16 %v1132
        %v1217 = vunpack.c.l.s8.bf16 %v1133
        %v1218 = vunpack.c.l.s8.bf16 %v1134
        %v1219 = vunpack.c.l.s8.bf16 %v1135
        %v1220 = vunpack.c.l.s8.bf16 %v1136
        %v1221 = vunpack.c.h.s8.bf16 %v1133
        %v1222 = vunpack.c.h.s8.bf16 %v1134
        %v1223 = vunpack.c.h.s8.bf16 %v1135
        %v1224 = vunpack.c.h.s8.bf16 %v1136
        %v1225 = vunpack.c.l.s8.bf16 %v1137
        %v1226 = vunpack.c.l.s8.bf16 %v1138
        %v1227 = vunpack.c.l.s8.bf16 %v1139
        %v1228 = vunpack.c.l.s8.bf16 %v1140
        %v1229 = vunpack.c.h.s8.bf16 %v1137
        %v1230 = vunpack.c.h.s8.bf16 %v1138
        %v1231 = vunpack.c.h.s8.bf16 %v1139
        %v1232 = vunpack.c.h.s8.bf16 %v1140
        %v1233 = vunpack.c.l.s8.bf16 %v1141
        %v1234 = vunpack.c.l.s8.bf16 %v1142
        %v1235 = vunpack.c.l.s8.bf16 %v1143
        %v1236 = vunpack.c.l.s8.bf16 %v1144
        %v1237 = vunpack.c.h.s8.bf16 %v1141
        %v1238 = vunpack.c.h.s8.bf16 %v1142
        %v1239 = vunpack.c.h.s8.bf16 %v1143
        %v1240 = vunpack.c.h.s8.bf16 %v1144
        %v1241 = vunpack.c.l.s8.bf16 %v1145
        %v1242 = vunpack.c.l.s8.bf16 %v1146
        %v1243 = vunpack.c.l.s8.bf16 %v1147
        %v1244 = vunpack.c.l.s8.bf16 %v1148
        %v1245 = vunpack.c.h.s8.bf16 %v1145
        %v1246 = vunpack.c.h.s8.bf16 %v1146
        %v1247 = vunpack.c.h.s8.bf16 %v1147
        %v1248 = vunpack.c.h.s8.bf16 %v1148
        %v1249 = vunpack.c.l.s8.bf16 %v1149
        %v1250 = vunpack.c.l.s8.bf16 %v1150
        %v1251 = vunpack.c.l.s8.bf16 %v1151
        %v1252 = vunpack.c.l.s8.bf16 %v1152
        %v1253 = vunpack.c.h.s8.bf16 %v1149
        %v1254 = vunpack.c.h.s8.bf16 %v1150
        %v1255 = vunpack.c.h.s8.bf16 %v1151
        %v1256 = vunpack.c.h.s8.bf16 %v1152
        %v1257 = vunpack.c.l.s8.bf16 %v1153
        %v1258 = vunpack.c.l.s8.bf16 %v1154
        %v1259 = vunpack.c.l.s8.bf16 %v1155
        %v1260 = vunpack.c.l.s8.bf16 %v1156
        %v1261 = vunpack.c.h.s8.bf16 %v1153
        %v1262 = vunpack.c.h.s8.bf16 %v1154
        %v1263 = vunpack.c.h.s8.bf16 %v1155
        %v1264 = vunpack.c.h.s8.bf16 %v1156
        %v1265 = vunpack.c.l.s8.bf16 %v1157
        %v1266 = vunpack.c.l.s8.bf16 %v1158
        %v1267 = vunpack.c.l.s8.bf16 %v1159
        %v1268 = vunpack.c.l.s8.bf16 %v1160
        %v1269 = vunpack.c.h.s8.bf16 %v1157
        %v1270 = vunpack.c.h.s8.bf16 %v1158
        %v1271 = vunpack.c.h.s8.bf16 %v1159
        %v1272 = vunpack.c.h.s8.bf16 %v1160
        %v1273 = vunpack.c.l.s8.bf16 %v1161
        %v1274 = vunpack.c.l.s8.bf16 %v1162
        %v1275 = vunpack.c.l.s8.bf16 %v1163
        %v1276 = vunpack.c.l.s8.bf16 %v1164
        %v1277 = vunpack.c.h.s8.bf16 %v1161
        %v1278 = vunpack.c.h.s8.bf16 %v1162
        %v1279 = vunpack.c.h.s8.bf16 %v1163
        %v1280 = vunpack.c.h.s8.bf16 %v1164
        %v1281 = vunpack.c.l.s8.bf16 %v1165
        %v1282 = vunpack.c.l.s8.bf16 %v1166
        %v1283 = vunpack.c.l.s8.bf16 %v1167
        %v1284 = vunpack.c.l.s8.bf16 %v1168
        %v1285 = vunpack.c.h.s8.bf16 %v1165
        %v1286 = vunpack.c.h.s8.bf16 %v1166
        %v1287 = vunpack.c.h.s8.bf16 %v1167
        %v1288 = vunpack.c.h.s8.bf16 %v1168
        %v1289 = vunpack.c.l.s8.bf16 %v1169
        %v1290 = vunpack.c.l.s8.bf16 %v1170
        %v1291 = vunpack.c.l.s8.bf16 %v1171
        %v1292 = vunpack.c.l.s8.bf16 %v1172
        %v1293 = vunpack.c.h.s8.bf16 %v1169
        %v1294 = vunpack.c.h.s8.bf16 %v1170
        %v1295 = vunpack.c.h.s8.bf16 %v1171
        %v1296 = vunpack.c.h.s8.bf16 %v1172
        %v1297 = vunpack.c.l.s8.bf16 %v1173
        %v1298 = vunpack.c.l.s8.bf16 %v1174
        %v1299 = vunpack.c.l.s8.bf16 %v1175
        %v1300 = vunpack.c.l.s8.bf16 %v1176
        %v1301 = vunpack.c.h.s8.bf16 %v1173
        %v1302 = vunpack.c.h.s8.bf16 %v1174
        %v1303 = vunpack.c.h.s8.bf16 %v1175
        %v1304 = vunpack.c.h.s8.bf16 %v1176
        %1305 = vmatprep.subr.bf16.mxu0 %v1178
        %1306 = vmatpush1.bf16.msra.mxu0 %v1177
        %1307 = vmatprep.subr.bf16.mxu0 %v1182
        %1308 = vmatpush1.bf16.msra.mxu0 %v1181
        %1309 = vmatprep.subr.bf16.mxu0 %v1186
        %1310 = vmatpush1.bf16.msra.mxu0 %v1185
        %1311 = vmatprep.subr.bf16.mxu0 %v1190
        %1312 = vmatpush1.bf16.msra.mxu0 %v1189
        %1313 = vmatprep.subr.bf16.mxu0 %v1194
        %1314 = vmatpush1.bf16.msra.mxu0 %v1193
        %1315 = vmatprep.subr.bf16.mxu0 %v1198
        %1316 = vmatpush1.bf16.msra.mxu0 %v1197
        %1317 = vmatprep.subr.bf16.mxu0 %v1202
        %1318 = vmatpush1.bf16.msra.mxu0 %v1201
        %1319 = vmatprep.subr.bf16.mxu0 %v1206
        %1320 = vmatpush1.bf16.msra.mxu0 %v1205
        %1321 = vmatprep.subr.bf16.mxu0 %v1210
        %1322 = vmatpush1.bf16.msra.mxu0 %v1209
        %1323 = vmatprep.subr.bf16.mxu0 %v1214
        %1324 = vmatpush1.bf16.msra.mxu0 %v1213
        %1325 = vmatprep.subr.bf16.mxu0 %v1218
        %1326 = vmatpush1.bf16.msra.mxu0 %v1217
        %1327 = vmatprep.subr.bf16.mxu0 %v1222
        %1328 = vmatpush1.bf16.msra.mxu0 %v1221
        %1329 = vmatprep.subr.bf16.mxu0 %v1226
        %1330 = vmatpush1.bf16.msra.mxu0 %v1225
        %1331 = vmatprep.subr.bf16.mxu0 %v1230
        %1332 = vmatpush1.bf16.msra.mxu0 %v1229
        %1333 = vmatprep.subr.bf16.mxu0 %v1234
        %1334 = vmatpush1.bf16.msra.mxu0 %v1233
        %1335 = vmatprep.subr.bf16.mxu0 %v1238
        %1336 = vmatpush1.bf16.msra.mxu0 %v1237
        %1337 = vmatprep.mubr.bf16.mxu0 %v1109
        %1338 = vmatmul.mubr.bf16.gmra.mrb[0].mxu0 %v1108
        %v1339 = vpop.f32.mrb[0].mxu0
        %v1340 = vadd.f32 0.0, %v1339
        %v1341 = vpop.f32.mrb[0].mxu0
        %v1342 = vadd.f32 0.0, %v1341
        %v1343 = vpop.f32.mrb[0].mxu0
        %v1344 = vpop.f32.mrb[0].mxu0
        %1345 = vdwg.mxu0
        %1346 = vmatprep.subr.bf16.mxu0 %v1242
        %1347 = vmatpush1.bf16.msra.mxu0 %v1241
        %1348 = vmatprep.subr.bf16.mxu0 %v1246
        %1349 = vmatpush1.bf16.msra.mxu0 %v1245
        %1350 = vmatprep.subr.bf16.mxu0 %v1250
        %1351 = vmatpush1.bf16.msra.mxu0 %v1249
        %1352 = vmatprep.subr.bf16.mxu0 %v1254
        %1353 = vmatpush1.bf16.msra.mxu0 %v1253
        %1354 = vmatprep.subr.bf16.mxu0 %v1258
        %1355 = vmatpush1.bf16.msra.mxu0 %v1257
        %1356 = vmatprep.subr.bf16.mxu0 %v1262
        %1357 = vmatpush1.bf16.msra.mxu0 %v1261
        %1358 = vmatprep.subr.bf16.mxu0 %v1266
        %1359 = vmatpush1.bf16.msra.mxu0 %v1265
        %1360 = vmatprep.subr.bf16.mxu0 %v1270
        %1361 = vmatpush1.bf16.msra.mxu0 %v1269
        %1362 = vmatprep.subr.bf16.mxu0 %v1274
        %1363 = vmatpush1.bf16.msra.mxu0 %v1273
        %1364 = vmatprep.subr.bf16.mxu0 %v1278
        %1365 = vmatpush1.bf16.msra.mxu0 %v1277
        %1366 = vmatprep.subr.bf16.mxu0 %v1282
        %1367 = vmatpush1.bf16.msra.mxu0 %v1281
        %1368 = vmatprep.subr.bf16.mxu0 %v1286
        %1369 = vmatpush1.bf16.msra.mxu0 %v1285
        %1370 = vmatprep.subr.bf16.mxu0 %v1290
        %1371 = vmatpush1.bf16.msra.mxu0 %v1289
        %1372 = vmatprep.subr.bf16.mxu0 %v1294
        %1373 = vmatpush1.bf16.msra.mxu0 %v1293
        %1374 = vmatprep.subr.bf16.mxu0 %v1298
        %1375 = vmatpush1.bf16.msra.mxu0 %v1297
        %1376 = vmatprep.subr.bf16.mxu0 %v1302
        %1377 = vmatpush1.bf16.msra.mxu0 %v1301
        %1378 = vmatprep.mubr.bf16.mxu0 %v1111
        %1379 = vmatmul.mubr.bf16.gmra.mrb[0].mxu0 %v1110
        %v1380 = vpop.f32.mrb[0].mxu0
        %v1381 = vadd.f32 %v1340, %v1380
        %v1382 = vpop.f32.mrb[0].mxu0
        %v1383 = vadd.f32 %v1342, %v1382
        %v1384 = vpop.f32.mrb[0].mxu0
        %v1385 = vpop.f32.mrb[0].mxu0
        %1386 = vdwg.mxu0
        %1387 = vmatprep.subr.bf16.mxu0 %v1180
        %1388 = vmatpush1.bf16.msra.mxu0 %v1179
        %1389 = vmatprep.subr.bf16.mxu0 %v1184
        %1390 = vmatpush1.bf16.msra.mxu0 %v1183
        %1391 = vmatprep.subr.bf16.mxu0 %v1188
        %1392 = vmatpush1.bf16.msra.mxu0 %v1187
        %1393 = vmatprep.subr.bf16.mxu0 %v1192
        %1394 = vmatpush1.bf16.msra.mxu0 %v1191
        %1395 = vmatprep.subr.bf16.mxu0 %v1196
        %1396 = vmatpush1.bf16.msra.mxu0 %v1195
        %1397 = vmatprep.subr.bf16.mxu0 %v1200
        %1398 = vmatpush1.bf16.msra.mxu0 %v1199
        %1399 = vmatprep.subr.bf16.mxu0 %v1204
        %1400 = vmatpush1.bf16.msra.mxu0 %v1203
        %1401 = vmatprep.subr.bf16.mxu0 %v1208
        %1402 = vmatpush1.bf16.msra.mxu0 %v1207
        %1403 = vmatprep.subr.bf16.mxu0 %v1212
        %1404 = vmatpush1.bf16.msra.mxu0 %v1211
        %1405 = vmatprep.subr.bf16.mxu0 %v1216
        %1406 = vmatpush1.bf16.msra.mxu0 %v1215
        %1407 = vmatprep.subr.bf16.mxu0 %v1220
        %1408 = vmatpush1.bf16.msra.mxu0 %v1219
        %1409 = vmatprep.subr.bf16.mxu0 %v1224
        %1410 = vmatpush1.bf16.msra.mxu0 %v1223
        %1411 = vmatprep.subr.bf16.mxu0 %v1228
        %1412 = vmatpush1.bf16.msra.mxu0 %v1227
        %1413 = vmatprep.subr.bf16.mxu0 %v1232
        %1414 = vmatpush1.bf16.msra.mxu0 %v1231
        %1415 = vmatprep.subr.bf16.mxu0 %v1236
        %1416 = vmatpush1.bf16.msra.mxu0 %v1235
        %1417 = vmatprep.subr.bf16.mxu0 %v1240
        %1418 = vmatpush1.bf16.msra.mxu0 %v1239
        %1419 = vmatprep.mubr.bf16.mxu0 %v1109
        %1420 = vmatmul.mubr.bf16.gmra.mrb[0].mxu0 %v1108
        %v1421 = vpop.f32.mrb[0].mxu0
        %v1422 = vadd.f32 0.0, %v1421
        %v1423 = vpop.f32.mrb[0].mxu0
        %v1424 = vadd.f32 0.0, %v1423
        %v1425 = vpop.f32.mrb[0].mxu0
        %v1426 = vpop.f32.mrb[0].mxu0
        %1427 = vdwg.mxu0
        %1428 = vmatprep.subr.bf16.mxu0 %v1244
        %1429 = vmatpush1.bf16.msra.mxu0 %v1243
        %1430 = vmatprep.subr.bf16.mxu0 %v1248
        %1431 = vmatpush1.bf16.msra.mxu0 %v1247
        %1432 = vmatprep.subr.bf16.mxu0 %v1252
        %1433 = vmatpush1.bf16.msra.mxu0 %v1251
        %1434 = vmatprep.subr.bf16.mxu0 %v1256
        %1435 = vmatpush1.bf16.msra.mxu0 %v1255
        %1436 = vmatprep.subr.bf16.mxu0 %v1260
        %1437 = vmatpush1.bf16.msra.mxu0 %v1259
        %1438 = vmatprep.subr.bf16.mxu0 %v1264
        %1439 = vmatpush1.bf16.msra.mxu0 %v1263
        %1440 = vmatprep.subr.bf16.mxu0 %v1268
        %1441 = vmatpush1.bf16.msra.mxu0 %v1267
        %1442 = vmatprep.subr.bf16.mxu0 %v1272
        %1443 = vmatpush1.bf16.msra.mxu0 %v1271
        %1444 = vmatprep.subr.bf16.mxu0 %v1276
        %1445 = vmatpush1.bf16.msra.mxu0 %v1275
        %1446 = vmatprep.subr.bf16.mxu0 %v1280
        %1447 = vmatpush1.bf16.msra.mxu0 %v1279
        %1448 = vmatprep.subr.bf16.mxu0 %v1284
        %1449 = vmatpush1.bf16.msra.mxu0 %v1283
        %1450 = vmatprep.subr.bf16.mxu0 %v1288
        %1451 = vmatpush1.bf16.msra.mxu0 %v1287
        %1452 = vmatprep.subr.bf16.mxu0 %v1292
        %1453 = vmatpush1.bf16.msra.mxu0 %v1291
        %1454 = vmatprep.subr.bf16.mxu0 %v1296
        %1455 = vmatpush1.bf16.msra.mxu0 %v1295
        %1456 = vmatprep.subr.bf16.mxu0 %v1300
        %1457 = vmatpush1.bf16.msra.mxu0 %v1299
        %1458 = vmatprep.subr.bf16.mxu0 %v1304
        %1459 = vmatpush1.bf16.msra.mxu0 %v1303
        %1460 = vmatprep.mubr.bf16.mxu0 %v1111
        %1461 = vmatmul.mubr.bf16.gmra.mrb[0].mxu0 %v1110
        %v1462 = vpop.f32.mrb[0].mxu0
        %v1463 = vadd.f32 %v1422, %v1462
        %v1464 = vpop.f32.mrb[0].mxu0
        %v1465 = vadd.f32 %v1424, %v1464
        %v1466 = vpop.f32.mrb[0].mxu0
        %v1467 = vpop.f32.mrb[0].mxu0
        %1468 = vdwg.mxu0
        %s1469 = scalar_lea.vmem %s431, 4 [#allocation9]
        %v1470 = vld [vmem:[%s1469] sm:$0xf]
        %v1472 = vlaneseq
        %v1473 = vshrl.u32 %v1472, 7
        %v1474 = vsub.s32 0, %v1473
        %v1475 = vrot.slane %v1470, %v1474
        %v1476 = vlaneseq
        %v1477 = vshrl.u32 %v1476, 7
        %v1478 = vsub.s32 1, %v1477
        %v1479 = vrot.slane %v1470, %v1478
        %v1480 = vlaneseq
        %v1481 = vshrl.u32 %v1480, 7
        %v1482 = vsub.s32 2, %v1481
        %v1483 = vrot.slane %v1470, %v1482
        %v1484 = vlaneseq
        %v1485 = vshrl.u32 %v1484, 7
        %v1486 = vsub.s32 3, %v1485
        %v1487 = vrot.slane %v1470, %v1486
        %v1492 = vmul.f32 %v1381, %v1475
        %v1493 = vmul.f32 %v1383, %v1479
        %v1494 = vmul.f32 %v1463, %v1483
        %v1495 = vmul.f32 %v1465, %v1487
        %s1496 = scalar_lea.vmem %s440, 4 [#allocation10]
        %v1497 = vld [vmem:[%s1496] sm:$0xf]
        %v1499 = vlaneseq
        %v1500 = vshrl.u32 %v1499, 7
        %v1501 = vsub.s32 0, %v1500
        %v1502 = vrot.slane %v1497, %v1501
        %v1503 = vlaneseq
        %v1504 = vshrl.u32 %v1503, 7
        %v1505 = vsub.s32 1, %v1504
        %v1506 = vrot.slane %v1497, %v1505
        %v1507 = vlaneseq
        %v1508 = vshrl.u32 %v1507, 7
        %v1509 = vsub.s32 2, %v1508
        %v1510 = vrot.slane %v1497, %v1509
        %v1511 = vlaneseq
        %v1512 = vshrl.u32 %v1511, 7
        %v1513 = vsub.s32 3, %v1512
        %v1514 = vrot.slane %v1497, %v1513
        %v1519 = vadd.f32 %v1492, %v1502
        %v1520 = vadd.f32 %v1493, %v1506
        %v1521 = vadd.f32 %v1494, %v1510
        %v1522 = vadd.f32 %v1495, %v1514
        %vm1523 = vcmp.gt.f32.partialorder %v1519, 0.0
        %vm1524 = vcmp.gt.f32.partialorder %v1520, 0.0
        %vm1525 = vcmp.gt.f32.partialorder %v1521, 0.0
        %vm1526 = vcmp.gt.f32.partialorder %v1522, 0.0
        %v1527 = vmul.f32 %v1519, 0.01
        %v1528 = vmul.f32 %v1520, 0.01
        %v1529 = vmul.f32 %v1521, 0.01
        %v1530 = vmul.f32 %v1522, 0.01
        %v1531 = vsel %vm1523, %v1519, %v1527
        %v1532 = vsel %vm1524, %v1520, %v1528
        %v1533 = vsel %vm1525, %v1521, %v1529
        %v1534 = vsel %vm1526, %v1522, %v1530
        %v1535 = vpack.c.bf16 %v1531, %v1531
        %v1536 = vpack.c.bf16 %v1532, %v1532
        %v1537 = vpack.c.bf16 %v1533, %v1533
        %v1538 = vpack.c.bf16 %v1534, %v1534
        %s1539 = scalar_lea.vmem %s422, 1024 [#allocation7]
        %v1540 = vld [vmem:[%s1539] sm:$0xff]
        %v1541 = vld [vmem:[%s1539 + $0x8] sm:$0xff]
        %v1542 = vld [vmem:[%s1539 + $0x10] sm:$0xff]
        %v1543 = vld [vmem:[%s1539 + $0x18] sm:$0xff]
        %v1544 = vld [vmem:[%s1539 + $0x20] sm:$0xff]
        %v1545 = vld [vmem:[%s1539 + $0x28] sm:$0xff]
        %v1546 = vld [vmem:[%s1539 + $0x30] sm:$0xff]
        %v1547 = vld [vmem:[%s1539 + $0x38] sm:$0xff]
        %v1548 = vld [vmem:[%s1539 + $0x40] sm:$0xff]
        %v1549 = vld [vmem:[%s1539 + $0x48] sm:$0xff]
        %v1550 = vld [vmem:[%s1539 + $0x50] sm:$0xff]
        %v1551 = vld [vmem:[%s1539 + $0x58] sm:$0xff]
        %v1552 = vld [vmem:[%s1539 + $0x60] sm:$0xff]
        %v1553 = vld [vmem:[%s1539 + $0x68] sm:$0xff]
        %v1554 = vld [vmem:[%s1539 + $0x70] sm:$0xff]
        %v1555 = vld [vmem:[%s1539 + $0x78] sm:$0xff]
        %v1556 = vld [vmem:[%s1539 + $0x80] sm:$0xff]
        %v1557 = vld [vmem:[%s1539 + $0x88] sm:$0xff]
        %v1558 = vld [vmem:[%s1539 + $0x90] sm:$0xff]
        %v1559 = vld [vmem:[%s1539 + $0x98] sm:$0xff]
        %v1560 = vld [vmem:[%s1539 + $0xa0] sm:$0xff]
        %v1561 = vld [vmem:[%s1539 + $0xa8] sm:$0xff]
        %v1562 = vld [vmem:[%s1539 + $0xb0] sm:$0xff]
        %v1563 = vld [vmem:[%s1539 + $0xb8] sm:$0xff]
        %v1564 = vld [vmem:[%s1539 + $0xc0] sm:$0xff]
        %v1565 = vld [vmem:[%s1539 + $0xc8] sm:$0xff]
        %v1566 = vld [vmem:[%s1539 + $0xd0] sm:$0xff]
        %v1567 = vld [vmem:[%s1539 + $0xd8] sm:$0xff]
        %v1568 = vld [vmem:[%s1539 + $0xe0] sm:$0xff]
        %v1569 = vld [vmem:[%s1539 + $0xe8] sm:$0xff]
        %v1570 = vld [vmem:[%s1539 + $0xf0] sm:$0xff]
        %v1571 = vld [vmem:[%s1539 + $0xf8] sm:$0xff]
        %v1572 = vld [vmem:[%s1539 + $0x100] sm:$0xff]
        %v1573 = vld [vmem:[%s1539 + $0x108] sm:$0xff]
        %v1574 = vld [vmem:[%s1539 + $0x110] sm:$0xff]
        %v1575 = vld [vmem:[%s1539 + $0x118] sm:$0xff]
        %v1576 = vld [vmem:[%s1539 + $0x120] sm:$0xff]
        %v1577 = vld [vmem:[%s1539 + $0x128] sm:$0xff]
        %v1578 = vld [vmem:[%s1539 + $0x130] sm:$0xff]
        %v1579 = vld [vmem:[%s1539 + $0x138] sm:$0xff]
        %v1580 = vld [vmem:[%s1539 + $0x140] sm:$0xff]
        %v1581 = vld [vmem:[%s1539 + $0x148] sm:$0xff]
        %v1582 = vld [vmem:[%s1539 + $0x150] sm:$0xff]
        %v1583 = vld [vmem:[%s1539 + $0x158] sm:$0xff]
        %v1584 = vld [vmem:[%s1539 + $0x160] sm:$0xff]
        %v1585 = vld [vmem:[%s1539 + $0x168] sm:$0xff]
        %v1586 = vld [vmem:[%s1539 + $0x170] sm:$0xff]
        %v1587 = vld [vmem:[%s1539 + $0x178] sm:$0xff]
        %v1588 = vld [vmem:[%s1539 + $0x180] sm:$0xff]
        %v1589 = vld [vmem:[%s1539 + $0x188] sm:$0xff]
        %v1590 = vld [vmem:[%s1539 + $0x190] sm:$0xff]
        %v1591 = vld [vmem:[%s1539 + $0x198] sm:$0xff]
        %v1592 = vld [vmem:[%s1539 + $0x1a0] sm:$0xff]
        %v1593 = vld [vmem:[%s1539 + $0x1a8] sm:$0xff]
        %v1594 = vld [vmem:[%s1539 + $0x1b0] sm:$0xff]
        %v1595 = vld [vmem:[%s1539 + $0x1b8] sm:$0xff]
        %v1596 = vld [vmem:[%s1539 + $0x1c0] sm:$0xff]
        %v1597 = vld [vmem:[%s1539 + $0x1c8] sm:$0xff]
        %v1598 = vld [vmem:[%s1539 + $0x1d0] sm:$0xff]
        %v1599 = vld [vmem:[%s1539 + $0x1d8] sm:$0xff]
        %v1600 = vld [vmem:[%s1539 + $0x1e0] sm:$0xff]
        %v1601 = vld [vmem:[%s1539 + $0x1e8] sm:$0xff]
        %v1602 = vld [vmem:[%s1539 + $0x1f0] sm:$0xff]
        %v1603 = vld [vmem:[%s1539 + $0x1f8] sm:$0xff]
        %v1604 = vunpack.c.l.s8.bf16 %v1540
        %v1605 = vunpack.c.l.s8.bf16 %v1541
        %v1606 = vunpack.c.l.s8.bf16 %v1542
        %v1607 = vunpack.c.l.s8.bf16 %v1543
        %v1608 = vunpack.c.h.s8.bf16 %v1540
        %v1609 = vunpack.c.h.s8.bf16 %v1541
        %v1610 = vunpack.c.h.s8.bf16 %v1542
        %v1611 = vunpack.c.h.s8.bf16 %v1543
        %v1612 = vunpack.c.l.s8.bf16 %v1544
        %v1613 = vunpack.c.l.s8.bf16 %v1545
        %v1614 = vunpack.c.l.s8.bf16 %v1546
        %v1615 = vunpack.c.l.s8.bf16 %v1547
        %v1616 = vunpack.c.h.s8.bf16 %v1544
        %v1617 = vunpack.c.h.s8.bf16 %v1545
        %v1618 = vunpack.c.h.s8.bf16 %v1546
        %v1619 = vunpack.c.h.s8.bf16 %v1547
        %v1620 = vunpack.c.l.s8.bf16 %v1548
        %v1621 = vunpack.c.l.s8.bf16 %v1549
        %v1622 = vunpack.c.l.s8.bf16 %v1550
        %v1623 = vunpack.c.l.s8.bf16 %v1551
        %v1624 = vunpack.c.h.s8.bf16 %v1548
        %v1625 = vunpack.c.h.s8.bf16 %v1549
        %v1626 = vunpack.c.h.s8.bf16 %v1550
        %v1627 = vunpack.c.h.s8.bf16 %v1551
        %v1628 = vunpack.c.l.s8.bf16 %v1552
        %v1629 = vunpack.c.l.s8.bf16 %v1553
        %v1630 = vunpack.c.l.s8.bf16 %v1554
        %v1631 = vunpack.c.l.s8.bf16 %v1555
        %v1632 = vunpack.c.h.s8.bf16 %v1552
        %v1633 = vunpack.c.h.s8.bf16 %v1553
        %v1634 = vunpack.c.h.s8.bf16 %v1554
        %v1635 = vunpack.c.h.s8.bf16 %v1555
        %v1636 = vunpack.c.l.s8.bf16 %v1556
        %v1637 = vunpack.c.l.s8.bf16 %v1557
        %v1638 = vunpack.c.l.s8.bf16 %v1558
        %v1639 = vunpack.c.l.s8.bf16 %v1559
        %v1640 = vunpack.c.h.s8.bf16 %v1556
        %v1641 = vunpack.c.h.s8.bf16 %v1557
        %v1642 = vunpack.c.h.s8.bf16 %v1558
        %v1643 = vunpack.c.h.s8.bf16 %v1559
        %v1644 = vunpack.c.l.s8.bf16 %v1560
        %v1645 = vunpack.c.l.s8.bf16 %v1561
        %v1646 = vunpack.c.l.s8.bf16 %v1562
        %v1647 = vunpack.c.l.s8.bf16 %v1563
        %v1648 = vunpack.c.h.s8.bf16 %v1560
        %v1649 = vunpack.c.h.s8.bf16 %v1561
        %v1650 = vunpack.c.h.s8.bf16 %v1562
        %v1651 = vunpack.c.h.s8.bf16 %v1563
        %v1652 = vunpack.c.l.s8.bf16 %v1564
        %v1653 = vunpack.c.l.s8.bf16 %v1565
        %v1654 = vunpack.c.l.s8.bf16 %v1566
        %v1655 = vunpack.c.l.s8.bf16 %v1567
        %v1656 = vunpack.c.h.s8.bf16 %v1564
        %v1657 = vunpack.c.h.s8.bf16 %v1565
        %v1658 = vunpack.c.h.s8.bf16 %v1566
        %v1659 = vunpack.c.h.s8.bf16 %v1567
        %v1660 = vunpack.c.l.s8.bf16 %v1568
        %v1661 = vunpack.c.l.s8.bf16 %v1569
        %v1662 = vunpack.c.l.s8.bf16 %v1570
        %v1663 = vunpack.c.l.s8.bf16 %v1571
        %v1664 = vunpack.c.h.s8.bf16 %v1568
        %v1665 = vunpack.c.h.s8.bf16 %v1569
        %v1666 = vunpack.c.h.s8.bf16 %v1570
        %v1667 = vunpack.c.h.s8.bf16 %v1571
        %v1668 = vunpack.c.l.s8.bf16 %v1572
        %v1669 = vunpack.c.l.s8.bf16 %v1573
        %v1670 = vunpack.c.l.s8.bf16 %v1574
        %v1671 = vunpack.c.l.s8.bf16 %v1575
        %v1672 = vunpack.c.h.s8.bf16 %v1572
        %v1673 = vunpack.c.h.s8.bf16 %v1573
        %v1674 = vunpack.c.h.s8.bf16 %v1574
        %v1675 = vunpack.c.h.s8.bf16 %v1575
        %v1676 = vunpack.c.l.s8.bf16 %v1576
        %v1677 = vunpack.c.l.s8.bf16 %v1577
        %v1678 = vunpack.c.l.s8.bf16 %v1578
        %v1679 = vunpack.c.l.s8.bf16 %v1579
        %v1680 = vunpack.c.h.s8.bf16 %v1576
        %v1681 = vunpack.c.h.s8.bf16 %v1577
        %v1682 = vunpack.c.h.s8.bf16 %v1578
        %v1683 = vunpack.c.h.s8.bf16 %v1579
        %v1684 = vunpack.c.l.s8.bf16 %v1580
        %v1685 = vunpack.c.l.s8.bf16 %v1581
        %v1686 = vunpack.c.l.s8.bf16 %v1582
        %v1687 = vunpack.c.l.s8.bf16 %v1583
        %v1688 = vunpack.c.h.s8.bf16 %v1580
        %v1689 = vunpack.c.h.s8.bf16 %v1581
        %v1690 = vunpack.c.h.s8.bf16 %v1582
        %v1691 = vunpack.c.h.s8.bf16 %v1583
        %v1692 = vunpack.c.l.s8.bf16 %v1584
        %v1693 = vunpack.c.l.s8.bf16 %v1585
        %v1694 = vunpack.c.l.s8.bf16 %v1586
        %v1695 = vunpack.c.l.s8.bf16 %v1587
        %v1696 = vunpack.c.h.s8.bf16 %v1584
        %v1697 = vunpack.c.h.s8.bf16 %v1585
        %v1698 = vunpack.c.h.s8.bf16 %v1586
        %v1699 = vunpack.c.h.s8.bf16 %v1587
        %v1700 = vunpack.c.l.s8.bf16 %v1588
        %v1701 = vunpack.c.l.s8.bf16 %v1589
        %v1702 = vunpack.c.l.s8.bf16 %v1590
        %v1703 = vunpack.c.l.s8.bf16 %v1591
        %v1704 = vunpack.c.h.s8.bf16 %v1588
        %v1705 = vunpack.c.h.s8.bf16 %v1589
        %v1706 = vunpack.c.h.s8.bf16 %v1590
        %v1707 = vunpack.c.h.s8.bf16 %v1591
        %v1708 = vunpack.c.l.s8.bf16 %v1592
        %v1709 = vunpack.c.l.s8.bf16 %v1593
        %v1710 = vunpack.c.l.s8.bf16 %v1594
        %v1711 = vunpack.c.l.s8.bf16 %v1595
        %v1712 = vunpack.c.h.s8.bf16 %v1592
        %v1713 = vunpack.c.h.s8.bf16 %v1593
        %v1714 = vunpack.c.h.s8.bf16 %v1594
        %v1715 = vunpack.c.h.s8.bf16 %v1595
        %v1716 = vunpack.c.l.s8.bf16 %v1596
        %v1717 = vunpack.c.l.s8.bf16 %v1597
        %v1718 = vunpack.c.l.s8.bf16 %v1598
        %v1719 = vunpack.c.l.s8.bf16 %v1599
        %v1720 = vunpack.c.h.s8.bf16 %v1596
        %v1721 = vunpack.c.h.s8.bf16 %v1597
        %v1722 = vunpack.c.h.s8.bf16 %v1598
        %v1723 = vunpack.c.h.s8.bf16 %v1599
        %v1724 = vunpack.c.l.s8.bf16 %v1600
        %v1725 = vunpack.c.l.s8.bf16 %v1601
        %v1726 = vunpack.c.l.s8.bf16 %v1602
        %v1727 = vunpack.c.l.s8.bf16 %v1603
        %v1728 = vunpack.c.h.s8.bf16 %v1600
        %v1729 = vunpack.c.h.s8.bf16 %v1601
        %v1730 = vunpack.c.h.s8.bf16 %v1602
        %v1731 = vunpack.c.h.s8.bf16 %v1603
        %1732 = vmatprep.subr.bf16.mxu0 %v1605
        %1733 = vmatpush1.bf16.msra.mxu0 %v1604
        %1734 = vmatprep.subr.bf16.mxu0 %v1609
        %1735 = vmatpush1.bf16.msra.mxu0 %v1608
        %1736 = vmatprep.subr.bf16.mxu0 %v1613
        %1737 = vmatpush1.bf16.msra.mxu0 %v1612
        %1738 = vmatprep.subr.bf16.mxu0 %v1617
        %1739 = vmatpush1.bf16.msra.mxu0 %v1616
        %1740 = vmatprep.subr.bf16.mxu0 %v1621
        %1741 = vmatpush1.bf16.msra.mxu0 %v1620
        %1742 = vmatprep.subr.bf16.mxu0 %v1625
        %1743 = vmatpush1.bf16.msra.mxu0 %v1624
        %1744 = vmatprep.subr.bf16.mxu0 %v1629
        %1745 = vmatpush1.bf16.msra.mxu0 %v1628
        %1746 = vmatprep.subr.bf16.mxu0 %v1633
        %1747 = vmatpush1.bf16.msra.mxu0 %v1632
        %1748 = vmatprep.subr.bf16.mxu0 %v1637
        %1749 = vmatpush1.bf16.msra.mxu0 %v1636
        %1750 = vmatprep.subr.bf16.mxu0 %v1641
        %1751 = vmatpush1.bf16.msra.mxu0 %v1640
        %1752 = vmatprep.subr.bf16.mxu0 %v1645
        %1753 = vmatpush1.bf16.msra.mxu0 %v1644
        %1754 = vmatprep.subr.bf16.mxu0 %v1649
        %1755 = vmatpush1.bf16.msra.mxu0 %v1648
        %1756 = vmatprep.subr.bf16.mxu0 %v1653
        %1757 = vmatpush1.bf16.msra.mxu0 %v1652
        %1758 = vmatprep.subr.bf16.mxu0 %v1657
        %1759 = vmatpush1.bf16.msra.mxu0 %v1656
        %1760 = vmatprep.subr.bf16.mxu0 %v1661
        %1761 = vmatpush1.bf16.msra.mxu0 %v1660
        %1762 = vmatprep.subr.bf16.mxu0 %v1665
        %1763 = vmatpush1.bf16.msra.mxu0 %v1664
        %1764 = vmatprep.mubr.bf16.mxu0 %v1536
        %1765 = vmatmul.mubr.bf16.gmra.mrb[0].mxu0 %v1535
        %v1766 = vpop.f32.mrb[0].mxu0
        %v1767 = vadd.f32 0.0, %v1766
        %v1768 = vpop.f32.mrb[0].mxu0
        %v1769 = vadd.f32 0.0, %v1768
        %v1770 = vpop.f32.mrb[0].mxu0
        %v1771 = vpop.f32.mrb[0].mxu0
        %1772 = vdwg.mxu0
        %1773 = vmatprep.subr.bf16.mxu0 %v1669
        %1774 = vmatpush1.bf16.msra.mxu0 %v1668
        %1775 = vmatprep.subr.bf16.mxu0 %v1673
        %1776 = vmatpush1.bf16.msra.mxu0 %v1672
        %1777 = vmatprep.subr.bf16.mxu0 %v1677
        %1778 = vmatpush1.bf16.msra.mxu0 %v1676
        %1779 = vmatprep.subr.bf16.mxu0 %v1681
        %1780 = vmatpush1.bf16.msra.mxu0 %v1680
        %1781 = vmatprep.subr.bf16.mxu0 %v1685
        %1782 = vmatpush1.bf16.msra.mxu0 %v1684
        %1783 = vmatprep.subr.bf16.mxu0 %v1689
        %1784 = vmatpush1.bf16.msra.mxu0 %v1688
        %1785 = vmatprep.subr.bf16.mxu0 %v1693
        %1786 = vmatpush1.bf16.msra.mxu0 %v1692
        %1787 = vmatprep.subr.bf16.mxu0 %v1697
        %1788 = vmatpush1.bf16.msra.mxu0 %v1696
        %1789 = vmatprep.subr.bf16.mxu0 %v1701
        %1790 = vmatpush1.bf16.msra.mxu0 %v1700
        %1791 = vmatprep.subr.bf16.mxu0 %v1705
        %1792 = vmatpush1.bf16.msra.mxu0 %v1704
        %1793 = vmatprep.subr.bf16.mxu0 %v1709
        %1794 = vmatpush1.bf16.msra.mxu0 %v1708
        %1795 = vmatprep.subr.bf16.mxu0 %v1713
        %1796 = vmatpush1.bf16.msra.mxu0 %v1712
        %1797 = vmatprep.subr.bf16.mxu0 %v1717
        %1798 = vmatpush1.bf16.msra.mxu0 %v1716
        %1799 = vmatprep.subr.bf16.mxu0 %v1721
        %1800 = vmatpush1.bf16.msra.mxu0 %v1720
        %1801 = vmatprep.subr.bf16.mxu0 %v1725
        %1802 = vmatpush1.bf16.msra.mxu0 %v1724
        %1803 = vmatprep.subr.bf16.mxu0 %v1729
        %1804 = vmatpush1.bf16.msra.mxu0 %v1728
        %1805 = vmatprep.mubr.bf16.mxu0 %v1538
        %1806 = vmatmul.mubr.bf16.gmra.mrb[0].mxu0 %v1537
        %v1807 = vpop.f32.mrb[0].mxu0
        %v1808 = vadd.f32 %v1767, %v1807
        %v1809 = vpop.f32.mrb[0].mxu0
        %v1810 = vadd.f32 %v1769, %v1809
        %v1811 = vpop.f32.mrb[0].mxu0
        %v1812 = vpop.f32.mrb[0].mxu0
        %1813 = vdwg.mxu0
        %1814 = vmatprep.subr.bf16.mxu0 %v1607
        %1815 = vmatpush1.bf16.msra.mxu0 %v1606
        %1816 = vmatprep.subr.bf16.mxu0 %v1611
        %1817 = vmatpush1.bf16.msra.mxu0 %v1610
        %1818 = vmatprep.subr.bf16.mxu0 %v1615
        %1819 = vmatpush1.bf16.msra.mxu0 %v1614
        %1820 = vmatprep.subr.bf16.mxu0 %v1619
        %1821 = vmatpush1.bf16.msra.mxu0 %v1618
        %1822 = vmatprep.subr.bf16.mxu0 %v1623
        %1823 = vmatpush1.bf16.msra.mxu0 %v1622
        %1824 = vmatprep.subr.bf16.mxu0 %v1627
        %1825 = vmatpush1.bf16.msra.mxu0 %v1626
        %1826 = vmatprep.subr.bf16.mxu0 %v1631
        %1827 = vmatpush1.bf16.msra.mxu0 %v1630
        %1828 = vmatprep.subr.bf16.mxu0 %v1635
        %1829 = vmatpush1.bf16.msra.mxu0 %v1634
        %1830 = vmatprep.subr.bf16.mxu0 %v1639
        %1831 = vmatpush1.bf16.msra.mxu0 %v1638
        %1832 = vmatprep.subr.bf16.mxu0 %v1643
        %1833 = vmatpush1.bf16.msra.mxu0 %v1642
        %1834 = vmatprep.subr.bf16.mxu0 %v1647
        %1835 = vmatpush1.bf16.msra.mxu0 %v1646
        %1836 = vmatprep.subr.bf16.mxu0 %v1651
        %1837 = vmatpush1.bf16.msra.mxu0 %v1650
        %1838 = vmatprep.subr.bf16.mxu0 %v1655
        %1839 = vmatpush1.bf16.msra.mxu0 %v1654
        %1840 = vmatprep.subr.bf16.mxu0 %v1659
        %1841 = vmatpush1.bf16.msra.mxu0 %v1658
        %1842 = vmatprep.subr.bf16.mxu0 %v1663
        %1843 = vmatpush1.bf16.msra.mxu0 %v1662
        %1844 = vmatprep.subr.bf16.mxu0 %v1667
        %1845 = vmatpush1.bf16.msra.mxu0 %v1666
        %1846 = vmatprep.mubr.bf16.mxu0 %v1536
        %1847 = vmatmul.mubr.bf16.gmra.mrb[0].mxu0 %v1535
        %v1848 = vpop.f32.mrb[0].mxu0
        %v1849 = vadd.f32 0.0, %v1848
        %v1850 = vpop.f32.mrb[0].mxu0
        %v1851 = vadd.f32 0.0, %v1850
        %v1852 = vpop.f32.mrb[0].mxu0
        %v1853 = vpop.f32.mrb[0].mxu0
        %1854 = vdwg.mxu0
        %1855 = vmatprep.subr.bf16.mxu0 %v1671
        %1856 = vmatpush1.bf16.msra.mxu0 %v1670
        %1857 = vmatprep.subr.bf16.mxu0 %v1675
        %1858 = vmatpush1.bf16.msra.mxu0 %v1674
        %1859 = vmatprep.subr.bf16.mxu0 %v1679
        %1860 = vmatpush1.bf16.msra.mxu0 %v1678
        %1861 = vmatprep.subr.bf16.mxu0 %v1683
        %1862 = vmatpush1.bf16.msra.mxu0 %v1682
        %1863 = vmatprep.subr.bf16.mxu0 %v1687
        %1864 = vmatpush1.bf16.msra.mxu0 %v1686
        %1865 = vmatprep.subr.bf16.mxu0 %v1691
        %1866 = vmatpush1.bf16.msra.mxu0 %v1690
        %1867 = vmatprep.subr.bf16.mxu0 %v1695
        %1868 = vmatpush1.bf16.msra.mxu0 %v1694
        %1869 = vmatprep.subr.bf16.mxu0 %v1699
        %1870 = vmatpush1.bf16.msra.mxu0 %v1698
        %1871 = vmatprep.subr.bf16.mxu0 %v1703
        %1872 = vmatpush1.bf16.msra.mxu0 %v1702
        %1873 = vmatprep.subr.bf16.mxu0 %v1707
        %1874 = vmatpush1.bf16.msra.mxu0 %v1706
        %1875 = vmatprep.subr.bf16.mxu0 %v1711
        %1876 = vmatpush1.bf16.msra.mxu0 %v1710
        %1877 = vmatprep.subr.bf16.mxu0 %v1715
        %1878 = vmatpush1.bf16.msra.mxu0 %v1714
        %1879 = vmatprep.subr.bf16.mxu0 %v1719
        %1880 = vmatpush1.bf16.msra.mxu0 %v1718
        %1881 = vmatprep.subr.bf16.mxu0 %v1723
        %1882 = vmatpush1.bf16.msra.mxu0 %v1722
        %1883 = vmatprep.subr.bf16.mxu0 %v1727
        %1884 = vmatpush1.bf16.msra.mxu0 %v1726
        %1885 = vmatprep.subr.bf16.mxu0 %v1731
        %1886 = vmatpush1.bf16.msra.mxu0 %v1730
        %1887 = vmatprep.mubr.bf16.mxu0 %v1538
        %1888 = vmatmul.mubr.bf16.gmra.mrb[0].mxu0 %v1537
        %v1889 = vpop.f32.mrb[0].mxu0
        %v1890 = vadd.f32 %v1849, %v1889
        %v1891 = vpop.f32.mrb[0].mxu0
        %v1892 = vadd.f32 %v1851, %v1891
        %v1893 = vpop.f32.mrb[0].mxu0
        %v1894 = vpop.f32.mrb[0].mxu0
        %1895 = vdwg.mxu0
        %s1896 = scalar_lea.vmem %s431, 8 [#allocation9]
        %v1897 = vld [vmem:[%s1896] sm:$0xf]
        %v1899 = vlaneseq
        %v1900 = vshrl.u32 %v1899, 7
        %v1901 = vsub.s32 0, %v1900
        %v1902 = vrot.slane %v1897, %v1901
        %v1903 = vlaneseq
        %v1904 = vshrl.u32 %v1903, 7
        %v1905 = vsub.s32 1, %v1904
        %v1906 = vrot.slane %v1897, %v1905
        %v1907 = vlaneseq
        %v1908 = vshrl.u32 %v1907, 7
        %v1909 = vsub.s32 2, %v1908
        %v1910 = vrot.slane %v1897, %v1909
        %v1911 = vlaneseq
        %v1912 = vshrl.u32 %v1911, 7
        %v1913 = vsub.s32 3, %v1912
        %v1914 = vrot.slane %v1897, %v1913
        %v1919 = vmul.f32 %v1808, %v1902
        %v1920 = vmul.f32 %v1810, %v1906
        %v1921 = vmul.f32 %v1890, %v1910
        %v1922 = vmul.f32 %v1892, %v1914
        %s1923 = scalar_lea.vmem %s440, 8 [#allocation10]
        %v1924 = vld [vmem:[%s1923] sm:$0xf]
        %v1926 = vlaneseq
        %v1927 = vshrl.u32 %v1926, 7
        %v1928 = vsub.s32 0, %v1927
        %v1929 = vrot.slane %v1924, %v1928
        %v1930 = vlaneseq
        %v1931 = vshrl.u32 %v1930, 7
        %v1932 = vsub.s32 1, %v1931
        %v1933 = vrot.slane %v1924, %v1932
        %v1934 = vlaneseq
        %v1935 = vshrl.u32 %v1934, 7
        %v1936 = vsub.s32 2, %v1935
        %v1937 = vrot.slane %v1924, %v1936
        %v1938 = vlaneseq
        %v1939 = vshrl.u32 %v1938, 7
        %v1940 = vsub.s32 3, %v1939
        %v1941 = vrot.slane %v1924, %v1940
        %v1946 = vadd.f32 %v1919, %v1929
        %v1947 = vadd.f32 %v1920, %v1933
        %v1948 = vadd.f32 %v1921, %v1937
        %v1949 = vadd.f32 %v1922, %v1941
        %vm1950 = vcmp.gt.f32.partialorder %v1946, 0.0
        %vm1951 = vcmp.gt.f32.partialorder %v1947, 0.0
        %vm1952 = vcmp.gt.f32.partialorder %v1948, 0.0
        %vm1953 = vcmp.gt.f32.partialorder %v1949, 0.0
        %v1954 = vmul.f32 %v1946, 0.01
        %v1955 = vmul.f32 %v1947, 0.01
        %v1956 = vmul.f32 %v1948, 0.01
        %v1957 = vmul.f32 %v1949, 0.01
        %v1958 = vsel %vm1950, %v1946, %v1954
        %v1959 = vsel %vm1951, %v1947, %v1955
        %v1960 = vsel %vm1952, %v1948, %v1956
        %v1961 = vsel %vm1953, %v1949, %v1957
        %v1962 = vpack.c.bf16 %v1958, %v1958
        %v1963 = vpack.c.bf16 %v1959, %v1959
        %v1964 = vpack.c.bf16 %v1960, %v1960
        %v1965 = vpack.c.bf16 %v1961, %v1961
        %s1966 = scalar_lea.vmem %s422, 1536 [#allocation7]
        %v1967 = vld [vmem:[%s1966] sm:$0xff]
        %v1968 = vld [vmem:[%s1966 + $0x8] sm:$0xff]
        %v1969 = vld [vmem:[%s1966 + $0x10] sm:$0xff]
        %v1970 = vld [vmem:[%s1966 + $0x18] sm:$0xff]
        %v1971 = vld [vmem:[%s1966 + $0x20] sm:$0xff]
        %v1972 = vld [vmem:[%s1966 + $0x28] sm:$0xff]
        %v1973 = vld [vmem:[%s1966 + $0x30] sm:$0xff]
        %v1974 = vld [vmem:[%s1966 + $0x38] sm:$0xff]
        %v1975 = vld [vmem:[%s1966 + $0x40] sm:$0xff]
        %v1976 = vld [vmem:[%s1966 + $0x48] sm:$0xff]
        %v1977 = vld [vmem:[%s1966 + $0x50] sm:$0xff]
        %v1978 = vld [vmem:[%s1966 + $0x58] sm:$0xff]
        %v1979 = vld [vmem:[%s1966 + $0x60] sm:$0xff]
        %v1980 = vld [vmem:[%s1966 + $0x68] sm:$0xff]
        %v1981 = vld [vmem:[%s1966 + $0x70] sm:$0xff]
        %v1982 = vld [vmem:[%s1966 + $0x78] sm:$0xff]
        %v1983 = vld [vmem:[%s1966 + $0x80] sm:$0xff]
        %v1984 = vld [vmem:[%s1966 + $0x88] sm:$0xff]
        %v1985 = vld [vmem:[%s1966 + $0x90] sm:$0xff]
        %v1986 = vld [vmem:[%s1966 + $0x98] sm:$0xff]
        %v1987 = vld [vmem:[%s1966 + $0xa0] sm:$0xff]
        %v1988 = vld [vmem:[%s1966 + $0xa8] sm:$0xff]
        %v1989 = vld [vmem:[%s1966 + $0xb0] sm:$0xff]
        %v1990 = vld [vmem:[%s1966 + $0xb8] sm:$0xff]
        %v1991 = vld [vmem:[%s1966 + $0xc0] sm:$0xff]
        %v1992 = vld [vmem:[%s1966 + $0xc8] sm:$0xff]
        %v1993 = vld [vmem:[%s1966 + $0xd0] sm:$0xff]
        %v1994 = vld [vmem:[%s1966 + $0xd8] sm:$0xff]
        %v1995 = vld [vmem:[%s1966 + $0xe0] sm:$0xff]
        %v1996 = vld [vmem:[%s1966 + $0xe8] sm:$0xff]
        %v1997 = vld [vmem:[%s1966 + $0xf0] sm:$0xff]
        %v1998 = vld [vmem:[%s1966 + $0xf8] sm:$0xff]
        %v1999 = vld [vmem:[%s1966 + $0x100] sm:$0xff]
        %v2000 = vld [vmem:[%s1966 + $0x108] sm:$0xff]
        %v2001 = vld [vmem:[%s1966 + $0x110] sm:$0xff]
        %v2002 = vld [vmem:[%s1966 + $0x118] sm:$0xff]
        %v2003 = vld [vmem:[%s1966 + $0x120] sm:$0xff]
        %v2004 = vld [vmem:[%s1966 + $0x128] sm:$0xff]
        %v2005 = vld [vmem:[%s1966 + $0x130] sm:$0xff]
        %v2006 = vld [vmem:[%s1966 + $0x138] sm:$0xff]
        %v2007 = vld [vmem:[%s1966 + $0x140] sm:$0xff]
        %v2008 = vld [vmem:[%s1966 + $0x148] sm:$0xff]
        %v2009 = vld [vmem:[%s1966 + $0x150] sm:$0xff]
        %v2010 = vld [vmem:[%s1966 + $0x158] sm:$0xff]
        %v2011 = vld [vmem:[%s1966 + $0x160] sm:$0xff]
        %v2012 = vld [vmem:[%s1966 + $0x168] sm:$0xff]
        %v2013 = vld [vmem:[%s1966 + $0x170] sm:$0xff]
        %v2014 = vld [vmem:[%s1966 + $0x178] sm:$0xff]
        %v2015 = vld [vmem:[%s1966 + $0x180] sm:$0xff]
        %v2016 = vld [vmem:[%s1966 + $0x188] sm:$0xff]
        %v2017 = vld [vmem:[%s1966 + $0x190] sm:$0xff]
        %v2018 = vld [vmem:[%s1966 + $0x198] sm:$0xff]
        %v2019 = vld [vmem:[%s1966 + $0x1a0] sm:$0xff]
        %v2020 = vld [vmem:[%s1966 + $0x1a8] sm:$0xff]
        %v2021 = vld [vmem:[%s1966 + $0x1b0] sm:$0xff]
        %v2022 = vld [vmem:[%s1966 + $0x1b8] sm:$0xff]
        %v2023 = vld [vmem:[%s1966 + $0x1c0] sm:$0xff]
        %v2024 = vld [vmem:[%s1966 + $0x1c8] sm:$0xff]
        %v2025 = vld [vmem:[%s1966 + $0x1d0] sm:$0xff]
        %v2026 = vld [vmem:[%s1966 + $0x1d8] sm:$0xff]
        %v2027 = vld [vmem:[%s1966 + $0x1e0] sm:$0xff]
        %v2028 = vld [vmem:[%s1966 + $0x1e8] sm:$0xff]
        %v2029 = vld [vmem:[%s1966 + $0x1f0] sm:$0xff]
        %v2030 = vld [vmem:[%s1966 + $0x1f8] sm:$0xff]
        %v2031 = vunpack.c.l.s8.bf16 %v1967
        %v2032 = vunpack.c.l.s8.bf16 %v1968
        %v2033 = vunpack.c.l.s8.bf16 %v1969
        %v2034 = vunpack.c.l.s8.bf16 %v1970
        %v2035 = vunpack.c.h.s8.bf16 %v1967
        %v2036 = vunpack.c.h.s8.bf16 %v1968
        %v2037 = vunpack.c.h.s8.bf16 %v1969
        %v2038 = vunpack.c.h.s8.bf16 %v1970
        %v2039 = vunpack.c.l.s8.bf16 %v1971
        %v2040 = vunpack.c.l.s8.bf16 %v1972
        %v2041 = vunpack.c.l.s8.bf16 %v1973
        %v2042 = vunpack.c.l.s8.bf16 %v1974
        %v2043 = vunpack.c.h.s8.bf16 %v1971
        %v2044 = vunpack.c.h.s8.bf16 %v1972
        %v2045 = vunpack.c.h.s8.bf16 %v1973
        %v2046 = vunpack.c.h.s8.bf16 %v1974
        %v2047 = vunpack.c.l.s8.bf16 %v1975
        %v2048 = vunpack.c.l.s8.bf16 %v1976
        %v2049 = vunpack.c.l.s8.bf16 %v1977
        %v2050 = vunpack.c.l.s8.bf16 %v1978
        %v2051 = vunpack.c.h.s8.bf16 %v1975
        %v2052 = vunpack.c.h.s8.bf16 %v1976
        %v2053 = vunpack.c.h.s8.bf16 %v1977
        %v2054 = vunpack.c.h.s8.bf16 %v1978
        %v2055 = vunpack.c.l.s8.bf16 %v1979
        %v2056 = vunpack.c.l.s8.bf16 %v1980
        %v2057 = vunpack.c.l.s8.bf16 %v1981
        %v2058 = vunpack.c.l.s8.bf16 %v1982
        %v2059 = vunpack.c.h.s8.bf16 %v1979
        %v2060 = vunpack.c.h.s8.bf16 %v1980
        %v2061 = vunpack.c.h.s8.bf16 %v1981
        %v2062 = vunpack.c.h.s8.bf16 %v1982
        %v2063 = vunpack.c.l.s8.bf16 %v1983
        %v2064 = vunpack.c.l.s8.bf16 %v1984
        %v2065 = vunpack.c.l.s8.bf16 %v1985
        %v2066 = vunpack.c.l.s8.bf16 %v1986
        %v2067 = vunpack.c.h.s8.bf16 %v1983
        %v2068 = vunpack.c.h.s8.bf16 %v1984
        %v2069 = vunpack.c.h.s8.bf16 %v1985
        %v2070 = vunpack.c.h.s8.bf16 %v1986
        %v2071 = vunpack.c.l.s8.bf16 %v1987
        %v2072 = vunpack.c.l.s8.bf16 %v1988
        %v2073 = vunpack.c.l.s8.bf16 %v1989
        %v2074 = vunpack.c.l.s8.bf16 %v1990
        %v2075 = vunpack.c.h.s8.bf16 %v1987
        %v2076 = vunpack.c.h.s8.bf16 %v1988
        %v2077 = vunpack.c.h.s8.bf16 %v1989
        %v2078 = vunpack.c.h.s8.bf16 %v1990
        %v2079 = vunpack.c.l.s8.bf16 %v1991
        %v2080 = vunpack.c.l.s8.bf16 %v1992
        %v2081 = vunpack.c.l.s8.bf16 %v1993
        %v2082 = vunpack.c.l.s8.bf16 %v1994
        %v2083 = vunpack.c.h.s8.bf16 %v1991
        %v2084 = vunpack.c.h.s8.bf16 %v1992
        %v2085 = vunpack.c.h.s8.bf16 %v1993
        %v2086 = vunpack.c.h.s8.bf16 %v1994
        %v2087 = vunpack.c.l.s8.bf16 %v1995
        %v2088 = vunpack.c.l.s8.bf16 %v1996
        %v2089 = vunpack.c.l.s8.bf16 %v1997
        %v2090 = vunpack.c.l.s8.bf16 %v1998
        %v2091 = vunpack.c.h.s8.bf16 %v1995
        %v2092 = vunpack.c.h.s8.bf16 %v1996
        %v2093 = vunpack.c.h.s8.bf16 %v1997
        %v2094 = vunpack.c.h.s8.bf16 %v1998
        %v2095 = vunpack.c.l.s8.bf16 %v1999
        %v2096 = vunpack.c.l.s8.bf16 %v2000
        %v2097 = vunpack.c.l.s8.bf16 %v2001
        %v2098 = vunpack.c.l.s8.bf16 %v2002
        %v2099 = vunpack.c.h.s8.bf16 %v1999
        %v2100 = vunpack.c.h.s8.bf16 %v2000
        %v2101 = vunpack.c.h.s8.bf16 %v2001
        %v2102 = vunpack.c.h.s8.bf16 %v2002
        %v2103 = vunpack.c.l.s8.bf16 %v2003
        %v2104 = vunpack.c.l.s8.bf16 %v2004
        %v2105 = vunpack.c.l.s8.bf16 %v2005
        %v2106 = vunpack.c.l.s8.bf16 %v2006
        %v2107 = vunpack.c.h.s8.bf16 %v2003
        %v2108 = vunpack.c.h.s8.bf16 %v2004
        %v2109 = vunpack.c.h.s8.bf16 %v2005
        %v2110 = vunpack.c.h.s8.bf16 %v2006
        %v2111 = vunpack.c.l.s8.bf16 %v2007
        %v2112 = vunpack.c.l.s8.bf16 %v2008
        %v2113 = vunpack.c.l.s8.bf16 %v2009
        %v2114 = vunpack.c.l.s8.bf16 %v2010
        %v2115 = vunpack.c.h.s8.bf16 %v2007
        %v2116 = vunpack.c.h.s8.bf16 %v2008
        %v2117 = vunpack.c.h.s8.bf16 %v2009
        %v2118 = vunpack.c.h.s8.bf16 %v2010
        %v2119 = vunpack.c.l.s8.bf16 %v2011
        %v2120 = vunpack.c.l.s8.bf16 %v2012
        %v2121 = vunpack.c.l.s8.bf16 %v2013
        %v2122 = vunpack.c.l.s8.bf16 %v2014
        %v2123 = vunpack.c.h.s8.bf16 %v2011
        %v2124 = vunpack.c.h.s8.bf16 %v2012
        %v2125 = vunpack.c.h.s8.bf16 %v2013
        %v2126 = vunpack.c.h.s8.bf16 %v2014
        %v2127 = vunpack.c.l.s8.bf16 %v2015
        %v2128 = vunpack.c.l.s8.bf16 %v2016
        %v2129 = vunpack.c.l.s8.bf16 %v2017
        %v2130 = vunpack.c.l.s8.bf16 %v2018
        %v2131 = vunpack.c.h.s8.bf16 %v2015
        %v2132 = vunpack.c.h.s8.bf16 %v2016
        %v2133 = vunpack.c.h.s8.bf16 %v2017
        %v2134 = vunpack.c.h.s8.bf16 %v2018
        %v2135 = vunpack.c.l.s8.bf16 %v2019
        %v2136 = vunpack.c.l.s8.bf16 %v2020
        %v2137 = vunpack.c.l.s8.bf16 %v2021
        %v2138 = vunpack.c.l.s8.bf16 %v2022
        %v2139 = vunpack.c.h.s8.bf16 %v2019
        %v2140 = vunpack.c.h.s8.bf16 %v2020
        %v2141 = vunpack.c.h.s8.bf16 %v2021
        %v2142 = vunpack.c.h.s8.bf16 %v2022
        %v2143 = vunpack.c.l.s8.bf16 %v2023
        %v2144 = vunpack.c.l.s8.bf16 %v2024
        %v2145 = vunpack.c.l.s8.bf16 %v2025
        %v2146 = vunpack.c.l.s8.bf16 %v2026
        %v2147 = vunpack.c.h.s8.bf16 %v2023
        %v2148 = vunpack.c.h.s8.bf16 %v2024
        %v2149 = vunpack.c.h.s8.bf16 %v2025
        %v2150 = vunpack.c.h.s8.bf16 %v2026
        %v2151 = vunpack.c.l.s8.bf16 %v2027
        %v2152 = vunpack.c.l.s8.bf16 %v2028
        %v2153 = vunpack.c.l.s8.bf16 %v2029
        %v2154 = vunpack.c.l.s8.bf16 %v2030
        %v2155 = vunpack.c.h.s8.bf16 %v2027
        %v2156 = vunpack.c.h.s8.bf16 %v2028
        %v2157 = vunpack.c.h.s8.bf16 %v2029
        %v2158 = vunpack.c.h.s8.bf16 %v2030
        %2159 = vmatprep.subr.bf16.mxu0 %v2032
        %2160 = vmatpush1.bf16.msra.mxu0 %v2031
        %2161 = vmatprep.subr.bf16.mxu0 %v2036
        %2162 = vmatpush1.bf16.msra.mxu0 %v2035
        %2163 = vmatprep.subr.bf16.mxu0 %v2040
        %2164 = vmatpush1.bf16.msra.mxu0 %v2039
        %2165 = vmatprep.subr.bf16.mxu0 %v2044
        %2166 = vmatpush1.bf16.msra.mxu0 %v2043
        %2167 = vmatprep.subr.bf16.mxu0 %v2048
        %2168 = vmatpush1.bf16.msra.mxu0 %v2047
        %2169 = vmatprep.subr.bf16.mxu0 %v2052
        %2170 = vmatpush1.bf16.msra.mxu0 %v2051
        %2171 = vmatprep.subr.bf16.mxu0 %v2056
        %2172 = vmatpush1.bf16.msra.mxu0 %v2055
        %2173 = vmatprep.subr.bf16.mxu0 %v2060
        %2174 = vmatpush1.bf16.msra.mxu0 %v2059
        %2175 = vmatprep.subr.bf16.mxu0 %v2064
        %2176 = vmatpush1.bf16.msra.mxu0 %v2063
        %2177 = vmatprep.subr.bf16.mxu0 %v2068
        %2178 = vmatpush1.bf16.msra.mxu0 %v2067
        %2179 = vmatprep.subr.bf16.mxu0 %v2072
        %2180 = vmatpush1.bf16.msra.mxu0 %v2071
        %2181 = vmatprep.subr.bf16.mxu0 %v2076
        %2182 = vmatpush1.bf16.msra.mxu0 %v2075
        %2183 = vmatprep.subr.bf16.mxu0 %v2080
        %2184 = vmatpush1.bf16.msra.mxu0 %v2079
        %2185 = vmatprep.subr.bf16.mxu0 %v2084
        %2186 = vmatpush1.bf16.msra.mxu0 %v2083
        %2187 = vmatprep.subr.bf16.mxu0 %v2088
        %2188 = vmatpush1.bf16.msra.mxu0 %v2087
        %2189 = vmatprep.subr.bf16.mxu0 %v2092
        %2190 = vmatpush1.bf16.msra.mxu0 %v2091
        %2191 = vmatprep.mubr.bf16.mxu0 %v1963
        %2192 = vmatmul.mubr.bf16.gmra.mrb[0].mxu0 %v1962
        %v2193 = vpop.f32.mrb[0].mxu0
        %v2194 = vadd.f32 0.0, %v2193
        %v2195 = vpop.f32.mrb[0].mxu0
        %v2196 = vadd.f32 0.0, %v2195
        %v2197 = vpop.f32.mrb[0].mxu0
        %v2198 = vpop.f32.mrb[0].mxu0
        %2199 = vdwg.mxu0
        %2200 = vmatprep.subr.bf16.mxu0 %v2096
        %2201 = vmatpush1.bf16.msra.mxu0 %v2095
        %2202 = vmatprep.subr.bf16.mxu0 %v2100
        %2203 = vmatpush1.bf16.msra.mxu0 %v2099
        %2204 = vmatprep.subr.bf16.mxu0 %v2104
        %2205 = vmatpush1.bf16.msra.mxu0 %v2103
        %2206 = vmatprep.subr.bf16.mxu0 %v2108
        %2207 = vmatpush1.bf16.msra.mxu0 %v2107
        %2208 = vmatprep.subr.bf16.mxu0 %v2112
        %2209 = vmatpush1.bf16.msra.mxu0 %v2111
        %2210 = vmatprep.subr.bf16.mxu0 %v2116
        %2211 = vmatpush1.bf16.msra.mxu0 %v2115
        %2212 = vmatprep.subr.bf16.mxu0 %v2120
        %2213 = vmatpush1.bf16.msra.mxu0 %v2119
        %2214 = vmatprep.subr.bf16.mxu0 %v2124
        %2215 = vmatpush1.bf16.msra.mxu0 %v2123
        %2216 = vmatprep.subr.bf16.mxu0 %v2128
        %2217 = vmatpush1.bf16.msra.mxu0 %v2127
        %2218 = vmatprep.subr.bf16.mxu0 %v2132
        %2219 = vmatpush1.bf16.msra.mxu0 %v2131
        %2220 = vmatprep.subr.bf16.mxu0 %v2136
        %2221 = vmatpush1.bf16.msra.mxu0 %v2135
        %2222 = vmatprep.subr.bf16.mxu0 %v2140
        %2223 = vmatpush1.bf16.msra.mxu0 %v2139
        %2224 = vmatprep.subr.bf16.mxu0 %v2144
        %2225 = vmatpush1.bf16.msra.mxu0 %v2143
        %2226 = vmatprep.subr.bf16.mxu0 %v2148
        %2227 = vmatpush1.bf16.msra.mxu0 %v2147
        %2228 = vmatprep.subr.bf16.mxu0 %v2152
        %2229 = vmatpush1.bf16.msra.mxu0 %v2151
        %2230 = vmatprep.subr.bf16.mxu0 %v2156
        %2231 = vmatpush1.bf16.msra.mxu0 %v2155
        %2232 = vmatprep.mubr.bf16.mxu0 %v1965
        %2233 = vmatmul.mubr.bf16.gmra.mrb[0].mxu0 %v1964
        %v2234 = vpop.f32.mrb[0].mxu0
        %v2235 = vadd.f32 %v2194, %v2234
        %v2236 = vpop.f32.mrb[0].mxu0
        %v2237 = vadd.f32 %v2196, %v2236
        %v2238 = vpop.f32.mrb[0].mxu0
        %v2239 = vpop.f32.mrb[0].mxu0
        %2240 = vdwg.mxu0
        %2241 = vmatprep.subr.bf16.mxu0 %v2034
        %2242 = vmatpush1.bf16.msra.mxu0 %v2033
        %2243 = vmatprep.subr.bf16.mxu0 %v2038
        %2244 = vmatpush1.bf16.msra.mxu0 %v2037
        %2245 = vmatprep.subr.bf16.mxu0 %v2042
        %2246 = vmatpush1.bf16.msra.mxu0 %v2041
        %2247 = vmatprep.subr.bf16.mxu0 %v2046
        %2248 = vmatpush1.bf16.msra.mxu0 %v2045
        %2249 = vmatprep.subr.bf16.mxu0 %v2050
        %2250 = vmatpush1.bf16.msra.mxu0 %v2049
        %2251 = vmatprep.subr.bf16.mxu0 %v2054
        %2252 = vmatpush1.bf16.msra.mxu0 %v2053
        %2253 = vmatprep.subr.bf16.mxu0 %v2058
        %2254 = vmatpush1.bf16.msra.mxu0 %v2057
        %2255 = vmatprep.subr.bf16.mxu0 %v2062
        %2256 = vmatpush1.bf16.msra.mxu0 %v2061
        %2257 = vmatprep.subr.bf16.mxu0 %v2066
        %2258 = vmatpush1.bf16.msra.mxu0 %v2065
        %2259 = vmatprep.subr.bf16.mxu0 %v2070
        %2260 = vmatpush1.bf16.msra.mxu0 %v2069
        %2261 = vmatprep.subr.bf16.mxu0 %v2074
        %2262 = vmatpush1.bf16.msra.mxu0 %v2073
        %2263 = vmatprep.subr.bf16.mxu0 %v2078
        %2264 = vmatpush1.bf16.msra.mxu0 %v2077
        %2265 = vmatprep.subr.bf16.mxu0 %v2082
        %2266 = vmatpush1.bf16.msra.mxu0 %v2081
        %2267 = vmatprep.subr.bf16.mxu0 %v2086
        %2268 = vmatpush1.bf16.msra.mxu0 %v2085
        %2269 = vmatprep.subr.bf16.mxu0 %v2090
        %2270 = vmatpush1.bf16.msra.mxu0 %v2089
        %2271 = vmatprep.subr.bf16.mxu0 %v2094
        %2272 = vmatpush1.bf16.msra.mxu0 %v2093
        %2273 = vmatprep.mubr.bf16.mxu0 %v1963
        %2274 = vmatmul.mubr.bf16.gmra.mrb[0].mxu0 %v1962
        %v2275 = vpop.f32.mrb[0].mxu0
        %v2276 = vadd.f32 0.0, %v2275
        %v2277 = vpop.f32.mrb[0].mxu0
        %v2278 = vadd.f32 0.0, %v2277
        %v2279 = vpop.f32.mrb[0].mxu0
        %v2280 = vpop.f32.mrb[0].mxu0
        %2281 = vdwg.mxu0
        %2282 = vmatprep.subr.bf16.mxu0 %v2098
        %2283 = vmatpush1.bf16.msra.mxu0 %v2097
        %2284 = vmatprep.subr.bf16.mxu0 %v2102
        %2285 = vmatpush1.bf16.msra.mxu0 %v2101
        %2286 = vmatprep.subr.bf16.mxu0 %v2106
        %2287 = vmatpush1.bf16.msra.mxu0 %v2105
        %2288 = vmatprep.subr.bf16.mxu0 %v2110
        %2289 = vmatpush1.bf16.msra.mxu0 %v2109
        %2290 = vmatprep.subr.bf16.mxu0 %v2114
        %2291 = vmatpush1.bf16.msra.mxu0 %v2113
        %2292 = vmatprep.subr.bf16.mxu0 %v2118
        %2293 = vmatpush1.bf16.msra.mxu0 %v2117
        %2294 = vmatprep.subr.bf16.mxu0 %v2122
        %2295 = vmatpush1.bf16.msra.mxu0 %v2121
        %2296 = vmatprep.subr.bf16.mxu0 %v2126
        %2297 = vmatpush1.bf16.msra.mxu0 %v2125
        %2298 = vmatprep.subr.bf16.mxu0 %v2130
        %2299 = vmatpush1.bf16.msra.mxu0 %v2129
        %2300 = vmatprep.subr.bf16.mxu0 %v2134
        %2301 = vmatpush1.bf16.msra.mxu0 %v2133
        %2302 = vmatprep.subr.bf16.mxu0 %v2138
        %2303 = vmatpush1.bf16.msra.mxu0 %v2137
        %2304 = vmatprep.subr.bf16.mxu0 %v2142
        %2305 = vmatpush1.bf16.msra.mxu0 %v2141
        %2306 = vmatprep.subr.bf16.mxu0 %v2146
        %2307 = vmatpush1.bf16.msra.mxu0 %v2145
        %2308 = vmatprep.subr.bf16.mxu0 %v2150
        %2309 = vmatpush1.bf16.msra.mxu0 %v2149
        %2310 = vmatprep.subr.bf16.mxu0 %v2154
        %2311 = vmatpush1.bf16.msra.mxu0 %v2153
        %2312 = vmatprep.subr.bf16.mxu0 %v2158
        %2313 = vmatpush1.bf16.msra.mxu0 %v2157
        %2314 = vmatprep.mubr.bf16.mxu0 %v1965
        %2315 = vmatmul.mubr.bf16.gmra.mrb[0].mxu0 %v1964
        %v2316 = vpop.f32.mrb[0].mxu0
        %v2317 = vadd.f32 %v2276, %v2316
        %v2318 = vpop.f32.mrb[0].mxu0
        %v2319 = vadd.f32 %v2278, %v2318
        %v2320 = vpop.f32.mrb[0].mxu0
        %v2321 = vpop.f32.mrb[0].mxu0
        %2322 = vdwg.mxu0
        %s2323 = scalar_lea.vmem %s431, 12 [#allocation9]
        %v2324 = vld [vmem:[%s2323] sm:$0xf]
        %v2326 = vlaneseq
        %v2327 = vshrl.u32 %v2326, 7
        %v2328 = vsub.s32 0, %v2327
        %v2329 = vrot.slane %v2324, %v2328
        %v2330 = vlaneseq
        %v2331 = vshrl.u32 %v2330, 7
        %v2332 = vsub.s32 1, %v2331
        %v2333 = vrot.slane %v2324, %v2332
        %v2334 = vlaneseq
        %v2335 = vshrl.u32 %v2334, 7
        %v2336 = vsub.s32 2, %v2335
        %v2337 = vrot.slane %v2324, %v2336
        %v2338 = vlaneseq
        %v2339 = vshrl.u32 %v2338, 7
        %v2340 = vsub.s32 3, %v2339
        %v2341 = vrot.slane %v2324, %v2340
        %v2346 = vmul.f32 %v2235, %v2329
        %v2347 = vmul.f32 %v2237, %v2333
        %v2348 = vmul.f32 %v2317, %v2337
        %v2349 = vmul.f32 %v2319, %v2341
        %s2350 = scalar_lea.vmem %s440, 12 [#allocation10]
        %v2351 = vld [vmem:[%s2350] sm:$0xf]
        %v2353 = vlaneseq
        %v2354 = vshrl.u32 %v2353, 7
        %v2355 = vsub.s32 0, %v2354
        %v2356 = vrot.slane %v2351, %v2355
        %v2357 = vlaneseq
        %v2358 = vshrl.u32 %v2357, 7
        %v2359 = vsub.s32 1, %v2358
        %v2360 = vrot.slane %v2351, %v2359
        %v2361 = vlaneseq
        %v2362 = vshrl.u32 %v2361, 7
        %v2363 = vsub.s32 2, %v2362
        %v2364 = vrot.slane %v2351, %v2363
        %v2365 = vlaneseq
        %v2366 = vshrl.u32 %v2365, 7
        %v2367 = vsub.s32 3, %v2366
        %v2368 = vrot.slane %v2351, %v2367
        %v2373 = vadd.f32 %v2346, %v2356
        %v2374 = vadd.f32 %v2347, %v2360
        %v2375 = vadd.f32 %v2348, %v2364
        %v2376 = vadd.f32 %v2349, %v2368
        %vm2377 = vcmp.gt.f32.partialorder %v2373, 0.0
        %vm2378 = vcmp.gt.f32.partialorder %v2374, 0.0
        %vm2379 = vcmp.gt.f32.partialorder %v2375, 0.0
        %vm2380 = vcmp.gt.f32.partialorder %v2376, 0.0
        %v2381 = vmul.f32 %v2373, 0.01
        %v2382 = vmul.f32 %v2374, 0.01
        %v2383 = vmul.f32 %v2375, 0.01
        %v2384 = vmul.f32 %v2376, 0.01
        %v2385 = vsel %vm2377, %v2373, %v2381
        %v2386 = vsel %vm2378, %v2374, %v2382
        %v2387 = vsel %vm2379, %v2375, %v2383
        %v2388 = vsel %vm2380, %v2376, %v2384
        %v2389 = vpack.c.bf16 %v2385, %v2385
        %v2390 = vpack.c.bf16 %v2386, %v2386
        %v2391 = vpack.c.bf16 %v2387, %v2387
        %v2392 = vpack.c.bf16 %v2388, %v2388
        %s2393 = scalar_lea.vmem %s422, 2048 [#allocation7]
        %v2394 = vld [vmem:[%s2393] sm:$0xff]
        %v2395 = vld [vmem:[%s2393 + $0x8] sm:$0xff]
        %v2396 = vld [vmem:[%s2393 + $0x10] sm:$0xff]
        %v2397 = vld [vmem:[%s2393 + $0x18] sm:$0xff]
        %v2398 = vld [vmem:[%s2393 + $0x20] sm:$0xff]
        %v2399 = vld [vmem:[%s2393 + $0x28] sm:$0xff]
        %v2400 = vld [vmem:[%s2393 + $0x30] sm:$0xff]
        %v2401 = vld [vmem:[%s2393 + $0x38] sm:$0xff]
        %v2402 = vld [vmem:[%s2393 + $0x40] sm:$0xff]
        %v2403 = vld [vmem:[%s2393 + $0x48] sm:$0xff]
        %v2404 = vld [vmem:[%s2393 + $0x50] sm:$0xff]
        %v2405 = vld [vmem:[%s2393 + $0x58] sm:$0xff]
        %v2406 = vld [vmem:[%s2393 + $0x60] sm:$0xff]
        %v2407 = vld [vmem:[%s2393 + $0x68] sm:$0xff]
        %v2408 = vld [vmem:[%s2393 + $0x70] sm:$0xff]
        %v2409 = vld [vmem:[%s2393 + $0x78] sm:$0xff]
        %v2410 = vld [vmem:[%s2393 + $0x80] sm:$0xff]
        %v2411 = vld [vmem:[%s2393 + $0x88] sm:$0xff]
        %v2412 = vld [vmem:[%s2393 + $0x90] sm:$0xff]
        %v2413 = vld [vmem:[%s2393 + $0x98] sm:$0xff]
        %v2414 = vld [vmem:[%s2393 + $0xa0] sm:$0xff]
        %v2415 = vld [vmem:[%s2393 + $0xa8] sm:$0xff]
        %v2416 = vld [vmem:[%s2393 + $0xb0] sm:$0xff]
        %v2417 = vld [vmem:[%s2393 + $0xb8] sm:$0xff]
        %v2418 = vld [vmem:[%s2393 + $0xc0] sm:$0xff]
        %v2419 = vld [vmem:[%s2393 + $0xc8] sm:$0xff]
        %v2420 = vld [vmem:[%s2393 + $0xd0] sm:$0xff]
        %v2421 = vld [vmem:[%s2393 + $0xd8] sm:$0xff]
        %v2422 = vld [vmem:[%s2393 + $0xe0] sm:$0xff]
        %v2423 = vld [vmem:[%s2393 + $0xe8] sm:$0xff]
        %v2424 = vld [vmem:[%s2393 + $0xf0] sm:$0xff]
        %v2425 = vld [vmem:[%s2393 + $0xf8] sm:$0xff]
        %v2426 = vld [vmem:[%s2393 + $0x100] sm:$0xff]
        %v2427 = vld [vmem:[%s2393 + $0x108] sm:$0xff]
        %v2428 = vld [vmem:[%s2393 + $0x110] sm:$0xff]
        %v2429 = vld [vmem:[%s2393 + $0x118] sm:$0xff]
        %v2430 = vld [vmem:[%s2393 + $0x120] sm:$0xff]
        %v2431 = vld [vmem:[%s2393 + $0x128] sm:$0xff]
        %v2432 = vld [vmem:[%s2393 + $0x130] sm:$0xff]
        %v2433 = vld [vmem:[%s2393 + $0x138] sm:$0xff]
        %v2434 = vld [vmem:[%s2393 + $0x140] sm:$0xff]
        %v2435 = vld [vmem:[%s2393 + $0x148] sm:$0xff]
        %v2436 = vld [vmem:[%s2393 + $0x150] sm:$0xff]
        %v2437 = vld [vmem:[%s2393 + $0x158] sm:$0xff]
        %v2438 = vld [vmem:[%s2393 + $0x160] sm:$0xff]
        %v2439 = vld [vmem:[%s2393 + $0x168] sm:$0xff]
        %v2440 = vld [vmem:[%s2393 + $0x170] sm:$0xff]
        %v2441 = vld [vmem:[%s2393 + $0x178] sm:$0xff]
        %v2442 = vld [vmem:[%s2393 + $0x180] sm:$0xff]
        %v2443 = vld [vmem:[%s2393 + $0x188] sm:$0xff]
        %v2444 = vld [vmem:[%s2393 + $0x190] sm:$0xff]
        %v2445 = vld [vmem:[%s2393 + $0x198] sm:$0xff]
        %v2446 = vld [vmem:[%s2393 + $0x1a0] sm:$0xff]
        %v2447 = vld [vmem:[%s2393 + $0x1a8] sm:$0xff]
        %v2448 = vld [vmem:[%s2393 + $0x1b0] sm:$0xff]
        %v2449 = vld [vmem:[%s2393 + $0x1b8] sm:$0xff]
        %v2450 = vld [vmem:[%s2393 + $0x1c0] sm:$0xff]
        %v2451 = vld [vmem:[%s2393 + $0x1c8] sm:$0xff]
        %v2452 = vld [vmem:[%s2393 + $0x1d0] sm:$0xff]
        %v2453 = vld [vmem:[%s2393 + $0x1d8] sm:$0xff]
        %v2454 = vld [vmem:[%s2393 + $0x1e0] sm:$0xff]
        %v2455 = vld [vmem:[%s2393 + $0x1e8] sm:$0xff]
        %v2456 = vld [vmem:[%s2393 + $0x1f0] sm:$0xff]
        %v2457 = vld [vmem:[%s2393 + $0x1f8] sm:$0xff]
        %v2458 = vunpack.c.l.s8.bf16 %v2394
        %v2459 = vunpack.c.l.s8.bf16 %v2395
        %v2460 = vunpack.c.l.s8.bf16 %v2396
        %v2461 = vunpack.c.l.s8.bf16 %v2397
        %v2462 = vunpack.c.h.s8.bf16 %v2394
        %v2463 = vunpack.c.h.s8.bf16 %v2395
        %v2464 = vunpack.c.h.s8.bf16 %v2396
        %v2465 = vunpack.c.h.s8.bf16 %v2397
        %v2466 = vunpack.c.l.s8.bf16 %v2398
        %v2467 = vunpack.c.l.s8.bf16 %v2399
        %v2468 = vunpack.c.l.s8.bf16 %v2400
        %v2469 = vunpack.c.l.s8.bf16 %v2401
        %v2470 = vunpack.c.h.s8.bf16 %v2398
        %v2471 = vunpack.c.h.s8.bf16 %v2399
        %v2472 = vunpack.c.h.s8.bf16 %v2400
        %v2473 = vunpack.c.h.s8.bf16 %v2401
        %v2474 = vunpack.c.l.s8.bf16 %v2402
        %v2475 = vunpack.c.l.s8.bf16 %v2403
        %v2476 = vunpack.c.l.s8.bf16 %v2404
        %v2477 = vunpack.c.l.s8.bf16 %v2405
        %v2478 = vunpack.c.h.s8.bf16 %v2402
        %v2479 = vunpack.c.h.s8.bf16 %v2403
        %v2480 = vunpack.c.h.s8.bf16 %v2404
        %v2481 = vunpack.c.h.s8.bf16 %v2405
        %v2482 = vunpack.c.l.s8.bf16 %v2406
        %v2483 = vunpack.c.l.s8.bf16 %v2407
        %v2484 = vunpack.c.l.s8.bf16 %v2408
        %v2485 = vunpack.c.l.s8.bf16 %v2409
        %v2486 = vunpack.c.h.s8.bf16 %v2406
        %v2487 = vunpack.c.h.s8.bf16 %v2407
        %v2488 = vunpack.c.h.s8.bf16 %v2408
        %v2489 = vunpack.c.h.s8.bf16 %v2409
        %v2490 = vunpack.c.l.s8.bf16 %v2410
        %v2491 = vunpack.c.l.s8.bf16 %v2411
        %v2492 = vunpack.c.l.s8.bf16 %v2412
        %v2493 = vunpack.c.l.s8.bf16 %v2413
        %v2494 = vunpack.c.h.s8.bf16 %v2410
        %v2495 = vunpack.c.h.s8.bf16 %v2411
        %v2496 = vunpack.c.h.s8.bf16 %v2412
        %v2497 = vunpack.c.h.s8.bf16 %v2413
        %v2498 = vunpack.c.l.s8.bf16 %v2414
        %v2499 = vunpack.c.l.s8.bf16 %v2415
        %v2500 = vunpack.c.l.s8.bf16 %v2416
        %v2501 = vunpack.c.l.s8.bf16 %v2417
        %v2502 = vunpack.c.h.s8.bf16 %v2414
        %v2503 = vunpack.c.h.s8.bf16 %v2415
        %v2504 = vunpack.c.h.s8.bf16 %v2416
        %v2505 = vunpack.c.h.s8.bf16 %v2417
        %v2506 = vunpack.c.l.s8.bf16 %v2418
        %v2507 = vunpack.c.l.s8.bf16 %v2419
        %v2508 = vunpack.c.l.s8.bf16 %v2420
        %v2509 = vunpack.c.l.s8.bf16 %v2421
        %v2510 = vunpack.c.h.s8.bf16 %v2418
        %v2511 = vunpack.c.h.s8.bf16 %v2419
        %v2512 = vunpack.c.h.s8.bf16 %v2420
        %v2513 = vunpack.c.h.s8.bf16 %v2421
        %v2514 = vunpack.c.l.s8.bf16 %v2422
        %v2515 = vunpack.c.l.s8.bf16 %v2423
        %v2516 = vunpack.c.l.s8.bf16 %v2424
        %v2517 = vunpack.c.l.s8.bf16 %v2425
        %v2518 = vunpack.c.h.s8.bf16 %v2422
        %v2519 = vunpack.c.h.s8.bf16 %v2423
        %v2520 = vunpack.c.h.s8.bf16 %v2424
        %v2521 = vunpack.c.h.s8.bf16 %v2425
        %v2522 = vunpack.c.l.s8.bf16 %v2426
        %v2523 = vunpack.c.l.s8.bf16 %v2427
        %v2524 = vunpack.c.l.s8.bf16 %v2428
        %v2525 = vunpack.c.l.s8.bf16 %v2429
        %v2526 = vunpack.c.h.s8.bf16 %v2426
        %v2527 = vunpack.c.h.s8.bf16 %v2427
        %v2528 = vunpack.c.h.s8.bf16 %v2428
        %v2529 = vunpack.c.h.s8.bf16 %v2429
        %v2530 = vunpack.c.l.s8.bf16 %v2430
        %v2531 = vunpack.c.l.s8.bf16 %v2431
        %v2532 = vunpack.c.l.s8.bf16 %v2432
        %v2533 = vunpack.c.l.s8.bf16 %v2433
        %v2534 = vunpack.c.h.s8.bf16 %v2430
        %v2535 = vunpack.c.h.s8.bf16 %v2431
        %v2536 = vunpack.c.h.s8.bf16 %v2432
        %v2537 = vunpack.c.h.s8.bf16 %v2433
        %v2538 = vunpack.c.l.s8.bf16 %v2434
        %v2539 = vunpack.c.l.s8.bf16 %v2435
        %v2540 = vunpack.c.l.s8.bf16 %v2436
        %v2541 = vunpack.c.l.s8.bf16 %v2437
        %v2542 = vunpack.c.h.s8.bf16 %v2434
        %v2543 = vunpack.c.h.s8.bf16 %v2435
        %v2544 = vunpack.c.h.s8.bf16 %v2436
        %v2545 = vunpack.c.h.s8.bf16 %v2437
        %v2546 = vunpack.c.l.s8.bf16 %v2438
        %v2547 = vunpack.c.l.s8.bf16 %v2439
        %v2548 = vunpack.c.l.s8.bf16 %v2440
        %v2549 = vunpack.c.l.s8.bf16 %v2441
        %v2550 = vunpack.c.h.s8.bf16 %v2438
        %v2551 = vunpack.c.h.s8.bf16 %v2439
        %v2552 = vunpack.c.h.s8.bf16 %v2440
        %v2553 = vunpack.c.h.s8.bf16 %v2441
        %v2554 = vunpack.c.l.s8.bf16 %v2442
        %v2555 = vunpack.c.l.s8.bf16 %v2443
        %v2556 = vunpack.c.l.s8.bf16 %v2444
        %v2557 = vunpack.c.l.s8.bf16 %v2445
        %v2558 = vunpack.c.h.s8.bf16 %v2442
        %v2559 = vunpack.c.h.s8.bf16 %v2443
        %v2560 = vunpack.c.h.s8.bf16 %v2444
        %v2561 = vunpack.c.h.s8.bf16 %v2445
        %v2562 = vunpack.c.l.s8.bf16 %v2446
        %v2563 = vunpack.c.l.s8.bf16 %v2447
        %v2564 = vunpack.c.l.s8.bf16 %v2448
        %v2565 = vunpack.c.l.s8.bf16 %v2449
        %v2566 = vunpack.c.h.s8.bf16 %v2446
        %v2567 = vunpack.c.h.s8.bf16 %v2447
        %v2568 = vunpack.c.h.s8.bf16 %v2448
        %v2569 = vunpack.c.h.s8.bf16 %v2449
        %v2570 = vunpack.c.l.s8.bf16 %v2450
        %v2571 = vunpack.c.l.s8.bf16 %v2451
        %v2572 = vunpack.c.l.s8.bf16 %v2452
        %v2573 = vunpack.c.l.s8.bf16 %v2453
        %v2574 = vunpack.c.h.s8.bf16 %v2450
        %v2575 = vunpack.c.h.s8.bf16 %v2451
        %v2576 = vunpack.c.h.s8.bf16 %v2452
        %v2577 = vunpack.c.h.s8.bf16 %v2453
        %v2578 = vunpack.c.l.s8.bf16 %v2454
        %v2579 = vunpack.c.l.s8.bf16 %v2455
        %v2580 = vunpack.c.l.s8.bf16 %v2456
        %v2581 = vunpack.c.l.s8.bf16 %v2457
        %v2582 = vunpack.c.h.s8.bf16 %v2454
        %v2583 = vunpack.c.h.s8.bf16 %v2455
        %v2584 = vunpack.c.h.s8.bf16 %v2456
        %v2585 = vunpack.c.h.s8.bf16 %v2457
        %2586 = vmatprep.subr.bf16.mxu0 %v2459
        %2587 = vmatpush1.bf16.msra.mxu0 %v2458
        %2588 = vmatprep.subr.bf16.mxu0 %v2463
        %2589 = vmatpush1.bf16.msra.mxu0 %v2462
        %2590 = vmatprep.subr.bf16.mxu0 %v2467
        %2591 = vmatpush1.bf16.msra.mxu0 %v2466
        %2592 = vmatprep.subr.bf16.mxu0 %v2471
        %2593 = vmatpush1.bf16.msra.mxu0 %v2470
        %2594 = vmatprep.subr.bf16.mxu0 %v2475
        %2595 = vmatpush1.bf16.msra.mxu0 %v2474
        %2596 = vmatprep.subr.bf16.mxu0 %v2479
        %2597 = vmatpush1.bf16.msra.mxu0 %v2478
        %2598 = vmatprep.subr.bf16.mxu0 %v2483
        %2599 = vmatpush1.bf16.msra.mxu0 %v2482
        %2600 = vmatprep.subr.bf16.mxu0 %v2487
        %2601 = vmatpush1.bf16.msra.mxu0 %v2486
        %2602 = vmatprep.subr.bf16.mxu0 %v2491
        %2603 = vmatpush1.bf16.msra.mxu0 %v2490
        %2604 = vmatprep.subr.bf16.mxu0 %v2495
        %2605 = vmatpush1.bf16.msra.mxu0 %v2494
        %2606 = vmatprep.subr.bf16.mxu0 %v2499
        %2607 = vmatpush1.bf16.msra.mxu0 %v2498
        %2608 = vmatprep.subr.bf16.mxu0 %v2503
        %2609 = vmatpush1.bf16.msra.mxu0 %v2502
        %2610 = vmatprep.subr.bf16.mxu0 %v2507
        %2611 = vmatpush1.bf16.msra.mxu0 %v2506
        %2612 = vmatprep.subr.bf16.mxu0 %v2511
        %2613 = vmatpush1.bf16.msra.mxu0 %v2510
        %2614 = vmatprep.subr.bf16.mxu0 %v2515
        %2615 = vmatpush1.bf16.msra.mxu0 %v2514
        %2616 = vmatprep.subr.bf16.mxu0 %v2519
        %2617 = vmatpush1.bf16.msra.mxu0 %v2518
        %2618 = vmatprep.mubr.bf16.mxu0 %v2390
        %2619 = vmatmul.mubr.bf16.gmra.mrb[0].mxu0 %v2389
        %v2620 = vpop.f32.mrb[0].mxu0
        %v2621 = vadd.f32 0.0, %v2620
        %v2622 = vpop.f32.mrb[0].mxu0
        %v2623 = vadd.f32 0.0, %v2622
        %v2624 = vpop.f32.mrb[0].mxu0
        %v2625 = vpop.f32.mrb[0].mxu0
        %2626 = vdwg.mxu0
        %2627 = vmatprep.subr.bf16.mxu0 %v2523
        %2628 = vmatpush1.bf16.msra.mxu0 %v2522
        %2629 = vmatprep.subr.bf16.mxu0 %v2527
        %2630 = vmatpush1.bf16.msra.mxu0 %v2526
        %2631 = vmatprep.subr.bf16.mxu0 %v2531
        %2632 = vmatpush1.bf16.msra.mxu0 %v2530
        %2633 = vmatprep.subr.bf16.mxu0 %v2535
        %2634 = vmatpush1.bf16.msra.mxu0 %v2534
        %2635 = vmatprep.subr.bf16.mxu0 %v2539
        %2636 = vmatpush1.bf16.msra.mxu0 %v2538
        %2637 = vmatprep.subr.bf16.mxu0 %v2543
        %2638 = vmatpush1.bf16.msra.mxu0 %v2542
        %2639 = vmatprep.subr.bf16.mxu0 %v2547
        %2640 = vmatpush1.bf16.msra.mxu0 %v2546
        %2641 = vmatprep.subr.bf16.mxu0 %v2551
        %2642 = vmatpush1.bf16.msra.mxu0 %v2550
        %2643 = vmatprep.subr.bf16.mxu0 %v2555
        %2644 = vmatpush1.bf16.msra.mxu0 %v2554
        %2645 = vmatprep.subr.bf16.mxu0 %v2559
        %2646 = vmatpush1.bf16.msra.mxu0 %v2558
        %2647 = vmatprep.subr.bf16.mxu0 %v2563
        %2648 = vmatpush1.bf16.msra.mxu0 %v2562
        %2649 = vmatprep.subr.bf16.mxu0 %v2567
        %2650 = vmatpush1.bf16.msra.mxu0 %v2566
        %2651 = vmatprep.subr.bf16.mxu0 %v2571
        %2652 = vmatpush1.bf16.msra.mxu0 %v2570
        %2653 = vmatprep.subr.bf16.mxu0 %v2575
        %2654 = vmatpush1.bf16.msra.mxu0 %v2574
        %2655 = vmatprep.subr.bf16.mxu0 %v2579
        %2656 = vmatpush1.bf16.msra.mxu0 %v2578
        %2657 = vmatprep.subr.bf16.mxu0 %v2583
        %2658 = vmatpush1.bf16.msra.mxu0 %v2582
        %2659 = vmatprep.mubr.bf16.mxu0 %v2392
        %2660 = vmatmul.mubr.bf16.gmra.mrb[0].mxu0 %v2391
        %v2661 = vpop.f32.mrb[0].mxu0
        %v2662 = vadd.f32 %v2621, %v2661
        %v2663 = vpop.f32.mrb[0].mxu0
        %v2664 = vadd.f32 %v2623, %v2663
        %v2665 = vpop.f32.mrb[0].mxu0
        %v2666 = vpop.f32.mrb[0].mxu0
        %2667 = vdwg.mxu0
        %2668 = vmatprep.subr.bf16.mxu0 %v2461
        %2669 = vmatpush1.bf16.msra.mxu0 %v2460
        %2670 = vmatprep.subr.bf16.mxu0 %v2465
        %2671 = vmatpush1.bf16.msra.mxu0 %v2464
        %2672 = vmatprep.subr.bf16.mxu0 %v2469
        %2673 = vmatpush1.bf16.msra.mxu0 %v2468
        %2674 = vmatprep.subr.bf16.mxu0 %v2473
        %2675 = vmatpush1.bf16.msra.mxu0 %v2472
        %2676 = vmatprep.subr.bf16.mxu0 %v2477
        %2677 = vmatpush1.bf16.msra.mxu0 %v2476
        %2678 = vmatprep.subr.bf16.mxu0 %v2481
        %2679 = vmatpush1.bf16.msra.mxu0 %v2480
        %2680 = vmatprep.subr.bf16.mxu0 %v2485
        %2681 = vmatpush1.bf16.msra.mxu0 %v2484
        %2682 = vmatprep.subr.bf16.mxu0 %v2489
        %2683 = vmatpush1.bf16.msra.mxu0 %v2488
        %2684 = vmatprep.subr.bf16.mxu0 %v2493
        %2685 = vmatpush1.bf16.msra.mxu0 %v2492
        %2686 = vmatprep.subr.bf16.mxu0 %v2497
        %2687 = vmatpush1.bf16.msra.mxu0 %v2496
        %2688 = vmatprep.subr.bf16.mxu0 %v2501
        %2689 = vmatpush1.bf16.msra.mxu0 %v2500
        %2690 = vmatprep.subr.bf16.mxu0 %v2505
        %2691 = vmatpush1.bf16.msra.mxu0 %v2504
        %2692 = vmatprep.subr.bf16.mxu0 %v2509
        %2693 = vmatpush1.bf16.msra.mxu0 %v2508
        %2694 = vmatprep.subr.bf16.mxu0 %v2513
        %2695 = vmatpush1.bf16.msra.mxu0 %v2512
        %2696 = vmatprep.subr.bf16.mxu0 %v2517
        %2697 = vmatpush1.bf16.msra.mxu0 %v2516
        %2698 = vmatprep.subr.bf16.mxu0 %v2521
        %2699 = vmatpush1.bf16.msra.mxu0 %v2520
        %2700 = vmatprep.mubr.bf16.mxu0 %v2390
        %2701 = vmatmul.mubr.bf16.gmra.mrb[0].mxu0 %v2389
        %v2702 = vpop.f32.mrb[0].mxu0
        %v2703 = vadd.f32 0.0, %v2702
        %v2704 = vpop.f32.mrb[0].mxu0
        %v2705 = vadd.f32 0.0, %v2704
        %v2706 = vpop.f32.mrb[0].mxu0
        %v2707 = vpop.f32.mrb[0].mxu0
        %2708 = vdwg.mxu0
        %2709 = vmatprep.subr.bf16.mxu0 %v2525
        %2710 = vmatpush1.bf16.msra.mxu0 %v2524
        %2711 = vmatprep.subr.bf16.mxu0 %v2529
        %2712 = vmatpush1.bf16.msra.mxu0 %v2528
        %2713 = vmatprep.subr.bf16.mxu0 %v2533
        %2714 = vmatpush1.bf16.msra.mxu0 %v2532
        %2715 = vmatprep.subr.bf16.mxu0 %v2537
        %2716 = vmatpush1.bf16.msra.mxu0 %v2536
        %2717 = vmatprep.subr.bf16.mxu0 %v2541
        %2718 = vmatpush1.bf16.msra.mxu0 %v2540
        %2719 = vmatprep.subr.bf16.mxu0 %v2545
        %2720 = vmatpush1.bf16.msra.mxu0 %v2544
        %2721 = vmatprep.subr.bf16.mxu0 %v2549
        %2722 = vmatpush1.bf16.msra.mxu0 %v2548
        %2723 = vmatprep.subr.bf16.mxu0 %v2553
        %2724 = vmatpush1.bf16.msra.mxu0 %v2552
        %2725 = vmatprep.subr.bf16.mxu0 %v2557
        %2726 = vmatpush1.bf16.msra.mxu0 %v2556
        %2727 = vmatprep.subr.bf16.mxu0 %v2561
        %2728 = vmatpush1.bf16.msra.mxu0 %v2560
        %2729 = vmatprep.subr.bf16.mxu0 %v2565
        %2730 = vmatpush1.bf16.msra.mxu0 %v2564
        %2731 = vmatprep.subr.bf16.mxu0 %v2569
        %2732 = vmatpush1.bf16.msra.mxu0 %v2568
        %2733 = vmatprep.subr.bf16.mxu0 %v2573
        %2734 = vmatpush1.bf16.msra.mxu0 %v2572
        %2735 = vmatprep.subr.bf16.mxu0 %v2577
        %2736 = vmatpush1.bf16.msra.mxu0 %v2576
        %2737 = vmatprep.subr.bf16.mxu0 %v2581
        %2738 = vmatpush1.bf16.msra.mxu0 %v2580
        %2739 = vmatprep.subr.bf16.mxu0 %v2585
        %2740 = vmatpush1.bf16.msra.mxu0 %v2584
        %2741 = vmatprep.mubr.bf16.mxu0 %v2392
        %2742 = vmatmul.mubr.bf16.gmra.mrb[0].mxu0 %v2391
        %v2743 = vpop.f32.mrb[0].mxu0
        %v2744 = vadd.f32 %v2703, %v2743
        %v2745 = vpop.f32.mrb[0].mxu0
        %v2746 = vadd.f32 %v2705, %v2745
        %v2747 = vpop.f32.mrb[0].mxu0
        %v2748 = vpop.f32.mrb[0].mxu0
        %2749 = vdwg.mxu0
        %s2750 = scalar_lea.vmem %s431, 16 [#allocation9]
        %v2751 = vld [vmem:[%s2750] sm:$0xf]
        %v2753 = vlaneseq
        %v2754 = vshrl.u32 %v2753, 7
        %v2755 = vsub.s32 0, %v2754
        %v2756 = vrot.slane %v2751, %v2755
        %v2757 = vlaneseq
        %v2758 = vshrl.u32 %v2757, 7
        %v2759 = vsub.s32 1, %v2758
        %v2760 = vrot.slane %v2751, %v2759
        %v2761 = vlaneseq
        %v2762 = vshrl.u32 %v2761, 7
        %v2763 = vsub.s32 2, %v2762
        %v2764 = vrot.slane %v2751, %v2763
        %v2765 = vlaneseq
        %v2766 = vshrl.u32 %v2765, 7
        %v2767 = vsub.s32 3, %v2766
        %v2768 = vrot.slane %v2751, %v2767
        %v2773 = vmul.f32 %v2662, %v2756
        %v2774 = vmul.f32 %v2664, %v2760
        %v2775 = vmul.f32 %v2744, %v2764
        %v2776 = vmul.f32 %v2746, %v2768
        %s2777 = scalar_lea.vmem %s440, 16 [#allocation10]
        %v2778 = vld [vmem:[%s2777] sm:$0xf]
        %v2780 = vlaneseq
        %v2781 = vshrl.u32 %v2780, 7
        %v2782 = vsub.s32 0, %v2781
        %v2783 = vrot.slane %v2778, %v2782
        %v2784 = vlaneseq
        %v2785 = vshrl.u32 %v2784, 7
        %v2786 = vsub.s32 1, %v2785
        %v2787 = vrot.slane %v2778, %v2786
        %v2788 = vlaneseq
        %v2789 = vshrl.u32 %v2788, 7
        %v2790 = vsub.s32 2, %v2789
        %v2791 = vrot.slane %v2778, %v2790
        %v2792 = vlaneseq
        %v2793 = vshrl.u32 %v2792, 7
        %v2794 = vsub.s32 3, %v2793
        %v2795 = vrot.slane %v2778, %v2794
        %v2800 = vadd.f32 %v2773, %v2783
        %v2801 = vadd.f32 %v2774, %v2787
        %v2802 = vadd.f32 %v2775, %v2791
        %v2803 = vadd.f32 %v2776, %v2795
        %vm2804 = vcmp.gt.f32.partialorder %v2800, 0.0
        %vm2805 = vcmp.gt.f32.partialorder %v2801, 0.0
        %vm2806 = vcmp.gt.f32.partialorder %v2802, 0.0
        %vm2807 = vcmp.gt.f32.partialorder %v2803, 0.0
        %v2808 = vmul.f32 %v2800, 0.01
        %v2809 = vmul.f32 %v2801, 0.01
        %v2810 = vmul.f32 %v2802, 0.01
        %v2811 = vmul.f32 %v2803, 0.01
        %v2812 = vsel %vm2804, %v2800, %v2808
        %v2813 = vsel %vm2805, %v2801, %v2809
        %v2814 = vsel %vm2806, %v2802, %v2810
        %v2815 = vsel %vm2807, %v2803, %v2811
        %v2816 = vpack.c.bf16 %v2812, %v2812
        %v2817 = vpack.c.bf16 %v2813, %v2813
        %v2818 = vpack.c.bf16 %v2814, %v2814
        %v2819 = vpack.c.bf16 %v2815, %v2815
        %v2820 = vld [vmem:[%s449] sm:$0xf]
        %v2821 = vld [vmem:[%s449 + $0x4] sm:$0xf]
        %v2822 = vld [vmem:[%s449 + $0x8] sm:$0xf]
        %v2823 = vld [vmem:[%s449 + $0xc] sm:$0xf]
        %v2824 = vld [vmem:[%s449 + $0x10] sm:$0xf]
        %v2825 = vld [vmem:[%s449 + $0x14] sm:$0xf]
        %v2826 = vld [vmem:[%s449 + $0x18] sm:$0xf]
        %v2827 = vld [vmem:[%s449 + $0x1c] sm:$0xf]
        %v2828 = vld [vmem:[%s449 + $0x20] sm:$0xf]
        %v2829 = vld [vmem:[%s449 + $0x24] sm:$0xf]
        %v2830 = vld [vmem:[%s449 + $0x28] sm:$0xf]
        %v2831 = vld [vmem:[%s449 + $0x2c] sm:$0xf]
        %v2832 = vld [vmem:[%s449 + $0x30] sm:$0xf]
        %v2833 = vld [vmem:[%s449 + $0x34] sm:$0xf]
        %v2834 = vld [vmem:[%s449 + $0x38] sm:$0xf]
        %v2835 = vld [vmem:[%s449 + $0x3c] sm:$0xf]
        %v2836 = vld [vmem:[%s449 + $0x40] sm:$0xf]
        %v2837 = vld [vmem:[%s449 + $0x44] sm:$0xf]
        %v2838 = vld [vmem:[%s449 + $0x48] sm:$0xf]
        %v2839 = vld [vmem:[%s449 + $0x4c] sm:$0xf]
        %v2840 = vld [vmem:[%s449 + $0x50] sm:$0xf]
        %v2841 = vld [vmem:[%s449 + $0x54] sm:$0xf]
        %v2842 = vld [vmem:[%s449 + $0x58] sm:$0xf]
        %v2843 = vld [vmem:[%s449 + $0x5c] sm:$0xf]
        %v2844 = vld [vmem:[%s449 + $0x60] sm:$0xf]
        %v2845 = vld [vmem:[%s449 + $0x64] sm:$0xf]
        %v2846 = vld [vmem:[%s449 + $0x68] sm:$0xf]
        %v2847 = vld [vmem:[%s449 + $0x6c] sm:$0xf]
        %v2848 = vld [vmem:[%s449 + $0x70] sm:$0xf]
        %v2849 = vld [vmem:[%s449 + $0x74] sm:$0xf]
        %v2850 = vld [vmem:[%s449 + $0x78] sm:$0xf]
        %v2851 = vld [vmem:[%s449 + $0x7c] sm:$0xf]
        %v2852 = vld [vmem:[%s449 + $0x80] sm:$0xf]
        %v2853 = vld [vmem:[%s449 + $0x84] sm:$0xf]
        %v2854 = vld [vmem:[%s449 + $0x88] sm:$0xf]
        %v2855 = vld [vmem:[%s449 + $0x8c] sm:$0xf]
        %v2856 = vld [vmem:[%s449 + $0x90] sm:$0xf]
        %v2857 = vld [vmem:[%s449 + $0x94] sm:$0xf]
        %v2858 = vld [vmem:[%s449 + $0x98] sm:$0xf]
        %v2859 = vld [vmem:[%s449 + $0x9c] sm:$0xf]
        %v2860 = vld [vmem:[%s449 + $0xa0] sm:$0xf]
        %v2861 = vld [vmem:[%s449 + $0xa4] sm:$0xf]
        %v2862 = vld [vmem:[%s449 + $0xa8] sm:$0xf]
        %v2863 = vld [vmem:[%s449 + $0xac] sm:$0xf]
        %v2864 = vld [vmem:[%s449 + $0xb0] sm:$0xf]
        %v2865 = vld [vmem:[%s449 + $0xb4] sm:$0xf]
        %v2866 = vld [vmem:[%s449 + $0xb8] sm:$0xf]
        %v2867 = vld [vmem:[%s449 + $0xbc] sm:$0xf]
        %v2868 = vld [vmem:[%s449 + $0xc0] sm:$0xf]
        %v2869 = vld [vmem:[%s449 + $0xc4] sm:$0xf]
        %v2870 = vld [vmem:[%s449 + $0xc8] sm:$0xf]
        %v2871 = vld [vmem:[%s449 + $0xcc] sm:$0xf]
        %v2872 = vld [vmem:[%s449 + $0xd0] sm:$0xf]
        %v2873 = vld [vmem:[%s449 + $0xd4] sm:$0xf]
        %v2874 = vld [vmem:[%s449 + $0xd8] sm:$0xf]
        %v2875 = vld [vmem:[%s449 + $0xdc] sm:$0xf]
        %v2876 = vld [vmem:[%s449 + $0xe0] sm:$0xf]
        %v2877 = vld [vmem:[%s449 + $0xe4] sm:$0xf]
        %v2878 = vld [vmem:[%s449 + $0xe8] sm:$0xf]
        %v2879 = vld [vmem:[%s449 + $0xec] sm:$0xf]
        %v2880 = vld [vmem:[%s449 + $0xf0] sm:$0xf]
        %v2881 = vld [vmem:[%s449 + $0xf4] sm:$0xf]
        %v2882 = vld [vmem:[%s449 + $0xf8] sm:$0xf]
        %v2883 = vld [vmem:[%s449 + $0xfc] sm:$0xf]
        %v2884 = vld [vmem:[%s457] sm:$0x1]
        %v2886 = vlaneseq
        %v2887 = vshrl.u32 %v2886, 7
        %v2888 = vsub.s32 0, %v2887
        %v2889 = vrot.slane %v2884, %v2888
        %v2955 = vunpack.c.l.b16 %v2820
        %v2956 = vunpack.c.l.b16 %v2821
        %v2957 = vunpack.c.l.b16 %v2822
        %v2958 = vunpack.c.l.b16 %v2823
        %v2959 = vunpack.c.l.b16 %v2824
        %v2960 = vunpack.c.l.b16 %v2825
        %v2961 = vunpack.c.l.b16 %v2826
        %v2962 = vunpack.c.l.b16 %v2827
        %v2963 = vunpack.c.l.b16 %v2828
        %v2964 = vunpack.c.l.b16 %v2829
        %v2965 = vunpack.c.l.b16 %v2830
        %v2966 = vunpack.c.l.b16 %v2831
        %v2967 = vunpack.c.l.b16 %v2832
        %v2968 = vunpack.c.l.b16 %v2833
        %v2969 = vunpack.c.l.b16 %v2834
        %v2970 = vunpack.c.l.b16 %v2835
        %v2971 = vunpack.c.l.b16 %v2836
        %v2972 = vunpack.c.l.b16 %v2837
        %v2973 = vunpack.c.l.b16 %v2838
        %v2974 = vunpack.c.l.b16 %v2839
        %v2975 = vunpack.c.l.b16 %v2840
        %v2976 = vunpack.c.l.b16 %v2841
        %v2977 = vunpack.c.l.b16 %v2842
        %v2978 = vunpack.c.l.b16 %v2843
        %v2979 = vunpack.c.l.b16 %v2844
        %v2980 = vunpack.c.l.b16 %v2845
        %v2981 = vunpack.c.l.b16 %v2846
        %v2982 = vunpack.c.l.b16 %v2847
        %v2983 = vunpack.c.l.b16 %v2848
        %v2984 = vunpack.c.l.b16 %v2849
        %v2985 = vunpack.c.l.b16 %v2850
        %v2986 = vunpack.c.l.b16 %v2851
        %v2987 = vunpack.c.l.b16 %v2852
        %v2988 = vunpack.c.l.b16 %v2853
        %v2989 = vunpack.c.l.b16 %v2854
        %v2990 = vunpack.c.l.b16 %v2855
        %v2991 = vunpack.c.l.b16 %v2856
        %v2992 = vunpack.c.l.b16 %v2857
        %v2993 = vunpack.c.l.b16 %v2858
        %v2994 = vunpack.c.l.b16 %v2859
        %v2995 = vunpack.c.l.b16 %v2860
        %v2996 = vunpack.c.l.b16 %v2861
        %v2997 = vunpack.c.l.b16 %v2862
        %v2998 = vunpack.c.l.b16 %v2863
        %v2999 = vunpack.c.l.b16 %v2864
        %v3000 = vunpack.c.l.b16 %v2865
        %v3001 = vunpack.c.l.b16 %v2866
        %v3002 = vunpack.c.l.b16 %v2867
        %v3003 = vunpack.c.l.b16 %v2868
        %v3004 = vunpack.c.l.b16 %v2869
        %v3005 = vunpack.c.l.b16 %v2870
        %v3006 = vunpack.c.l.b16 %v2871
        %v3007 = vunpack.c.l.b16 %v2872
        %v3008 = vunpack.c.l.b16 %v2873
        %v3009 = vunpack.c.l.b16 %v2874
        %v3010 = vunpack.c.l.b16 %v2875
        %v3011 = vunpack.c.l.b16 %v2876
        %v3012 = vunpack.c.l.b16 %v2877
        %v3013 = vunpack.c.l.b16 %v2878
        %v3014 = vunpack.c.l.b16 %v2879
        %v3015 = vunpack.c.l.b16 %v2880
        %v3016 = vunpack.c.l.b16 %v2881
        %v3017 = vunpack.c.l.b16 %v2882
        %v3018 = vunpack.c.l.b16 %v2883
        %v3019 = vpack.c.b16 %v2956, %v2955
        %v3020 = vpack.c.b16 %v2958, %v2957
        %v3021 = vpack.c.b16 %v2960, %v2959
        %v3022 = vpack.c.b16 %v2962, %v2961
        %v3023 = vpack.c.b16 %v2964, %v2963
        %v3024 = vpack.c.b16 %v2966, %v2965
        %v3025 = vpack.c.b16 %v2968, %v2967
        %v3026 = vpack.c.b16 %v2970, %v2969
        %v3027 = vpack.c.b16 %v2972, %v2971
        %v3028 = vpack.c.b16 %v2974, %v2973
        %v3029 = vpack.c.b16 %v2976, %v2975
        %v3030 = vpack.c.b16 %v2978, %v2977
        %v3031 = vpack.c.b16 %v2980, %v2979
        %v3032 = vpack.c.b16 %v2982, %v2981
        %v3033 = vpack.c.b16 %v2984, %v2983
        %v3034 = vpack.c.b16 %v2986, %v2985
        %v3035 = vpack.c.b16 %v2988, %v2987
        %v3036 = vpack.c.b16 %v2990, %v2989
        %v3037 = vpack.c.b16 %v2992, %v2991
        %v3038 = vpack.c.b16 %v2994, %v2993
        %v3039 = vpack.c.b16 %v2996, %v2995
        %v3040 = vpack.c.b16 %v2998, %v2997
        %v3041 = vpack.c.b16 %v3000, %v2999
        %v3042 = vpack.c.b16 %v3002, %v3001
        %v3043 = vpack.c.b16 %v3004, %v3003
        %v3044 = vpack.c.b16 %v3006, %v3005
        %v3045 = vpack.c.b16 %v3008, %v3007
        %v3046 = vpack.c.b16 %v3010, %v3009
        %v3047 = vpack.c.b16 %v3012, %v3011
        %v3048 = vpack.c.b16 %v3014, %v3013
        %v3049 = vpack.c.b16 %v3016, %v3015
        %v3050 = vpack.c.b16 %v3018, %v3017
        %3083 = vmatprep.subr.bf16.mxu0 0
        %3084 = vmatpush1.bf16.msra.mxu0 %v3019
        %3085 = vmatprep.subr.bf16.mxu0 0
        %3086 = vmatpush1.bf16.msra.mxu0 %v3020
        %3087 = vmatprep.subr.bf16.mxu0 0
        %3088 = vmatpush1.bf16.msra.mxu0 %v3021
        %3089 = vmatprep.subr.bf16.mxu0 0
        %3090 = vmatpush1.bf16.msra.mxu0 %v3022
        %3091 = vmatprep.subr.bf16.mxu0 0
        %3092 = vmatpush1.bf16.msra.mxu0 %v3023
        %3093 = vmatprep.subr.bf16.mxu0 0
        %3094 = vmatpush1.bf16.msra.mxu0 %v3024
        %3095 = vmatprep.subr.bf16.mxu0 0
        %3096 = vmatpush1.bf16.msra.mxu0 %v3025
        %3097 = vmatprep.subr.bf16.mxu0 0
        %3098 = vmatpush1.bf16.msra.mxu0 %v3026
        %3099 = vmatprep.subr.bf16.mxu0 0
        %3100 = vmatpush1.bf16.msra.mxu0 %v3027
        %3101 = vmatprep.subr.bf16.mxu0 0
        %3102 = vmatpush1.bf16.msra.mxu0 %v3028
        %3103 = vmatprep.subr.bf16.mxu0 0
        %3104 = vmatpush1.bf16.msra.mxu0 %v3029
        %3105 = vmatprep.subr.bf16.mxu0 0
        %3106 = vmatpush1.bf16.msra.mxu0 %v3030
        %3107 = vmatprep.subr.bf16.mxu0 0
        %3108 = vmatpush1.bf16.msra.mxu0 %v3031
        %3109 = vmatprep.subr.bf16.mxu0 0
        %3110 = vmatpush1.bf16.msra.mxu0 %v3032
        %3111 = vmatprep.subr.bf16.mxu0 0
        %3112 = vmatpush1.bf16.msra.mxu0 %v3033
        %3113 = vmatprep.subr.bf16.mxu0 0
        %3114 = vmatpush1.bf16.msra.mxu0 %v3034
        %3115 = vmatprep.mubr.bf16.mxu0 %v2817
        %3116 = vmatmul.mubr.bf16.gmra.mrb[0].mxu0 %v2816
        %v3117 = vpop.f32.mrb[0].mxu0
        %v3118 = vadd.f32 %v2889, %v3117
        %v3119 = vpop.f32.mrb[0].mxu0
        %v3120 = vpop.f32.mrb[0].mxu0
        %v3121 = vpop.f32.mrb[0].mxu0
        %3122 = vdwg.mxu0
        %3123 = vmatprep.subr.bf16.mxu0 0
        %3124 = vmatpush1.bf16.msra.mxu0 %v3035
        %3125 = vmatprep.subr.bf16.mxu0 0
        %3126 = vmatpush1.bf16.msra.mxu0 %v3036
        %3127 = vmatprep.subr.bf16.mxu0 0
        %3128 = vmatpush1.bf16.msra.mxu0 %v3037
        %3129 = vmatprep.subr.bf16.mxu0 0
        %3130 = vmatpush1.bf16.msra.mxu0 %v3038
        %3131 = vmatprep.subr.bf16.mxu0 0
        %3132 = vmatpush1.bf16.msra.mxu0 %v3039
        %3133 = vmatprep.subr.bf16.mxu0 0
        %3134 = vmatpush1.bf16.msra.mxu0 %v3040
        %3135 = vmatprep.subr.bf16.mxu0 0
        %3136 = vmatpush1.bf16.msra.mxu0 %v3041
        %3137 = vmatprep.subr.bf16.mxu0 0
        %3138 = vmatpush1.bf16.msra.mxu0 %v3042
        %3139 = vmatprep.subr.bf16.mxu0 0
        %3140 = vmatpush1.bf16.msra.mxu0 %v3043
        %3141 = vmatprep.subr.bf16.mxu0 0
        %3142 = vmatpush1.bf16.msra.mxu0 %v3044
        %3143 = vmatprep.subr.bf16.mxu0 0
        %3144 = vmatpush1.bf16.msra.mxu0 %v3045
        %3145 = vmatprep.subr.bf16.mxu0 0
        %3146 = vmatpush1.bf16.msra.mxu0 %v3046
        %3147 = vmatprep.subr.bf16.mxu0 0
        %3148 = vmatpush1.bf16.msra.mxu0 %v3047
        %3149 = vmatprep.subr.bf16.mxu0 0
        %3150 = vmatpush1.bf16.msra.mxu0 %v3048
        %3151 = vmatprep.subr.bf16.mxu0 0
        %3152 = vmatpush1.bf16.msra.mxu0 %v3049
        %3153 = vmatprep.subr.bf16.mxu0 0
        %3154 = vmatpush1.bf16.msra.mxu0 %v3050
        %3155 = vmatprep.mubr.bf16.mxu0 %v2819
        %3156 = vmatmul.mubr.bf16.gmra.mrb[0].mxu0 %v2818
        %v3157 = vpop.f32.mrb[0].mxu0
        %v3158 = vadd.f32 %v3118, %v3157
        %v3159 = vpop.f32.mrb[0].mxu0
        %v3160 = vpop.f32.mrb[0].mxu0
        %v3161 = vpop.f32.mrb[0].mxu0
        %3162 = vdwg.mxu0
        %3163 = vst [vmem:[%s511] sm:$0xff] %v3158
        %p3164 = scmp.lt.s32.totalorder %s30, 1
        %s3165 = scalar_select %p3164, %s30, 1
        %s3166 = smul.addr %s3165, 8
        %s3167 = scalar_lea.vmem %s8, %s3166
        // Predicated region
        $region85: #{dueling_dqn_forward.1} parent=51 // pred_check
          %p3168 = pneg %p241
        $region86: #{dueling_dqn_forward.1} parent=51 // pred_check_branch
          %3170 = sbr.rel (%p3168) target = $region88
        $region87: #{dueling_dqn_forward.1} parent=51 // pred_region
          _
        $region88: #{dueling_dqn_forward.1} parent=51 // pred_fallthru
          _
      $region52: #{dueling_dqn_forward.1} parent=5 // pred_fallthru
        _
      %p3171 = scmp.le.s32.totalorder 2, %s25
      // Predicated region
      $region89: #{dueling_dqn_forward.1} parent=5 // pred_check
        %p3172 = pneg %p3171
      $region90: #{dueling_dqn_forward.1} parent=5 // pred_check_branch
        %3174 = sbr.rel (%p3172) target = $region92
      $region91: #{dueling_dqn_forward.1} parent=5 // pred_region
        %s3175 = ssub.s32 %s25, 2
        // Predicated region
        $region93: #{dueling_dqn_forward.1} parent=91 // pred_check
          %p3176 = pneg %p247
        $region94: #{dueling_dqn_forward.1} parent=91 // pred_check_branch
          %3178 = sbr.rel (%p3176) target = $region96
        $region95: #{dueling_dqn_forward.1} parent=91 // pred_region
          %p3179 = scmp.lt.s32.totalorder %s31, 1
          %s3180 = scalar_select %p3179, %s31, 1
          %s3181 = smul.addr %s3180, 8
          %s3182 = scalar_lea.vmem %s8, %s3181
        $region96: #{dueling_dqn_forward.1} parent=91 // pred_fallthru
          _
      $region92: #{dueling_dqn_forward.1} parent=5 // pred_fallthru
        _
    $region6: #{dueling_dqn_forward.1} parent=1 // loop_footer
      %s29 = sadd.s32 1, %s25
    $region7: #{dueling_dqn_forward.1} parent=1 // loop_footer_branch
      %24 = sbr.rel target = $region3
    $region8: #{dueling_dqn_forward.1} parent=1 // loop_exit
      _
    %3183 = vsyncpa [#allocation3], 1
    %s3184 = scalar_lea.sflag [#allocation3], 1
    %3185 = vsyncpa %s3184, 1
    %3186 = vsyncpa [#allocation5], 1
    %3187 = vsyncpa [#allocation8], 1
    %s3188 = scalar_lea.sflag [#allocation8], 1
    %3189 = vsyncpa %s3188, 1
    %3190 = vsyncpa [#allocation11], 1
    %s3191 = scalar_lea.sflag [#allocation11], 1
    %3192 = vsyncpa %s3191, 1
    %3193 = vsyncpa [#allocation14], 1
    %s3194 = scalar_lea.sflag [#allocation14], 1
    %3195 = vsyncpa %s3194, 1

</llo_original>
